<compile_context>
chip_gen: v5e
topology: v5e:2x2
jax: 0.10.0
libtpu: 0.0.40
codegen_flags: <defaults>
</compile_context>

<pallas_src>
import functools

import jax
import jax.numpy as jnp
from jax import lax
from jax.experimental import pallas as pl
from jax.experimental.pallas import tpu as pltpu

INV_SQRT2 = 0.7071067811865476
BN_EPS = 1e-5


def _interp_matrix(in_size: int, out_size: int) -> jnp.ndarray:
  """Bilinear interpolation matrix, PyTorch align_corners=False semantics."""
  scale = in_size / out_size
  dst = jnp.arange(out_size, dtype=jnp.float32)
  src = jnp.maximum((dst + 0.5) * scale - 0.5, 0.0)   # PyTorch clamps negatives
  x0 = jnp.minimum(jnp.floor(src).astype(jnp.int32), in_size - 1)
  lam = src - x0.astype(jnp.float32)
  x1 = jnp.minimum(x0 + 1, in_size - 1)
  rows = jnp.arange(out_size)
  A = jnp.zeros((out_size, in_size), jnp.float32)
  A = A.at[rows, x0].add(1.0 - lam)
  A = A.at[rows, x1].add(lam)
  return A


# ---------------- Pallas kernels ----------------

def _fused_kernel(x_ref, bwt_ref, ccat_ref, y_ref, stat_ref, t_ref):
  """(bilinear upsample o conv) + GELU + packed per-tile BN partial sums.

  x_ref   : (nb, Cin*H, W)     batch-chunk of the original input
  bwt_ref : (k, W, OW)         per-tap W-axis operator Bw_j^T (grid-constant)
  ccat_ref: (R_blk, k*Cin*H)   R-chunk of the fused H/channel/tap operator
  y_ref   : (R_blk, nb*OW)     post-GELU activations, batch folded into lanes
  stat_ref: (1, 2, R_blk)      row 0: sum, row 1: sum^2 (per (co,oh) row)
  t_ref   : (k*Cin*H, nb*OW)   VMEM scratch: stacked W-stage operand
  """
  nb = x_ref.shape[0]
  kh = x_ref.shape[1]
  k = bwt_ref.shape[0]
  ow = bwt_ref.shape[2]

  # Stage 1 (~3% of FLOPs): W-axis interp + stride + padding.  One small matmul
  # per (image, tap), written into the stacked operand T (rows ordered (j,ci,h),
  # columns ordered (n,ow) so the batch lands in the lane dimension).
  for n in range(nb):
    xn = x_ref[n]                                       # (Cin*H, W)
    for j in range(k):
      v = jnp.dot(xn, bwt_ref[j], preferred_element_type=jnp.float32)
      t_ref[j * kh:(j + 1) * kh, n * ow:(n + 1) * ow] = v.astype(t_ref.dtype)

  # Stage 2 (dominant): ONE plain 2-D MXU matmul, K = k*Cin*H, batch in lanes.
  acc = jnp.dot(ccat_ref[...], t_ref[...],
                preferred_element_type=jnp.float32)     # (R_blk, nb*OW) f32

  # exact GELU (erf formulation == nn.GELU() default).
  # TODO(synk): if bundle dumps show VALU as the binding slot, consider the
  # tanh-approx GELU (single EUP op) where the numerics tolerance allows.
  g = 0.5 * acc * (1.0 + lax.erf(acc * INV_SQRT2))
  y_ref[...] = g.astype(y_ref.dtype)

  # Packed, lane-dense BN partial statistics (reduced across tiles in the
  # wrapper so both grid axes stay "parallel").  The tiny (R_blk,2)->(2,R_blk)
  # transpose runs on the XLU which has slack here.
  gsum = jnp.sum(g, axis=1, keepdims=True)              # (R_blk, 1)
  gsq = jnp.sum(g * g, axis=1, keepdims=True)           # (R_blk, 1)
  stat_ref[...] = jnp.concatenate([gsum, gsq], axis=1).T[None]


def _bn_apply_kernel(y_ref, sc_ref, sh_ref, o_ref):
  # per-(co,oh)-row affine; overwrites y in place (input_output_aliases)
  o_ref[...] = y_ref[...] * sc_ref[...] + sh_ref[...]


# ---------------- tile-size helpers ----------------

def _pick_r_block(R, cap=256):
  for c in range(min(R, cap), 0, -1):
    if R % c == 0 and c % 128 == 0:
      return c
  return R


def _pick_nb(N, OW, KH, W, k, r_blk, cd_bytes, budget):
  fallback = None
  for c in range(N, 0, -1):
    if N % c:
      continue
    if (c * OW) % 128 != 0 and c != N:
      continue                              # keep the lane dimension dense
    need = (2 * c * KH * W * cd_bytes       # x block (double-buffered)
            + k * W * OW * cd_bytes         # bwt (single-buffered)
            + 2 * r_blk * k * KH * cd_bytes  # ccat block (double-buffered)
            + 2 * r_blk * c * OW * 4        # y block (double-buffered, f32)
            + k * KH * c * OW * cd_bytes    # T scratch
            + 4 * r_blk * c * OW * 4        # acc / GELU temporaries headroom
            + 2 * 8 * r_blk * 4)            # packed stats blocks (padded)
    if need <= budget:
      return c
    fallback = c
  return fallback if fallback is not None else N


def _pick_apply_tiles(R, CW, budget):
  c_cands = [c for c in range(CW, 0, -1)
             if CW % c == 0 and (c % 128 == 0 or c == CW)]
  r_cands = [r for r in range(R, 0, -1)
             if R % r == 0 and (r % 8 == 0 or r == R)]
  for c in c_cands:                         # prefer the widest lane-dense tile
    for r in r_cands:
      if 16 * r * c <= budget:              # in+out blocks, double-buffered
        return r, c
  return r_cands[-1], c_cands[-1]


# ---------------- wrapper ----------------

def conv_upsampling(x, weight, gamma, beta, *, kernel_size, stride=1, padding=0,
                    eps=BN_EPS, nb=None, r_block=None,
                    compute_dtype=jnp.bfloat16):
  N, Cin, H, W = x.shape
  Cout = weight.shape[0]
  k, s, p = kernel_size, stride, padding
  UH, UW = H * k, W * k
  OH = (UH + 2 * p - k) // s + 1
  OW = (UW + 2 * p - k) // s + 1
  R = Cout * OH            # rows of the internal layout: (co, oh)
  KH = Cin * H             # contraction size of one tap
  CW = N * OW              # columns of the internal layout: (n, ow)

  # ---- fold bilinear interpolation + conv taps into fused linear operators ----
  Ah = _interp_matrix(H, UH)                          # (UH, H)
  Aw = _interp_matrix(W, UW)                          # (UW, W)
  Ahp = jnp.pad(Ah, ((p, p), (0, 0)))                 # conv zero-padding folded
  Awp = jnp.pad(Aw, ((p, p), (0, 0)))
  Bh = jnp.stack([Ahp[i:i + s * OH:s, :] for i in range(k)])   # (k, OH, H)
  Bw = jnp.stack([Awp[j:j + s * OW:s, :] for j in range(k)])   # (k, OW, W)
  bwt = jnp.transpose(Bw, (0, 2, 1))                           # (k, W, OW)
  # ceff[j, (co,oh), (ci,h)] = sum_i weight[co,ci,i,j] * Bh[i,oh,h]
  ceff = jnp.einsum('ocij,iph->jopch', weight, Bh,
                    precision=lax.Precision.HIGHEST).reshape(k, R, KH)
  # fuse the k taps into ONE contraction: columns ordered (j, ci, h)
  ccat = jnp.transpose(ceff, (1, 0, 2)).reshape(R, k * KH)

  cd_bytes = jnp.dtype(compute_dtype).itemsize

  # ---- VMEM budget / limit (generation-aware, never the whole v7x VMEM) ----
  try:
    vmem_cap = int(pltpu.get_tpu_info().vmem_capacity_bytes)
  except Exception:
    vmem_cap = 64 << 20
  budget = min(24 << 20, vmem_cap // 4)            # block-sizing budget
  vmem_limit = min(int(vmem_cap * 0.7), 64 << 20)  # <= 70% of physical

  # ---- tile sizes ----
  if r_block is None:
    r_block = _pick_r_block(R)
  assert R % r_block == 0 and (r_block % 128 == 0 or r_block == R)
  if nb is None:
    nb = _pick_nb(N, OW, KH, W, k, r_block, cd_bytes, budget)
  assert N % nb == 0 and ((nb * OW) % 128 == 0 or nb == N)
  grid_n = N // nb
  grid_r = R // r_block

  x3 = x.reshape(N, KH, W).astype(compute_dtype)      # free metadata reshape
  bwt_c = bwt.astype(compute_dtype)
  ccat_c = ccat.astype(compute_dtype)

  cost = pl.CostEstimate(
      flops=2 * R * (k * KH) * CW + 2 * grid_r * N * KH * W * k * OW,
      transcendentals=R * CW,
      bytes_accessed=(cd_bytes * (x3.size + bwt_c.size + grid_n * ccat_c.size)
                      + 4 * (R * CW + grid_n * 2 * R)))

  y, stats = pl.pallas_call(
      _fused_kernel,
      out_shape=(jax.ShapeDtypeStruct((R, CW), jnp.float32),
                 jax.ShapeDtypeStruct((grid_n, 2, R), jnp.float32)),
      grid=(grid_n, grid_r),
      in_specs=[
          pl.BlockSpec((nb, KH, W), lambda b, r: (b, 0, 0)),
          pl.BlockSpec((k, W, OW), lambda b, r: (0, 0, 0),
                       pipeline_mode=pl.Buffered(1)),       # grid-constant
          pl.BlockSpec((r_block, k * KH), lambda b, r: (r, 0)),
      ],
      out_specs=(pl.BlockSpec((r_block, nb * OW), lambda b, r: (r, b)),
                 pl.BlockSpec((1, 2, r_block), lambda b, r: (b, 0, r))),
      scratch_shapes=[pltpu.VMEM((k * KH, nb * OW), compute_dtype)],
      compiler_params=pltpu.CompilerParams(
          dimension_semantics=("parallel", "parallel"),
          vmem_limit_bytes=vmem_limit),
      cost_estimate=cost,
  )(x3, bwt_c, ccat_c)

  # ---- BatchNorm2d statistics (training mode, biased variance) ----
  # TODO(synk): E[x^2]-E[x]^2 in f32 loses precision if |mean| >> std; switch
  # to a two-pass / Welford reduction if activations can be large.
  cnt = N * OH * OW
  sums = stats[:, 0, :].sum(axis=0).reshape(Cout, OH).sum(axis=1)
  sumsq = stats[:, 1, :].sum(axis=0).reshape(Cout, OH).sum(axis=1)
  mean = sums / cnt
  var = jnp.maximum(sumsq / cnt - mean * mean, 0.0)
  scale = gamma * lax.rsqrt(var + eps)
  shift = beta - mean * scale
  scale_rows = jnp.repeat(scale, OH).reshape(R, 1)      # per (co, oh) row
  shift_rows = jnp.repeat(shift, OH).reshape(R, 1)

  # ---- BN affine: pure HBM-roofline pass, big lane-dense tiles, in place ----
  r_app, c_app = _pick_apply_tiles(R, CW, budget)
  out_flat = pl.pallas_call(
      _bn_apply_kernel,
      out_shape=jax.ShapeDtypeStruct((R, CW), jnp.float32),
      grid=(R // r_app, CW // c_app),
      in_specs=[pl.BlockSpec((r_app, c_app), lambda r, c: (r, c)),
                pl.BlockSpec((r_app, 1), lambda r, c: (r, 0)),
                pl.BlockSpec((r_app, 1), lambda r, c: (r, 0))],
      out_specs=pl.BlockSpec((r_app, c_app), lambda r, c: (r, c)),
      compiler_params=pltpu.CompilerParams(
          dimension_semantics=("parallel", "parallel"),
          vmem_limit_bytes=vmem_limit),
      input_output_aliases={0: 0},                     # BN apply in place on y
  )(y, scale_rows, shift_rows)

  # (Cout*OH, N*OW) -> NCHW.  Kernels stay lane-dense; a consumer that accepts
  # the flat layout can skip this transpose entirely.
  out = out_flat.reshape(Cout, OH, N, OW)
  return jnp.transpose(out, (2, 0, 1, 3))


# ---------------- pure-JAX reference (for correctness check) ----------------

def reference(x, weight, gamma, beta, kernel_size, stride, padding, eps=BN_EPS):
  N, Cin, H, W = x.shape
  Ah = _interp_matrix(H, H * kernel_size)
  Aw = _interp_matrix(W, W * kernel_size)
  up = jnp.einsum('uh,nchw,vw->ncuv', Ah, x, Aw,
                  precision=lax.Precision.HIGHEST)
  y = lax.conv_general_dilated(up, weight, (stride, stride),
                               [(padding, padding), (padding, padding)],
                               dimension_numbers=('NCHW', 'OIHW', 'NCHW'),
                               precision=lax.Precision.HIGHEST)
  g = 0.5 * y * (1.0 + lax.erf(y * INV_SQRT2))
  mean = g.mean(axis=(0, 2, 3), keepdims=True)
  var = ((g - mean) ** 2).mean(axis=(0, 2, 3), keepdims=True)
  return (gamma[None, :, None, None] * (g - mean) * lax.rsqrt(var + eps)
          + beta[None, :, None, None])


if __name__ == "__main__":
  key = jax.random.PRNGKey(0)
  k1, k2, k3, k4 = jax.random.split(key, 4)

  # typical decoder config: kernel_size=4, stride=2, padding=1 -> 2x upsampling
  N, Cin, H, W = 4, 4, 16, 16
  Cout, ksize, stride, padding = 8, 4, 2, 1

  x = jax.random.normal(k1, (N, Cin, H, W), jnp.float32)
  weight = 0.1 * jax.random.normal(k2, (Cout, Cin, ksize, ksize), jnp.float32)
  gamma = 1.0 + 0.1 * jax.random.normal(k3, (Cout,), jnp.float32)
  beta = 0.1 * jax.random.normal(k4, (Cout,), jnp.float32)

  ref = reference(x, weight, gamma, beta, ksize, stride, padding)

  # f32 operands, r_block=128 -> exercises the R-tiling grid axis (grid_r=2).
  fn_f32 = jax.jit(functools.partial(conv_upsampling, kernel_size=ksize,
                                     stride=stride, padding=padding,
                                     r_block=128, compute_dtype=jnp.float32))
  out_f32 = jax.block_until_ready(fn_f32(x, weight, gamma, beta))
  assert out_f32.shape == ref.shape == (N, Cout, 2 * H, 2 * W), out_f32.shape
  assert bool(jnp.allclose(out_f32, ref, atol=3e-2, rtol=3e-2)), \
      float(jnp.max(jnp.abs(out_f32 - ref)))

  # default path: bf16 matmul operands (f32 accumulation) for the bf16 MXU.
  fn_bf16 = jax.jit(functools.partial(conv_upsampling, kernel_size=ksize,
                                      stride=stride, padding=padding))
  out_bf16 = jax.block_until_ready(fn_bf16(x, weight, gamma, beta))
  assert out_bf16.shape == ref.shape
  assert bool(jnp.allclose(out_bf16, ref, atol=2e-1, rtol=1e-1)), \
      float(jnp.max(jnp.abs(out_bf16 - ref)))

  print("KERNEL_OK")
</pallas_src>

<mosaic_0001>
module attributes {stable_mosaic.version = 11 : i64} {
  func.func @_fused_kernel(%arg0: i32, %arg1: i32, %arg2: memref<4x64x16xf32, #tpu.memory_space<vmem>>, %arg3: memref<4x16x32xf32, #tpu.memory_space<vmem>>, %arg4: memref<128x256xf32, #tpu.memory_space<vmem>>, %arg5: memref<128x128xf32, #tpu.memory_space<vmem>>, %arg6: memref<1x2x128xf32, #tpu.memory_space<vmem>>, %arg7: memref<256x128xf32, #tpu.memory_space<vmem>>) attributes {dimension_semantics = [#tpu.dimension_semantics<parallel>, #tpu.dimension_semantics<parallel>], iteration_bounds = array<i64: 1, 2>, scalar_prefetch = 0 : i64, scratch_operands = 1 : i64, tpu.core_type = #tpu.core_type<tc>, window_params = [{transform_indices = @transform_0, window_bounds = array<i64: 4, 64, 16>}, {pipeline_mode = #tpu.pipeline_mode<synchronous>, transform_indices = @transform_1, window_bounds = array<i64: 4, 16, 32>}, {transform_indices = @transform_2, window_bounds = array<i64: 128, 256>}, {transform_indices = @transform_3, window_bounds = array<i64: 128, 128>}, {transform_indices = @transform_4, window_bounds = array<i64: 1, 2, 128>}]} {
    %c0 = arith.constant 0 : index
    %c0_0 = arith.constant 0 : index
    %c0_1 = arith.constant 0 : index
    %0 = vector.load %arg2[%c0, %c0_0, %c0_1] : memref<4x64x16xf32, #tpu.memory_space<vmem>>, vector<1x64x16xf32>
    %1 = vector.shape_cast %0 : vector<1x64x16xf32> to vector<64x16xf32>
    %c0_2 = arith.constant 0 : index
    %c0_3 = arith.constant 0 : index
    %c0_4 = arith.constant 0 : index
    %2 = vector.load %arg3[%c0_2, %c0_3, %c0_4] : memref<4x16x32xf32, #tpu.memory_space<vmem>>, vector<1x16x32xf32>
    %3 = vector.shape_cast %2 : vector<1x16x32xf32> to vector<16x32xf32>
    %cst = arith.constant dense<0.000000e+00> : vector<64x32xf32>
    %4 = tpu.matmul %1, %3, %cst {dimension_numbers = #tpu.dot_dimension_numbers<[1], [0], [0], [1], [0, 0, 1, 1], [], []>} : vector<64x16xf32>, vector<16x32xf32>, vector<64x32xf32> -> vector<64x32xf32>
    %c0_5 = arith.constant 0 : index
    %c0_6 = arith.constant 0 : index
    %5 = vector.load %arg7[%c0_5, %c0_6] : memref<256x128xf32, #tpu.memory_space<vmem>>, vector<64x32xf32>
    tpu.vector_store %arg7[%c0_5, %c0_6], %4 {strides = array<i32>} : memref<256x128xf32, #tpu.memory_space<vmem>>, vector<64x32xf32>,
    %c1 = arith.constant 1 : index
    %c0_7 = arith.constant 0 : index
    %c0_8 = arith.constant 0 : index
    %6 = vector.load %arg3[%c1, %c0_7, %c0_8] : memref<4x16x32xf32, #tpu.memory_space<vmem>>, vector<1x16x32xf32>
    %7 = vector.shape_cast %6 : vector<1x16x32xf32> to vector<16x32xf32>
    %cst_9 = arith.constant dense<0.000000e+00> : vector<64x32xf32>
    %8 = tpu.matmul %1, %7, %cst_9 {dimension_numbers = #tpu.dot_dimension_numbers<[1], [0], [0], [1], [0, 0, 1, 1], [], []>} : vector<64x16xf32>, vector<16x32xf32>, vector<64x32xf32> -> vector<64x32xf32>
    %c64 = arith.constant 64 : index
    %c0_10 = arith.constant 0 : index
    %9 = vector.load %arg7[%c64, %c0_10] : memref<256x128xf32, #tpu.memory_space<vmem>>, vector<64x32xf32>
    tpu.vector_store %arg7[%c64, %c0_10], %8 {strides = array<i32>} : memref<256x128xf32, #tpu.memory_space<vmem>>, vector<64x32xf32>,
    %c2 = arith.constant 2 : index
    %c0_11 = arith.constant 0 : index
    %c0_12 = arith.constant 0 : index
    %10 = vector.load %arg3[%c2, %c0_11, %c0_12] : memref<4x16x32xf32, #tpu.memory_space<vmem>>, vector<1x16x32xf32>
    %11 = vector.shape_cast %10 : vector<1x16x32xf32> to vector<16x32xf32>
    %cst_13 = arith.constant dense<0.000000e+00> : vector<64x32xf32>
    %12 = tpu.matmul %1, %11, %cst_13 {dimension_numbers = #tpu.dot_dimension_numbers<[1], [0], [0], [1], [0, 0, 1, 1], [], []>} : vector<64x16xf32>, vector<16x32xf32>, vector<64x32xf32> -> vector<64x32xf32>
    %c128 = arith.constant 128 : index
    %c0_14 = arith.constant 0 : index
    %13 = vector.load %arg7[%c128, %c0_14] : memref<256x128xf32, #tpu.memory_space<vmem>>, vector<64x32xf32>
    tpu.vector_store %arg7[%c128, %c0_14], %12 {strides = array<i32>} : memref<256x128xf32, #tpu.memory_space<vmem>>, vector<64x32xf32>,
    %c3 = arith.constant 3 : index
    %c0_15 = arith.constant 0 : index
    %c0_16 = arith.constant 0 : index
    %14 = vector.load %arg3[%c3, %c0_15, %c0_16] : memref<4x16x32xf32, #tpu.memory_space<vmem>>, vector<1x16x32xf32>
    %15 = vector.shape_cast %14 : vector<1x16x32xf32> to vector<16x32xf32>
    %cst_17 = arith.constant dense<0.000000e+00> : vector<64x32xf32>
    %16 = tpu.matmul %1, %15, %cst_17 {dimension_numbers = #tpu.dot_dimension_numbers<[1], [0], [0], [1], [0, 0, 1, 1], [], []>} : vector<64x16xf32>, vector<16x32xf32>, vector<64x32xf32> -> vector<64x32xf32>
    %c192 = arith.constant 192 : index
    %c0_18 = arith.constant 0 : index
    %17 = vector.load %arg7[%c192, %c0_18] : memref<256x128xf32, #tpu.memory_space<vmem>>, vector<64x32xf32>
    tpu.vector_store %arg7[%c192, %c0_18], %16 {strides = array<i32>} : memref<256x128xf32, #tpu.memory_space<vmem>>, vector<64x32xf32>,
    %c1_19 = arith.constant 1 : index
    %c0_20 = arith.constant 0 : index
    %c0_21 = arith.constant 0 : index
    %18 = vector.load %arg2[%c1_19, %c0_20, %c0_21] : memref<4x64x16xf32, #tpu.memory_space<vmem>>, vector<1x64x16xf32>
    %19 = vector.shape_cast %18 : vector<1x64x16xf32> to vector<64x16xf32>
    %c0_22 = arith.constant 0 : index
    %c0_23 = arith.constant 0 : index
    %c0_24 = arith.constant 0 : index
    %20 = vector.load %arg3[%c0_22, %c0_23, %c0_24] : memref<4x16x32xf32, #tpu.memory_space<vmem>>, vector<1x16x32xf32>
    %21 = vector.shape_cast %20 : vector<1x16x32xf32> to vector<16x32xf32>
    %cst_25 = arith.constant dense<0.000000e+00> : vector<64x32xf32>
    %22 = tpu.matmul %19, %21, %cst_25 {dimension_numbers = #tpu.dot_dimension_numbers<[1], [0], [0], [1], [0, 0, 1, 1], [], []>} : vector<64x16xf32>, vector<16x32xf32>, vector<64x32xf32> -> vector<64x32xf32>
    %c0_26 = arith.constant 0 : index
    %c32 = arith.constant 32 : index
    %23 = vector.load %arg7[%c0_26, %c32] : memref<256x128xf32, #tpu.memory_space<vmem>>, vector<64x32xf32>
    tpu.vector_store %arg7[%c0_26, %c32], %22 {strides = array<i32>} : memref<256x128xf32, #tpu.memory_space<vmem>>, vector<64x32xf32>,
    %c1_27 = arith.constant 1 : index
    %c0_28 = arith.constant 0 : index
    %c0_29 = arith.constant 0 : index
    %24 = vector.load %arg3[%c1_27, %c0_28, %c0_29] : memref<4x16x32xf32, #tpu.memory_space<vmem>>, vector<1x16x32xf32>
    %25 = vector.shape_cast %24 : vector<1x16x32xf32> to vector<16x32xf32>
    %cst_30 = arith.constant dense<0.000000e+00> : vector<64x32xf32>
    %26 = tpu.matmul %19, %25, %cst_30 {dimension_numbers = #tpu.dot_dimension_numbers<[1], [0], [0], [1], [0, 0, 1, 1], [], []>} : vector<64x16xf32>, vector<16x32xf32>, vector<64x32xf32> -> vector<64x32xf32>
    %c64_31 = arith.constant 64 : index
    %c32_32 = arith.constant 32 : index
    %27 = vector.load %arg7[%c64_31, %c32_32] : memref<256x128xf32, #tpu.memory_space<vmem>>, vector<64x32xf32>
    tpu.vector_store %arg7[%c64_31, %c32_32], %26 {strides = array<i32>} : memref<256x128xf32, #tpu.memory_space<vmem>>, vector<64x32xf32>,
    %c2_33 = arith.constant 2 : index
    %c0_34 = arith.constant 0 : index
    %c0_35 = arith.constant 0 : index
    %28 = vector.load %arg3[%c2_33, %c0_34, %c0_35] : memref<4x16x32xf32, #tpu.memory_space<vmem>>, vector<1x16x32xf32>
    %29 = vector.shape_cast %28 : vector<1x16x32xf32> to vector<16x32xf32>
    %cst_36 = arith.constant dense<0.000000e+00> : vector<64x32xf32>
    %30 = tpu.matmul %19, %29, %cst_36 {dimension_numbers = #tpu.dot_dimension_numbers<[1], [0], [0], [1], [0, 0, 1, 1], [], []>} : vector<64x16xf32>, vector<16x32xf32>, vector<64x32xf32> -> vector<64x32xf32>
    %c128_37 = arith.constant 128 : index
    %c32_38 = arith.constant 32 : index
    %31 = vector.load %arg7[%c128_37, %c32_38] : memref<256x128xf32, #tpu.memory_space<vmem>>, vector<64x32xf32>
    tpu.vector_store %arg7[%c128_37, %c32_38], %30 {strides = array<i32>} : memref<256x128xf32, #tpu.memory_space<vmem>>, vector<64x32xf32>,
    %c3_39 = arith.constant 3 : index
    %c0_40 = arith.constant 0 : index
    %c0_41 = arith.constant 0 : index
    %32 = vector.load %arg3[%c3_39, %c0_40, %c0_41] : memref<4x16x32xf32, #tpu.memory_space<vmem>>, vector<1x16x32xf32>
    %33 = vector.shape_cast %32 : vector<1x16x32xf32> to vector<16x32xf32>
    %cst_42 = arith.constant dense<0.000000e+00> : vector<64x32xf32>
    %34 = tpu.matmul %19, %33, %cst_42 {dimension_numbers = #tpu.dot_dimension_numbers<[1], [0], [0], [1], [0, 0, 1, 1], [], []>} : vector<64x16xf32>, vector<16x32xf32>, vector<64x32xf32> -> vector<64x32xf32>
    %c192_43 = arith.constant 192 : index
    %c32_44 = arith.constant 32 : index
    %35 = vector.load %arg7[%c192_43, %c32_44] : memref<256x128xf32, #tpu.memory_space<vmem>>, vector<64x32xf32>
    tpu.vector_store %arg7[%c192_43, %c32_44], %34 {strides = array<i32>} : memref<256x128xf32, #tpu.memory_space<vmem>>, vector<64x32xf32>,
    %c2_45 = arith.constant 2 : index
    %c0_46 = arith.constant 0 : index
    %c0_47 = arith.constant 0 : index
    %36 = vector.load %arg2[%c2_45, %c0_46, %c0_47] : memref<4x64x16xf32, #tpu.memory_space<vmem>>, vector<1x64x16xf32>
    %37 = vector.shape_cast %36 : vector<1x64x16xf32> to vector<64x16xf32>
    %c0_48 = arith.constant 0 : index
    %c0_49 = arith.constant 0 : index
    %c0_50 = arith.constant 0 : index
    %38 = vector.load %arg3[%c0_48, %c0_49, %c0_50] : memref<4x16x32xf32, #tpu.memory_space<vmem>>, vector<1x16x32xf32>
    %39 = vector.shape_cast %38 : vector<1x16x32xf32> to vector<16x32xf32>
    %cst_51 = arith.constant dense<0.000000e+00> : vector<64x32xf32>
    %40 = tpu.matmul %37, %39, %cst_51 {dimension_numbers = #tpu.dot_dimension_numbers<[1], [0], [0], [1], [0, 0, 1, 1], [], []>} : vector<64x16xf32>, vector<16x32xf32>, vector<64x32xf32> -> vector<64x32xf32>
    %c0_52 = arith.constant 0 : index
    %c64_53 = arith.constant 64 : index
    %41 = vector.load %arg7[%c0_52, %c64_53] : memref<256x128xf32, #tpu.memory_space<vmem>>, vector<64x32xf32>
    tpu.vector_store %arg7[%c0_52, %c64_53], %40 {strides = array<i32>} : memref<256x128xf32, #tpu.memory_space<vmem>>, vector<64x32xf32>,
    %c1_54 = arith.constant 1 : index
    %c0_55 = arith.constant 0 : index
    %c0_56 = arith.constant 0 : index
    %42 = vector.load %arg3[%c1_54, %c0_55, %c0_56] : memref<4x16x32xf32, #tpu.memory_space<vmem>>, vector<1x16x32xf32>
    %43 = vector.shape_cast %42 : vector<1x16x32xf32> to vector<16x32xf32>
    %cst_57 = arith.constant dense<0.000000e+00> : vector<64x32xf32>
    %44 = tpu.matmul %37, %43, %cst_57 {dimension_numbers = #tpu.dot_dimension_numbers<[1], [0], [0], [1], [0, 0, 1, 1], [], []>} : vector<64x16xf32>, vector<16x32xf32>, vector<64x32xf32> -> vector<64x32xf32>
    %c64_58 = arith.constant 64 : index
    %c64_59 = arith.constant 64 : index
    %45 = vector.load %arg7[%c64_58, %c64_59] : memref<256x128xf32, #tpu.memory_space<vmem>>, vector<64x32xf32>
    tpu.vector_store %arg7[%c64_58, %c64_59], %44 {strides = array<i32>} : memref<256x128xf32, #tpu.memory_space<vmem>>, vector<64x32xf32>,
    %c2_60 = arith.constant 2 : index
    %c0_61 = arith.constant 0 : index
    %c0_62 = arith.constant 0 : index
    %46 = vector.load %arg3[%c2_60, %c0_61, %c0_62] : memref<4x16x32xf32, #tpu.memory_space<vmem>>, vector<1x16x32xf32>
    %47 = vector.shape_cast %46 : vector<1x16x32xf32> to vector<16x32xf32>
    %cst_63 = arith.constant dense<0.000000e+00> : vector<64x32xf32>
    %48 = tpu.matmul %37, %47, %cst_63 {dimension_numbers = #tpu.dot_dimension_numbers<[1], [0], [0], [1], [0, 0, 1, 1], [], []>} : vector<64x16xf32>, vector<16x32xf32>, vector<64x32xf32> -> vector<64x32xf32>
    %c128_64 = arith.constant 128 : index
    %c64_65 = arith.constant 64 : index
    %49 = vector.load %arg7[%c128_64, %c64_65] : memref<256x128xf32, #tpu.memory_space<vmem>>, vector<64x32xf32>
    tpu.vector_store %arg7[%c128_64, %c64_65], %48 {strides = array<i32>} : memref<256x128xf32, #tpu.memory_space<vmem>>, vector<64x32xf32>,
    %c3_66 = arith.constant 3 : index
    %c0_67 = arith.constant 0 : index
    %c0_68 = arith.constant 0 : index
    %50 = vector.load %arg3[%c3_66, %c0_67, %c0_68] : memref<4x16x32xf32, #tpu.memory_space<vmem>>, vector<1x16x32xf32>
    %51 = vector.shape_cast %50 : vector<1x16x32xf32> to vector<16x32xf32>
    %cst_69 = arith.constant dense<0.000000e+00> : vector<64x32xf32>
    %52 = tpu.matmul %37, %51, %cst_69 {dimension_numbers = #tpu.dot_dimension_numbers<[1], [0], [0], [1], [0, 0, 1, 1], [], []>} : vector<64x16xf32>, vector<16x32xf32>, vector<64x32xf32> -> vector<64x32xf32>
    %c192_70 = arith.constant 192 : index
    %c64_71 = arith.constant 64 : index
    %53 = vector.load %arg7[%c192_70, %c64_71] : memref<256x128xf32, #tpu.memory_space<vmem>>, vector<64x32xf32>
    tpu.vector_store %arg7[%c192_70, %c64_71], %52 {strides = array<i32>} : memref<256x128xf32, #tpu.memory_space<vmem>>, vector<64x32xf32>,
    %c3_72 = arith.constant 3 : index
    %c0_73 = arith.constant 0 : index
    %c0_74 = arith.constant 0 : index
    %54 = vector.load %arg2[%c3_72, %c0_73, %c0_74] : memref<4x64x16xf32, #tpu.memory_space<vmem>>, vector<1x64x16xf32>
    %55 = vector.shape_cast %54 : vector<1x64x16xf32> to vector<64x16xf32>
    %c0_75 = arith.constant 0 : index
    %c0_76 = arith.constant 0 : index
    %c0_77 = arith.constant 0 : index
    %56 = vector.load %arg3[%c0_75, %c0_76, %c0_77] : memref<4x16x32xf32, #tpu.memory_space<vmem>>, vector<1x16x32xf32>
    %57 = vector.shape_cast %56 : vector<1x16x32xf32> to vector<16x32xf32>
    %cst_78 = arith.constant dense<0.000000e+00> : vector<64x32xf32>
    %58 = tpu.matmul %55, %57, %cst_78 {dimension_numbers = #tpu.dot_dimension_numbers<[1], [0], [0], [1], [0, 0, 1, 1], [], []>} : vector<64x16xf32>, vector<16x32xf32>, vector<64x32xf32> -> vector<64x32xf32>
    %c0_79 = arith.constant 0 : index
    %c96 = arith.constant 96 : index
    %59 = vector.load %arg7[%c0_79, %c96] : memref<256x128xf32, #tpu.memory_space<vmem>>, vector<64x32xf32>
    tpu.vector_store %arg7[%c0_79, %c96], %58 {strides = array<i32>} : memref<256x128xf32, #tpu.memory_space<vmem>>, vector<64x32xf32>,
    %c1_80 = arith.constant 1 : index
    %c0_81 = arith.constant 0 : index
    %c0_82 = arith.constant 0 : index
    %60 = vector.load %arg3[%c1_80, %c0_81, %c0_82] : memref<4x16x32xf32, #tpu.memory_space<vmem>>, vector<1x16x32xf32>
    %61 = vector.shape_cast %60 : vector<1x16x32xf32> to vector<16x32xf32>
    %cst_83 = arith.constant dense<0.000000e+00> : vector<64x32xf32>
    %62 = tpu.matmul %55, %61, %cst_83 {dimension_numbers = #tpu.dot_dimension_numbers<[1], [0], [0], [1], [0, 0, 1, 1], [], []>} : vector<64x16xf32>, vector<16x32xf32>, vector<64x32xf32> -> vector<64x32xf32>
    %c64_84 = arith.constant 64 : index
    %c96_85 = arith.constant 96 : index
    %63 = vector.load %arg7[%c64_84, %c96_85] : memref<256x128xf32, #tpu.memory_space<vmem>>, vector<64x32xf32>
    tpu.vector_store %arg7[%c64_84, %c96_85], %62 {strides = array<i32>} : memref<256x128xf32, #tpu.memory_space<vmem>>, vector<64x32xf32>,
    %c2_86 = arith.constant 2 : index
    %c0_87 = arith.constant 0 : index
    %c0_88 = arith.constant 0 : index
    %64 = vector.load %arg3[%c2_86, %c0_87, %c0_88] : memref<4x16x32xf32, #tpu.memory_space<vmem>>, vector<1x16x32xf32>
    %65 = vector.shape_cast %64 : vector<1x16x32xf32> to vector<16x32xf32>
    %cst_89 = arith.constant dense<0.000000e+00> : vector<64x32xf32>
    %66 = tpu.matmul %55, %65, %cst_89 {dimension_numbers = #tpu.dot_dimension_numbers<[1], [0], [0], [1], [0, 0, 1, 1], [], []>} : vector<64x16xf32>, vector<16x32xf32>, vector<64x32xf32> -> vector<64x32xf32>
    %c128_90 = arith.constant 128 : index
    %c96_91 = arith.constant 96 : index
    %67 = vector.load %arg7[%c128_90, %c96_91] : memref<256x128xf32, #tpu.memory_space<vmem>>, vector<64x32xf32>
    tpu.vector_store %arg7[%c128_90, %c96_91], %66 {strides = array<i32>} : memref<256x128xf32, #tpu.memory_space<vmem>>, vector<64x32xf32>,
    %c3_92 = arith.constant 3 : index
    %c0_93 = arith.constant 0 : index
    %c0_94 = arith.constant 0 : index
    %68 = vector.load %arg3[%c3_92, %c0_93, %c0_94] : memref<4x16x32xf32, #tpu.memory_space<vmem>>, vector<1x16x32xf32>
    %69 = vector.shape_cast %68 : vector<1x16x32xf32> to vector<16x32xf32>
    %cst_95 = arith.constant dense<0.000000e+00> : vector<64x32xf32>
    %70 = tpu.matmul %55, %69, %cst_95 {dimension_numbers = #tpu.dot_dimension_numbers<[1], [0], [0], [1], [0, 0, 1, 1], [], []>} : vector<64x16xf32>, vector<16x32xf32>, vector<64x32xf32> -> vector<64x32xf32>
    %c192_96 = arith.constant 192 : index
    %c96_97 = arith.constant 96 : index
    %71 = vector.load %arg7[%c192_96, %c96_97] : memref<256x128xf32, #tpu.memory_space<vmem>>, vector<64x32xf32>
    tpu.vector_store %arg7[%c192_96, %c96_97], %70 {strides = array<i32>} : memref<256x128xf32, #tpu.memory_space<vmem>>, vector<64x32xf32>,
    %c0_98 = arith.constant 0 : index
    %c0_99 = arith.constant 0 : index
    %72 = vector.load %arg4[%c0_98, %c0_99] : memref<128x256xf32, #tpu.memory_space<vmem>>, vector<128x256xf32>
    %c0_100 = arith.constant 0 : index
    %c0_101 = arith.constant 0 : index
    %73 = vector.load %arg7[%c0_100, %c0_101] : memref<256x128xf32, #tpu.memory_space<vmem>>, vector<256x128xf32>
    %cst_102 = arith.constant dense<0.000000e+00> : vector<128x128xf32>
    %74 = tpu.matmul %72, %73, %cst_102 {dimension_numbers = #tpu.dot_dimension_numbers<[1], [0], [0], [1], [0, 0, 1, 1], [], []>} : vector<128x256xf32>, vector<256x128xf32>, vector<128x128xf32> -> vector<128x128xf32>
    %cst_103 = arith.constant 5.000000e-01 : f32
    %75 = vector.broadcast %cst_103 : f32 to vector<128x128xf32>
    %76 = arith.mulf %75, %74 : vector<128x128xf32>
    %cst_104 = arith.constant 0.707106769 : f32
    %77 = vector.broadcast %cst_104 : f32 to vector<128x128xf32>
    %78 = arith.mulf %74, %77 : vector<128x128xf32>
    %79 = math.erf %78 : vector<128x128xf32>
    %cst_105 = arith.constant 1.000000e+00 : f32
    %80 = vector.broadcast %cst_105 : f32 to vector<128x128xf32>
    %81 = arith.addf %80, %79 : vector<128x128xf32>
    %82 = arith.mulf %76, %81 : vector<128x128xf32>
    %c0_106 = arith.constant 0 : index
    %c0_107 = arith.constant 0 : index
    %83 = vector.load %arg5[%c0_106, %c0_107] : memref<128x128xf32, #tpu.memory_space<vmem>>, vector<128x128xf32>
    tpu.vector_store %arg5[%c0_106, %c0_107], %82 {strides = array<i32>} : memref<128x128xf32, #tpu.memory_space<vmem>>, vector<128x128xf32>,
    %cst_108 = arith.constant dense<0.000000e+00> : vector<128xf32>
    %84 = vector.multi_reduction <add>, %82, %cst_108 [1] : vector<128x128xf32> to vector<128xf32>
    %85 = vector.shape_cast %84 : vector<128xf32> to vector<128x1xf32>
    %86 = arith.mulf %82, %82 : vector<128x128xf32>
    %cst_109 = arith.constant dense<0.000000e+00> : vector<128xf32>
    %87 = vector.multi_reduction <add>, %86, %cst_109 [1] : vector<128x128xf32> to vector<128xf32>
    %88 = vector.shape_cast %87 : vector<128xf32> to vector<128x1xf32>
    %89 = tpu.concatenate %85, %88 in 1 : vector<128x1xf32>, vector<128x1xf32> -> vector<128x2xf32>
    %90 = tpu.transpose %89, [1, 0] : vector<128x2xf32> -> vector<2x128xf32>
    %91 = vector.shape_cast %90 : vector<2x128xf32> to vector<1x2x128xf32>
    %c0_110 = arith.constant 0 : index
    %c0_111 = arith.constant 0 : index
    %c0_112 = arith.constant 0 : index
    %92 = vector.load %arg6[%c0_110, %c0_111, %c0_112] : memref<1x2x128xf32, #tpu.memory_space<vmem>>, vector<1x2x128xf32>
    tpu.vector_store %arg6[%c0_110, %c0_111, %c0_112], %91 {strides = array<i32>} : memref<1x2x128xf32, #tpu.memory_space<vmem>>, vector<1x2x128xf32>,
    return
  }
  func.func @transform_0(%arg0: i32, %arg1: i32) -> (i32, i32, i32) {
    %c0_i32 = arith.constant 0 : i32
    %c0_i32_0 = arith.constant 0 : i32
    %c0_i32_1 = arith.constant 0 : i32
    return %arg0, %c0_i32, %c0_i32_0 : i32, i32, i32
  }
  func.func @transform_1(%arg0: i32, %arg1: i32) -> (i32, i32, i32) {
    %c0_i32 = arith.constant 0 : i32
    %c0_i32_0 = arith.constant 0 : i32
    %c0_i32_1 = arith.constant 0 : i32
    %c0_i32_2 = arith.constant 0 : i32
    return %c0_i32, %c0_i32_0, %c0_i32_1 : i32, i32, i32
  }
  func.func @transform_2(%arg0: i32, %arg1: i32) -> (i32, i32) {
    %c0_i32 = arith.constant 0 : i32
    %c0_i32_0 = arith.constant 0 : i32
    return %arg1, %c0_i32 : i32, i32
  }
  func.func @transform_3(%arg0: i32, %arg1: i32) -> (i32, i32) {
    %c0_i32 = arith.constant 0 : i32
    return %arg1, %arg0 : i32, i32
  }
  func.func @transform_4(%arg0: i32, %arg1: i32) -> (i32, i32, i32) {
    %c0_i32 = arith.constant 0 : i32
    %c0_i32_0 = arith.constant 0 : i32
    return %arg0, %c0_i32, %arg1 : i32, i32, i32
  }
}

module attributes {stable_mosaic.version = 11 : i64} {
  func.func @_bn_apply_kernel(%arg0: i32, %arg1: i32, %arg2: memref<256x128xf32, #tpu.memory_space<vmem>>, %arg3: memref<256x1xf32, #tpu.memory_space<vmem>>, %arg4: memref<256x1xf32, #tpu.memory_space<vmem>>, %arg5: memref<256x128xf32, #tpu.memory_space<vmem>>) attributes {dimension_semantics = [#tpu.dimension_semantics<parallel>, #tpu.dimension_semantics<parallel>], iteration_bounds = array<i64: 1, 1>, scalar_prefetch = 0 : i64, scratch_operands = 0 : i64, tpu.core_type = #tpu.core_type<tc>, window_params = [{transform_indices = @transform_0, window_bounds = array<i64: 256, 128>}, {transform_indices = @transform_1, window_bounds = array<i64: 256, 1>}, {transform_indices = @transform_2, window_bounds = array<i64: 256, 1>}, {transform_indices = @transform_3, window_bounds = array<i64: 256, 128>}]} {
    %c0 = arith.constant 0 : index
    %c0_0 = arith.constant 0 : index
    %0 = vector.load %arg2[%c0, %c0_0] : memref<256x128xf32, #tpu.memory_space<vmem>>, vector<256x128xf32>
    %c0_1 = arith.constant 0 : index
    %c0_2 = arith.constant 0 : index
    %1 = vector.load %arg3[%c0_1, %c0_2] : memref<256x1xf32, #tpu.memory_space<vmem>>, vector<256x1xf32>
    %2 = vector.broadcast %1 : vector<256x1xf32> to vector<256x128xf32>
    %3 = arith.mulf %0, %2 : vector<256x128xf32>
    %c0_3 = arith.constant 0 : index
    %c0_4 = arith.constant 0 : index
    %4 = vector.load %arg4[%c0_3, %c0_4] : memref<256x1xf32, #tpu.memory_space<vmem>>, vector<256x1xf32>
    %5 = vector.broadcast %4 : vector<256x1xf32> to vector<256x128xf32>
    %6 = arith.addf %3, %5 : vector<256x128xf32>
    %c0_5 = arith.constant 0 : index
    %c0_6 = arith.constant 0 : index
    %7 = vector.load %arg5[%c0_5, %c0_6] : memref<256x128xf32, #tpu.memory_space<vmem>>, vector<256x128xf32>
    tpu.vector_store %arg5[%c0_5, %c0_6], %6 {strides = array<i32>} : memref<256x128xf32, #tpu.memory_space<vmem>>, vector<256x128xf32>,
    return
  }
  func.func @transform_0(%arg0: i32, %arg1: i32) -> (i32, i32) {
    %c0_i32 = arith.constant 0 : i32
    return %arg0, %arg1 : i32, i32
  }
  func.func @transform_1(%arg0: i32, %arg1: i32) -> (i32, i32) {
    %c0_i32 = arith.constant 0 : i32
    %c0_i32_0 = arith.constant 0 : i32
    return %arg0, %c0_i32 : i32, i32
  }
  func.func @transform_2(%arg0: i32, %arg1: i32) -> (i32, i32) {
    %c0_i32 = arith.constant 0 : i32
    %c0_i32_0 = arith.constant 0 : i32
    return %arg0, %c0_i32 : i32, i32
  }
  func.func @transform_3(%arg0: i32, %arg1: i32) -> (i32, i32) {
    %c0_i32 = arith.constant 0 : i32
    return %arg0, %arg1 : i32, i32
  }
}

</mosaic_0001>

<llo_original>
// kernel: conv_upsampling.2
$region0: #{conv_upsampling.2}
  #allocation0 [shape = 'u32[]', space=smem, size = 0x4, offset = 0x4, fixed_abs, tag = 'smem constant byte address 0x4 - core index']
  #allocation1 [shape = 'u32[72,128]{1,0:T(1,128)}', space=vmem, size = 0x9000, scoped, tag = 'internal scratch']
  #allocation2 [shape = 'f32[256,128]{1,0:T(8,128)}', space=vmem, size = 0x20000, scoped, tag = 'scratch operand']
  %s0 = inlined_call_operand.vmem [shape: f32[4,64,16], index: 0, kind: input, shape index: {}]
  %s1 = inlined_call_operand.vmem [shape: f32[4,16,32], index: 1, kind: input, shape index: {}]
  %s2 = inlined_call_operand.vmem [shape: f32[256,256], index: 2, kind: input, shape index: {}]
  %s3 = inlined_call_operand.vmem [shape: f32[256,128], index: 3, kind: output, shape index: {0}]
  %s4 = inlined_call_operand.vmem [shape: f32[1,2,256], index: 4, kind: output, shape index: {1}]
  %5 = xla_tuple %s3, %s4
  %s6 = sld [smem:[#allocation0]]
  $region53: #{conv_upsampling.2} parent=0
    _
  %s8 = ssub.s32 1, %s6
  %s9 = scalar_select 0, %s8, %s6
  loop: start=0, step=1, limit=4
  $region2: #{conv_upsampling.2} parent=0 // loop_pre_header
    _
  $region3: #{conv_upsampling.2} parent=0 // loop_header
    %s11 = sphi 0, %s15
    %p12 = scmp.ge.s32.totalorder %s11, 4
    %s18 = sphi 0, %s30
    %s19 = sphi 0, %s26
    %s20 = sphi 0, %s18
    %s21 = sphi 0, %s19
    %s22 = sphi 0, %s20
    %s23 = sphi 0, %s21
    %s33 = sphi 0, %s35
    %s36 = sphi 0, %s33
    %s37 = sphi 0, %s36
    %s53 = sphi 0, %s37
    %s57 = sphi 0, %s57
    %s59 = sphi 0, %s57
    %s60 = sphi 0, %s59
    %s74 = sphi 0, %s60
    %s80 = sphi 0, %s82
    %s83 = sphi 0, %s80
    %s84 = sphi 0, %s83
    %s100 = sphi 0, %s84
    %s108 = sphi 0, %s110
    %s111 = sphi 0, %s108
    %s112 = sphi 0, %s111
    %s128 = sphi 0, %s112
    %s136 = sphi 0, %s138
    %s139 = sphi 0, %s136
    %s140 = sphi 0, %s139
    %s156 = sphi 0, %s140
  $region4: #{conv_upsampling.2} parent=0 // loop_header_branch
    %14 = sbr.rel (%p12) target = $region8
  $region5: #{conv_upsampling.2} parent=0 // loop_body
    %s16 = ssub.s32 %s11, 1
    %s17 = ssub.s32 %s11, 2
    %s24 = sadd.s32 1, %s19
    %p25 = scmp.ge.s32.totalorder %s24, 2
    %s26 = scalar_select %p25, 0, %s24
    %s27 = sadd.s32 1, %s18
    %s28 = scalar_select %p25, %s27, %s18
    %p29 = scmp.ge.s32.totalorder %s28, 1
    %s30 = scalar_select %p29, 0, %s28
    %s31 = ssub.s32 %s18, %s30
    %p32 = scmp.eq.s32.totalorder %s31, 0
    %s34 = sadd.s32 %s33, 1
    %s35 = scalar_select %p32, %s33, %s34
    %p38 = pneg %p32
    %p39 = scmp.eq.s32.totalorder %s11, 1
    %p40 = por %p38, %p39
    %p41 = scmp.ne.s32.totalorder %s33, %s36
    %p42 = scmp.eq.s32.totalorder %s11, 0
    %p43 = por %p41, %p42
    %p44 = scmp.ne.s32.totalorder %s33, %s36
    %p45 = scmp.eq.s32.totalorder %s16, 1
    %p46 = por %p44, %p45
    %p47 = scmp.ne.s32.totalorder %s36, %s37
    %p48 = scmp.eq.s32.totalorder %s16, 0
    %p49 = por %p47, %p48
    %p50 = scmp.ne.s32.totalorder %s36, %s37
    %p51 = scmp.eq.s32.totalorder %s17, 1
    %p52 = por %p50, %p51
    %p54 = scmp.ne.s32.totalorder %s37, %s53
    %p55 = scmp.eq.s32.totalorder %s17, 0
    %p56 = por %p54, %p55
    %s58 = sadd.s32 %s57, 1
    %p61 = scmp.eq.s32.totalorder %s11, 1
    %p62 = scmp.ne.s32.totalorder %s57, %s59
    %p63 = scmp.eq.s32.totalorder %s11, 0
    %p64 = por %p62, %p63
    %p65 = scmp.ne.s32.totalorder %s57, %s59
    %p66 = scmp.eq.s32.totalorder %s16, 1
    %p67 = por %p65, %p66
    %p68 = scmp.ne.s32.totalorder %s59, %s60
    %p69 = scmp.eq.s32.totalorder %s16, 0
    %p70 = por %p68, %p69
    %p71 = scmp.ne.s32.totalorder %s59, %s60
    %p72 = scmp.eq.s32.totalorder %s17, 1
    %p73 = por %p71, %p72
    %p75 = scmp.ne.s32.totalorder %s60, %s74
    %p76 = scmp.eq.s32.totalorder %s17, 0
    %p77 = por %p75, %p76
    %s78 = ssub.s32 %s19, %s26
    %p79 = scmp.eq.s32.totalorder %s78, 0
    %s81 = sadd.s32 %s80, 1
    %s82 = scalar_select %p79, %s80, %s81
    %p85 = pneg %p79
    %p86 = scmp.eq.s32.totalorder %s11, 1
    %p87 = por %p85, %p86
    %p88 = scmp.ne.s32.totalorder %s80, %s83
    %p89 = scmp.eq.s32.totalorder %s11, 0
    %p90 = por %p88, %p89
    %p91 = scmp.ne.s32.totalorder %s80, %s83
    %p92 = scmp.eq.s32.totalorder %s16, 1
    %p93 = por %p91, %p92
    %p94 = scmp.ne.s32.totalorder %s83, %s84
    %p95 = scmp.eq.s32.totalorder %s16, 0
    %p96 = por %p94, %p95
    %p97 = scmp.ne.s32.totalorder %s83, %s84
    %p98 = scmp.eq.s32.totalorder %s17, 1
    %p99 = por %p97, %p98
    %p101 = scmp.ne.s32.totalorder %s84, %s100
    %p102 = scmp.eq.s32.totalorder %s17, 0
    %p103 = por %p101, %p102
    %s104 = ssub.s32 %s19, %s26
    %s105 = ssub.s32 %s18, %s30
    %s106 = sor.u32 %s104, %s105
    %p107 = scmp.eq.s32.totalorder %s106, 0
    %s109 = sadd.s32 %s108, 1
    %s110 = scalar_select %p107, %s108, %s109
    %p113 = pneg %p107
    %p114 = scmp.eq.s32.totalorder %s11, 1
    %p115 = por %p113, %p114
    %p116 = scmp.ne.s32.totalorder %s108, %s111
    %p117 = scmp.eq.s32.totalorder %s11, 0
    %p118 = por %p116, %p117
    %p119 = scmp.ne.s32.totalorder %s108, %s111
    %p120 = scmp.eq.s32.totalorder %s16, 1
    %p121 = por %p119, %p120
    %p122 = scmp.ne.s32.totalorder %s111, %s112
    %p123 = scmp.eq.s32.totalorder %s16, 0
    %p124 = por %p122, %p123
    %p125 = scmp.ne.s32.totalorder %s111, %s112
    %p126 = scmp.eq.s32.totalorder %s17, 1
    %p127 = por %p125, %p126
    %p129 = scmp.ne.s32.totalorder %s112, %s128
    %p130 = scmp.eq.s32.totalorder %s17, 0
    %p131 = por %p129, %p130
    %s132 = ssub.s32 %s18, %s30
    %s133 = ssub.s32 %s19, %s26
    %s134 = sor.u32 %s132, %s133
    %p135 = scmp.eq.s32.totalorder %s134, 0
    %s137 = sadd.s32 %s136, 1
    %s138 = scalar_select %p135, %s136, %s137
    %p141 = pneg %p135
    %p142 = scmp.eq.s32.totalorder %s11, 1
    %p143 = por %p141, %p142
    %p144 = scmp.ne.s32.totalorder %s136, %s139
    %p145 = scmp.eq.s32.totalorder %s11, 0
    %p146 = por %p144, %p145
    %p147 = scmp.ne.s32.totalorder %s136, %s139
    %p148 = scmp.eq.s32.totalorder %s16, 1
    %p149 = por %p147, %p148
    %p150 = scmp.ne.s32.totalorder %s139, %s140
    %p151 = scmp.eq.s32.totalorder %s16, 0
    %p152 = por %p150, %p151
    %p153 = scmp.ne.s32.totalorder %s139, %s140
    %p154 = scmp.eq.s32.totalorder %s17, 1
    %p155 = por %p153, %p154
    %p157 = scmp.ne.s32.totalorder %s140, %s156
    %p158 = scmp.eq.s32.totalorder %s17, 0
    %p159 = por %p157, %p158
    %p160 = scmp.le.s32.totalorder 1, %s11
    %p161 = scmp.lt.s32.totalorder %s11, 3
    %p162 = pnand %p160, %p161
    %p163 = pneg %p162
    // Predicated region
    $region9: #{conv_upsampling.2} parent=5 // pred_check
      _
    $region10: #{conv_upsampling.2} parent=5 // pred_check_branch
      %165 = sbr.rel (%p162) target = $region12
    $region11: #{conv_upsampling.2} parent=5 // pred_region
      %s166 = ssub.s32 %s11, 1
      // Predicated region
      $region13: #{conv_upsampling.2} parent=11 // pred_check
        %p167 = pneg %p49
      $region14: #{conv_upsampling.2} parent=11 // pred_check_branch
        %169 = sbr.rel (%p167) target = $region16
      $region15: #{conv_upsampling.2} parent=11 // pred_region
        %s170 = smul.u32 4, %s20
        %p171 = scmp.lt.s32.totalorder %s170, 3
        %s172 = scalar_select %p171, %s170, 3
        %s173 = smul.addr %s172, 8
        %s174 = smul.addr %s173, 8
        %s175 = scalar_lea.vmem %s0, %s174
        %s176 = smul.u32 4, %s20
      $region16: #{conv_upsampling.2} parent=11 // pred_fallthru
        _
      // Predicated region
      $region17: #{conv_upsampling.2} parent=11 // pred_check
        %p177 = pneg %p70
      $region18: #{conv_upsampling.2} parent=11 // pred_check_branch
        %179 = sbr.rel (%p177) target = $region20
      $region19: #{conv_upsampling.2} parent=11 // pred_region
        _
      $region20: #{conv_upsampling.2} parent=11 // pred_fallthru
        _
    $region12: #{conv_upsampling.2} parent=5 // pred_fallthru
      _
    %p180 = scmp.lt.s32.totalorder %s11, 2
    // Predicated region
    $region21: #{conv_upsampling.2} parent=5 // pred_check
      %p181 = pneg %p180
    $region22: #{conv_upsampling.2} parent=5 // pred_check_branch
      %183 = sbr.rel (%p181) target = $region24
    $region23: #{conv_upsampling.2} parent=5 // pred_region
      // Predicated region
      $region25: #{conv_upsampling.2} parent=23 // pred_check
        %p184 = pneg %p90
      $region26: #{conv_upsampling.2} parent=23 // pred_check_branch
        %186 = sbr.rel (%p184) target = $region28
      $region27: #{conv_upsampling.2} parent=23 // pred_region
        %s187 = smul.u32 16, %s19
        %p188 = scmp.lt.s32.totalorder %s187, 31
        %s189 = scalar_select %p188, %s187, 31
        %s190 = smul.addr %s189, 2
        %s191 = smul.addr %s190, 8
        %s192 = scalar_lea.vmem %s2, %s191
        %s193 = smul.u32 16, %s19
      $region28: #{conv_upsampling.2} parent=23 // pred_fallthru
        _
    $region24: #{conv_upsampling.2} parent=5 // pred_fallthru
      _
    %p194 = scmp.le.s32.totalorder 1, %s11
    %p195 = scmp.lt.s32.totalorder %s11, 3
    %p196 = pnand %p194, %p195
    %p197 = pneg %p196
    // Predicated region
    $region29: #{conv_upsampling.2} parent=5 // pred_check
      _
    $region30: #{conv_upsampling.2} parent=5 // pred_check_branch
      %199 = sbr.rel (%p196) target = $region32
    $region31: #{conv_upsampling.2} parent=5 // pred_region
      %s200 = ssub.s32 %s11, 1
      %s201 = smul.u32 4, %s20
      %p202 = scmp.lt.s32.totalorder %s201, 3
      %s203 = scalar_select %p202, %s201, 3
      %s204 = smul.addr %s203, 8
      %s205 = smul.addr %s204, 8
      %s206 = scalar_lea.vmem %s0, %s205
      %p207 = pneg %p49
      %p208 = pneg %p46
      %p209 = pneg %p70
      %p210 = pneg %p67
      %s211 = smul.u32 16, %s21
      %p212 = scmp.lt.s32.totalorder %s211, 31
      %s213 = scalar_select %p212, %s211, 31
      %s214 = smul.addr %s213, 2
      %s215 = smul.addr %s214, 8
      %s216 = scalar_lea.vmem %s2, %s215
      %p217 = pneg %p96
      %p218 = pneg %p93
      %p219 = pneg %p124
      %p220 = pneg %p121
      %s221 = smul.u32 16, %s21
      %p222 = scmp.lt.s32.totalorder %s221, 31
      %s223 = scalar_select %p222, %s221, 31
      %p224 = scmp.lt.s32.totalorder %s20, 0
      %s225 = scalar_select %p224, %s20, 0
      %s226 = sadd.s32 %s225, %s223
      %s227 = smul.addr %s226, 8
      %s228 = scalar_lea.vmem %s3, %s227
      %p229 = pneg %p152
      %p230 = pneg %p149
      %p231 = scmp.lt.s32.totalorder %s20, 0
      %s232 = scalar_select %p231, %s20, 0
      %p233 = scmp.lt.s32.totalorder %s21, 1
      %s234 = scalar_select %p233, %s21, 1
      %s235 = smul.addr %s232, 2
      %s236 = sadd.s32 %s234, %s235
      %s237 = smul.addr %s236, 2
      %s238 = scalar_lea.vmem %s4, %s237
      %s239 = smul.u32 4, %s20
      %p240 = scmp.lt.s32.totalorder %s239, 3
      %s241 = scalar_select %p240, %s239, 3
      %s242 = smul.addr %s241, 8
      %s243 = smul.addr %s242, 8
      %s244 = scalar_lea.vmem %s0, %s243
      %s245 = smul.u32 4, %s20
      %s246 = smul.u32 16, %s21
      %p247 = scmp.lt.s32.totalorder %s246, 31
      %s248 = scalar_select %p247, %s246, 31
      %s249 = smul.addr %s248, 2
      %s250 = smul.addr %s249, 8
      %s251 = scalar_lea.vmem %s2, %s250
      %s252 = smul.u32 16, %s21
      %s253 = smul.u32 16, %s21
      %p254 = scmp.lt.s32.totalorder %s253, 31
      %s255 = scalar_select %p254, %s253, 31
      %p256 = scmp.lt.s32.totalorder %s20, 0
      %s257 = scalar_select %p256, %s20, 0
      %s258 = sadd.s32 %s257, %s255
      %s259 = smul.addr %s258, 8
      %s260 = scalar_lea.vmem %s3, %s259
      %s261 = smul.u32 16, %s21
      %p262 = scmp.lt.s32.totalorder %s20, 0
      %s263 = scalar_select %p262, %s20, 0
      %p264 = scmp.lt.s32.totalorder %s21, 1
      %s265 = scalar_select %p264, %s21, 1
      %s266 = smul.addr %s263, 2
      %s267 = sadd.s32 %s265, %s266
      %s268 = smul.addr %s267, 2
      %s269 = scalar_lea.vmem %s4, %s268
      %v270 = vld [vmem:[%s244] sm:$0xff]
      %v271 = vld [vmem:[%s244 + $0x8] sm:$0xff]
      %v272 = vld [vmem:[%s244 + $0x10] sm:$0xff]
      %v273 = vld [vmem:[%s244 + $0x18] sm:$0xff]
      %v274 = vld [vmem:[%s244 + $0x20] sm:$0xff]
      %v275 = vld [vmem:[%s244 + $0x28] sm:$0xff]
      %v276 = vld [vmem:[%s244 + $0x30] sm:$0xff]
      %v277 = vld [vmem:[%s244 + $0x38] sm:$0xff]
      %v278 = vld [vmem:[%s1] sm:$0xff]
      %v279 = vld [vmem:[%s1 + $0x8] sm:$0xff]
      %vm280 = vcmask 130048
      %v282 = vsel %vm280, %v270, 0
      %v285 = vsel %vm280, %v271, 0
      %v288 = vsel %vm280, %v272, 0
      %v291 = vsel %vm280, %v273, 0
      %v294 = vsel %vm280, %v274, 0
      %v297 = vsel %vm280, %v275, 0
      %v300 = vsel %vm280, %v276, 0
      %v303 = vsel %vm280, %v277, 0
      %305 = vmatpush.msra.mxu0 0.0
      %306 = vmatpush.msra.mxu0 0.0
      %307 = vmatpush.msra.mxu0 0.0
      %308 = vmatpush.msra.mxu0 0.0
      %309 = vmatpush.msra.mxu0 0.0
      %310 = vmatpush.msra.mxu0 0.0
      %311 = vmatpush.msra.mxu0 0.0
      %312 = vmatpush.msra.mxu0 0.0
      %313 = vmatpush.msra.mxu0 0.0
      %314 = vmatpush.msra.mxu0 0.0
      %315 = vmatpush.msra.mxu0 0.0
      %316 = vmatpush.msra.mxu0 0.0
      %317 = vmatpush.msra.mxu0 0.0
      %318 = vmatpush.msra.mxu0 0.0
      %319 = vmatpush.msra.mxu0 %v279
      %320 = vmatpush.msra.mxu0 %v278
      %321 = vmatmul.f32.gmra.mxu0 %v282
      %v322 = vpop.f32.mrf.mxu0
      %v323 = vadd.f32 0.0, %v322
      %324 = vmatmul.f32.gmra.mxu0 %v285
      %v325 = vpop.f32.mrf.mxu0
      %v326 = vadd.f32 0.0, %v325
      %327 = vmatmul.f32.gmra.mxu0 %v288
      %v328 = vpop.f32.mrf.mxu0
      %v329 = vadd.f32 0.0, %v328
      %330 = vmatmul.f32.gmra.mxu0 %v291
      %v331 = vpop.f32.mrf.mxu0
      %v332 = vadd.f32 0.0, %v331
      %333 = vmatmul.f32.gmra.mxu0 %v294
      %v334 = vpop.f32.mrf.mxu0
      %v335 = vadd.f32 0.0, %v334
      %336 = vmatmul.f32.gmra.mxu0 %v297
      %v337 = vpop.f32.mrf.mxu0
      %v338 = vadd.f32 0.0, %v337
      %339 = vmatmul.f32.gmra.mxu0 %v300
      %v340 = vpop.f32.mrf.mxu0
      %v341 = vadd.f32 0.0, %v340
      %342 = vmatmul.f32.gmra.mxu0 %v303
      %v343 = vpop.f32.mrf.mxu0
      %v344 = vadd.f32 0.0, %v343
      %345 = vdwg.mxu0
      %vm346 = vcmask 261120
      %347 = vst.msk [vmem:[#allocation2] sm:$0xff] %vm346, %v323
      %348 = vst.msk [vmem:[#allocation2 + $0x8] sm:$0xff] %vm346, %v326
      %349 = vst.msk [vmem:[#allocation2 + $0x10] sm:$0xff] %vm346, %v329
      %350 = vst.msk [vmem:[#allocation2 + $0x18] sm:$0xff] %vm346, %v332
      %351 = vst.msk [vmem:[#allocation2 + $0x20] sm:$0xff] %vm346, %v335
      %352 = vst.msk [vmem:[#allocation2 + $0x28] sm:$0xff] %vm346, %v338
      %353 = vst.msk [vmem:[#allocation2 + $0x30] sm:$0xff] %vm346, %v341
      %354 = vst.msk [vmem:[#allocation2 + $0x38] sm:$0xff] %vm346, %v344
      %s355 = scalar_lea.vmem %s1, 16
      %v356 = vld [vmem:[%s355] sm:$0xff]
      %v357 = vld [vmem:[%s355 + $0x8] sm:$0xff]
      %358 = vmatpush.msra.mxu0 0.0
      %359 = vmatpush.msra.mxu0 0.0
      %360 = vmatpush.msra.mxu0 0.0
      %361 = vmatpush.msra.mxu0 0.0
      %362 = vmatpush.msra.mxu0 0.0
      %363 = vmatpush.msra.mxu0 0.0
      %364 = vmatpush.msra.mxu0 0.0
      %365 = vmatpush.msra.mxu0 0.0
      %366 = vmatpush.msra.mxu0 0.0
      %367 = vmatpush.msra.mxu0 0.0
      %368 = vmatpush.msra.mxu0 0.0
      %369 = vmatpush.msra.mxu0 0.0
      %370 = vmatpush.msra.mxu0 0.0
      %371 = vmatpush.msra.mxu0 0.0
      %372 = vmatpush.msra.mxu0 %v357
      %373 = vmatpush.msra.mxu0 %v356
      %374 = vmatmul.f32.gmra.mxu0 %v282
      %v375 = vpop.f32.mrf.mxu0
      %v376 = vadd.f32 0.0, %v375
      %377 = vmatmul.f32.gmra.mxu0 %v285
      %v378 = vpop.f32.mrf.mxu0
      %v379 = vadd.f32 0.0, %v378
      %380 = vmatmul.f32.gmra.mxu0 %v288
      %v381 = vpop.f32.mrf.mxu0
      %v382 = vadd.f32 0.0, %v381
      %383 = vmatmul.f32.gmra.mxu0 %v291
      %v384 = vpop.f32.mrf.mxu0
      %v385 = vadd.f32 0.0, %v384
      %386 = vmatmul.f32.gmra.mxu0 %v294
      %v387 = vpop.f32.mrf.mxu0
      %v388 = vadd.f32 0.0, %v387
      %389 = vmatmul.f32.gmra.mxu0 %v297
      %v390 = vpop.f32.mrf.mxu0
      %v391 = vadd.f32 0.0, %v390
      %392 = vmatmul.f32.gmra.mxu0 %v300
      %v393 = vpop.f32.mrf.mxu0
      %v394 = vadd.f32 0.0, %v393
      %395 = vmatmul.f32.gmra.mxu0 %v303
      %v396 = vpop.f32.mrf.mxu0
      %v397 = vadd.f32 0.0, %v396
      %398 = vdwg.mxu0
      %399 = vst.msk [vmem:[#allocation2 + $0x40] sm:$0xff] %vm346, %v376
      %400 = vst.msk [vmem:[#allocation2 + $0x48] sm:$0xff] %vm346, %v379
      %401 = vst.msk [vmem:[#allocation2 + $0x50] sm:$0xff] %vm346, %v382
      %402 = vst.msk [vmem:[#allocation2 + $0x58] sm:$0xff] %vm346, %v385
      %403 = vst.msk [vmem:[#allocation2 + $0x60] sm:$0xff] %vm346, %v388
      %404 = vst.msk [vmem:[#allocation2 + $0x68] sm:$0xff] %vm346, %v391
      %405 = vst.msk [vmem:[#allocation2 + $0x70] sm:$0xff] %vm346, %v394
      %406 = vst.msk [vmem:[#allocation2 + $0x78] sm:$0xff] %vm346, %v397
      %s407 = scalar_lea.vmem %s1, 32
      %v408 = vld [vmem:[%s407] sm:$0xff]
      %v409 = vld [vmem:[%s407 + $0x8] sm:$0xff]
      %410 = vmatpush.msra.mxu0 0.0
      %411 = vmatpush.msra.mxu0 0.0
      %412 = vmatpush.msra.mxu0 0.0
      %413 = vmatpush.msra.mxu0 0.0
      %414 = vmatpush.msra.mxu0 0.0
      %415 = vmatpush.msra.mxu0 0.0
      %416 = vmatpush.msra.mxu0 0.0
      %417 = vmatpush.msra.mxu0 0.0
      %418 = vmatpush.msra.mxu0 0.0
      %419 = vmatpush.msra.mxu0 0.0
      %420 = vmatpush.msra.mxu0 0.0
      %421 = vmatpush.msra.mxu0 0.0
      %422 = vmatpush.msra.mxu0 0.0
      %423 = vmatpush.msra.mxu0 0.0
      %424 = vmatpush.msra.mxu0 %v409
      %425 = vmatpush.msra.mxu0 %v408
      %426 = vmatmul.f32.gmra.mxu0 %v282
      %v427 = vpop.f32.mrf.mxu0
      %v428 = vadd.f32 0.0, %v427
      %429 = vmatmul.f32.gmra.mxu0 %v285
      %v430 = vpop.f32.mrf.mxu0
      %v431 = vadd.f32 0.0, %v430
      %432 = vmatmul.f32.gmra.mxu0 %v288
      %v433 = vpop.f32.mrf.mxu0
      %v434 = vadd.f32 0.0, %v433
      %435 = vmatmul.f32.gmra.mxu0 %v291
      %v436 = vpop.f32.mrf.mxu0
      %v437 = vadd.f32 0.0, %v436
      %438 = vmatmul.f32.gmra.mxu0 %v294
      %v439 = vpop.f32.mrf.mxu0
      %v440 = vadd.f32 0.0, %v439
      %441 = vmatmul.f32.gmra.mxu0 %v297
      %v442 = vpop.f32.mrf.mxu0
      %v443 = vadd.f32 0.0, %v442
      %444 = vmatmul.f32.gmra.mxu0 %v300
      %v445 = vpop.f32.mrf.mxu0
      %v446 = vadd.f32 0.0, %v445
      %447 = vmatmul.f32.gmra.mxu0 %v303
      %v448 = vpop.f32.mrf.mxu0
      %v449 = vadd.f32 0.0, %v448
      %450 = vdwg.mxu0
      %451 = vst.msk [vmem:[#allocation2 + $0x80] sm:$0xff] %vm346, %v428
      %452 = vst.msk [vmem:[#allocation2 + $0x88] sm:$0xff] %vm346, %v431
      %453 = vst.msk [vmem:[#allocation2 + $0x90] sm:$0xff] %vm346, %v434
      %454 = vst.msk [vmem:[#allocation2 + $0x98] sm:$0xff] %vm346, %v437
      %455 = vst.msk [vmem:[#allocation2 + $0xa0] sm:$0xff] %vm346, %v440
      %456 = vst.msk [vmem:[#allocation2 + $0xa8] sm:$0xff] %vm346, %v443
      %457 = vst.msk [vmem:[#allocation2 + $0xb0] sm:$0xff] %vm346, %v446
      %458 = vst.msk [vmem:[#allocation2 + $0xb8] sm:$0xff] %vm346, %v449
      %s459 = scalar_lea.vmem %s1, 48
      %v460 = vld [vmem:[%s459] sm:$0xff]
      %v461 = vld [vmem:[%s459 + $0x8] sm:$0xff]
      %462 = vmatpush.msra.mxu0 0.0
      %463 = vmatpush.msra.mxu0 0.0
      %464 = vmatpush.msra.mxu0 0.0
      %465 = vmatpush.msra.mxu0 0.0
      %466 = vmatpush.msra.mxu0 0.0
      %467 = vmatpush.msra.mxu0 0.0
      %468 = vmatpush.msra.mxu0 0.0
      %469 = vmatpush.msra.mxu0 0.0
      %470 = vmatpush.msra.mxu0 0.0
      %471 = vmatpush.msra.mxu0 0.0
      %472 = vmatpush.msra.mxu0 0.0
      %473 = vmatpush.msra.mxu0 0.0
      %474 = vmatpush.msra.mxu0 0.0
      %475 = vmatpush.msra.mxu0 0.0
      %476 = vmatpush.msra.mxu0 %v461
      %477 = vmatpush.msra.mxu0 %v460
      %478 = vmatmul.f32.gmra.mxu0 %v282
      %v479 = vpop.f32.mrf.mxu0
      %v480 = vadd.f32 0.0, %v479
      %481 = vmatmul.f32.gmra.mxu0 %v285
      %v482 = vpop.f32.mrf.mxu0
      %v483 = vadd.f32 0.0, %v482
      %484 = vmatmul.f32.gmra.mxu0 %v288
      %v485 = vpop.f32.mrf.mxu0
      %v486 = vadd.f32 0.0, %v485
      %487 = vmatmul.f32.gmra.mxu0 %v291
      %v488 = vpop.f32.mrf.mxu0
      %v489 = vadd.f32 0.0, %v488
      %490 = vmatmul.f32.gmra.mxu0 %v294
      %v491 = vpop.f32.mrf.mxu0
      %v492 = vadd.f32 0.0, %v491
      %493 = vmatmul.f32.gmra.mxu0 %v297
      %v494 = vpop.f32.mrf.mxu0
      %v495 = vadd.f32 0.0, %v494
      %496 = vmatmul.f32.gmra.mxu0 %v300
      %v497 = vpop.f32.mrf.mxu0
      %v498 = vadd.f32 0.0, %v497
      %499 = vmatmul.f32.gmra.mxu0 %v303
      %v500 = vpop.f32.mrf.mxu0
      %v501 = vadd.f32 0.0, %v500
      %502 = vdwg.mxu0
      %503 = vst.msk [vmem:[#allocation2 + $0xc0] sm:$0xff] %vm346, %v480
      %504 = vst.msk [vmem:[#allocation2 + $0xc8] sm:$0xff] %vm346, %v483
      %505 = vst.msk [vmem:[#allocation2 + $0xd0] sm:$0xff] %vm346, %v486
      %506 = vst.msk [vmem:[#allocation2 + $0xd8] sm:$0xff] %vm346, %v489
      %507 = vst.msk [vmem:[#allocation2 + $0xe0] sm:$0xff] %vm346, %v492
      %508 = vst.msk [vmem:[#allocation2 + $0xe8] sm:$0xff] %vm346, %v495
      %509 = vst.msk [vmem:[#allocation2 + $0xf0] sm:$0xff] %vm346, %v498
      %510 = vst.msk [vmem:[#allocation2 + $0xf8] sm:$0xff] %vm346, %v501
      %s511 = scalar_lea.vmem %s244, 64
      %v512 = vld [vmem:[%s511] sm:$0xff]
      %v513 = vld [vmem:[%s511 + $0x8] sm:$0xff]
      %v514 = vld [vmem:[%s511 + $0x10] sm:$0xff]
      %v515 = vld [vmem:[%s511 + $0x18] sm:$0xff]
      %v516 = vld [vmem:[%s511 + $0x20] sm:$0xff]
      %v517 = vld [vmem:[%s511 + $0x28] sm:$0xff]
      %v518 = vld [vmem:[%s511 + $0x30] sm:$0xff]
      %v519 = vld [vmem:[%s511 + $0x38] sm:$0xff]
      %v520 = vld [vmem:[%s1] sm:$0xff]
      %v521 = vld [vmem:[%s1 + $0x8] sm:$0xff]
      %v523 = vsel %vm280, %v512, 0
      %v526 = vsel %vm280, %v513, 0
      %v529 = vsel %vm280, %v514, 0
      %v532 = vsel %vm280, %v515, 0
      %v535 = vsel %vm280, %v516, 0
      %v538 = vsel %vm280, %v517, 0
      %v541 = vsel %vm280, %v518, 0
      %v544 = vsel %vm280, %v519, 0
      %546 = vmatpush.msra.mxu0 0.0
      %547 = vmatpush.msra.mxu0 0.0
      %548 = vmatpush.msra.mxu0 0.0
      %549 = vmatpush.msra.mxu0 0.0
      %550 = vmatpush.msra.mxu0 0.0
      %551 = vmatpush.msra.mxu0 0.0
      %552 = vmatpush.msra.mxu0 0.0
      %553 = vmatpush.msra.mxu0 0.0
      %554 = vmatpush.msra.mxu0 0.0
      %555 = vmatpush.msra.mxu0 0.0
      %556 = vmatpush.msra.mxu0 0.0
      %557 = vmatpush.msra.mxu0 0.0
      %558 = vmatpush.msra.mxu0 0.0
      %559 = vmatpush.msra.mxu0 0.0
      %560 = vmatpush.msra.mxu0 %v521
      %561 = vmatpush.msra.mxu0 %v520
      %562 = vmatmul.f32.gmra.mxu0 %v523
      %v563 = vpop.f32.mrf.mxu0
      %v564 = vadd.f32 0.0, %v563
      %565 = vmatmul.f32.gmra.mxu0 %v526
      %v566 = vpop.f32.mrf.mxu0
      %v567 = vadd.f32 0.0, %v566
      %568 = vmatmul.f32.gmra.mxu0 %v529
      %v569 = vpop.f32.mrf.mxu0
      %v570 = vadd.f32 0.0, %v569
      %571 = vmatmul.f32.gmra.mxu0 %v532
      %v572 = vpop.f32.mrf.mxu0
      %v573 = vadd.f32 0.0, %v572
      %574 = vmatmul.f32.gmra.mxu0 %v535
      %v575 = vpop.f32.mrf.mxu0
      %v576 = vadd.f32 0.0, %v575
      %577 = vmatmul.f32.gmra.mxu0 %v538
      %v578 = vpop.f32.mrf.mxu0
      %v579 = vadd.f32 0.0, %v578
      %580 = vmatmul.f32.gmra.mxu0 %v541
      %v581 = vpop.f32.mrf.mxu0
      %v582 = vadd.f32 0.0, %v581
      %583 = vmatmul.f32.gmra.mxu0 %v544
      %v584 = vpop.f32.mrf.mxu0
      %v585 = vadd.f32 0.0, %v584
      %586 = vdwg.mxu0
      %595 = vrot.lane.b32.xlu0 %v564, 32
      %v596 = vpop.permute.xlu0 %595
      %597 = vrot.lane.b32.xlu0 %v567, 32
      %v598 = vpop.permute.xlu0 %597
      %599 = vrot.lane.b32.xlu0 %v570, 32
      %v600 = vpop.permute.xlu0 %599
      %601 = vrot.lane.b32.xlu0 %v573, 32
      %v602 = vpop.permute.xlu0 %601
      %603 = vrot.lane.b32.xlu0 %v576, 32
      %v604 = vpop.permute.xlu0 %603
      %605 = vrot.lane.b32.xlu0 %v579, 32
      %v606 = vpop.permute.xlu0 %605
      %607 = vrot.lane.b32.xlu0 %v582, 32
      %v608 = vpop.permute.xlu0 %607
      %609 = vrot.lane.b32.xlu0 %v585, 32
      %v610 = vpop.permute.xlu0 %609
      %vm619 = vcmask 523520
      %620 = vst.msk [vmem:[#allocation2] sm:$0xff] %vm619, %v596
      %621 = vst.msk [vmem:[#allocation2 + $0x8] sm:$0xff] %vm619, %v598
      %622 = vst.msk [vmem:[#allocation2 + $0x10] sm:$0xff] %vm619, %v600
      %623 = vst.msk [vmem:[#allocation2 + $0x18] sm:$0xff] %vm619, %v602
      %624 = vst.msk [vmem:[#allocation2 + $0x20] sm:$0xff] %vm619, %v604
      %625 = vst.msk [vmem:[#allocation2 + $0x28] sm:$0xff] %vm619, %v606
      %626 = vst.msk [vmem:[#allocation2 + $0x30] sm:$0xff] %vm619, %v608
      %627 = vst.msk [vmem:[#allocation2 + $0x38] sm:$0xff] %vm619, %v610
      %v628 = vld [vmem:[%s355] sm:$0xff]
      %v629 = vld [vmem:[%s355 + $0x8] sm:$0xff]
      %630 = vmatpush.msra.mxu0 0.0
      %631 = vmatpush.msra.mxu0 0.0
      %632 = vmatpush.msra.mxu0 0.0
      %633 = vmatpush.msra.mxu0 0.0
      %634 = vmatpush.msra.mxu0 0.0
      %635 = vmatpush.msra.mxu0 0.0
      %636 = vmatpush.msra.mxu0 0.0
      %637 = vmatpush.msra.mxu0 0.0
      %638 = vmatpush.msra.mxu0 0.0
      %639 = vmatpush.msra.mxu0 0.0
      %640 = vmatpush.msra.mxu0 0.0
      %641 = vmatpush.msra.mxu0 0.0
      %642 = vmatpush.msra.mxu0 0.0
      %643 = vmatpush.msra.mxu0 0.0
      %644 = vmatpush.msra.mxu0 %v629
      %645 = vmatpush.msra.mxu0 %v628
      %646 = vmatmul.f32.gmra.mxu0 %v523
      %v647 = vpop.f32.mrf.mxu0
      %v648 = vadd.f32 0.0, %v647
      %649 = vmatmul.f32.gmra.mxu0 %v526
      %v650 = vpop.f32.mrf.mxu0
      %v651 = vadd.f32 0.0, %v650
      %652 = vmatmul.f32.gmra.mxu0 %v529
      %v653 = vpop.f32.mrf.mxu0
      %v654 = vadd.f32 0.0, %v653
      %655 = vmatmul.f32.gmra.mxu0 %v532
      %v656 = vpop.f32.mrf.mxu0
      %v657 = vadd.f32 0.0, %v656
      %658 = vmatmul.f32.gmra.mxu0 %v535
      %v659 = vpop.f32.mrf.mxu0
      %v660 = vadd.f32 0.0, %v659
      %661 = vmatmul.f32.gmra.mxu0 %v538
      %v662 = vpop.f32.mrf.mxu0
      %v663 = vadd.f32 0.0, %v662
      %664 = vmatmul.f32.gmra.mxu0 %v541
      %v665 = vpop.f32.mrf.mxu0
      %v666 = vadd.f32 0.0, %v665
      %667 = vmatmul.f32.gmra.mxu0 %v544
      %v668 = vpop.f32.mrf.mxu0
      %v669 = vadd.f32 0.0, %v668
      %670 = vdwg.mxu0
      %679 = vrot.lane.b32.xlu0 %v648, 32
      %v680 = vpop.permute.xlu0 %679
      %681 = vrot.lane.b32.xlu0 %v651, 32
      %v682 = vpop.permute.xlu0 %681
      %683 = vrot.lane.b32.xlu0 %v654, 32
      %v684 = vpop.permute.xlu0 %683
      %685 = vrot.lane.b32.xlu0 %v657, 32
      %v686 = vpop.permute.xlu0 %685
      %687 = vrot.lane.b32.xlu0 %v660, 32
      %v688 = vpop.permute.xlu0 %687
      %689 = vrot.lane.b32.xlu0 %v663, 32
      %v690 = vpop.permute.xlu0 %689
      %691 = vrot.lane.b32.xlu0 %v666, 32
      %v692 = vpop.permute.xlu0 %691
      %693 = vrot.lane.b32.xlu0 %v669, 32
      %v694 = vpop.permute.xlu0 %693
      %703 = vst.msk [vmem:[#allocation2 + $0x40] sm:$0xff] %vm619, %v680
      %704 = vst.msk [vmem:[#allocation2 + $0x48] sm:$0xff] %vm619, %v682
      %705 = vst.msk [vmem:[#allocation2 + $0x50] sm:$0xff] %vm619, %v684
      %706 = vst.msk [vmem:[#allocation2 + $0x58] sm:$0xff] %vm619, %v686
      %707 = vst.msk [vmem:[#allocation2 + $0x60] sm:$0xff] %vm619, %v688
      %708 = vst.msk [vmem:[#allocation2 + $0x68] sm:$0xff] %vm619, %v690
      %709 = vst.msk [vmem:[#allocation2 + $0x70] sm:$0xff] %vm619, %v692
      %710 = vst.msk [vmem:[#allocation2 + $0x78] sm:$0xff] %vm619, %v694
      %v711 = vld [vmem:[%s407] sm:$0xff]
      %v712 = vld [vmem:[%s407 + $0x8] sm:$0xff]
      %713 = vmatpush.msra.mxu0 0.0
      %714 = vmatpush.msra.mxu0 0.0
      %715 = vmatpush.msra.mxu0 0.0
      %716 = vmatpush.msra.mxu0 0.0
      %717 = vmatpush.msra.mxu0 0.0
      %718 = vmatpush.msra.mxu0 0.0
      %719 = vmatpush.msra.mxu0 0.0
      %720 = vmatpush.msra.mxu0 0.0
      %721 = vmatpush.msra.mxu0 0.0
      %722 = vmatpush.msra.mxu0 0.0
      %723 = vmatpush.msra.mxu0 0.0
      %724 = vmatpush.msra.mxu0 0.0
      %725 = vmatpush.msra.mxu0 0.0
      %726 = vmatpush.msra.mxu0 0.0
      %727 = vmatpush.msra.mxu0 %v712
      %728 = vmatpush.msra.mxu0 %v711
      %729 = vmatmul.f32.gmra.mxu0 %v523
      %v730 = vpop.f32.mrf.mxu0
      %v731 = vadd.f32 0.0, %v730
      %732 = vmatmul.f32.gmra.mxu0 %v526
      %v733 = vpop.f32.mrf.mxu0
      %v734 = vadd.f32 0.0, %v733
      %735 = vmatmul.f32.gmra.mxu0 %v529
      %v736 = vpop.f32.mrf.mxu0
      %v737 = vadd.f32 0.0, %v736
      %738 = vmatmul.f32.gmra.mxu0 %v532
      %v739 = vpop.f32.mrf.mxu0
      %v740 = vadd.f32 0.0, %v739
      %741 = vmatmul.f32.gmra.mxu0 %v535
      %v742 = vpop.f32.mrf.mxu0
      %v743 = vadd.f32 0.0, %v742
      %744 = vmatmul.f32.gmra.mxu0 %v538
      %v745 = vpop.f32.mrf.mxu0
      %v746 = vadd.f32 0.0, %v745
      %747 = vmatmul.f32.gmra.mxu0 %v541
      %v748 = vpop.f32.mrf.mxu0
      %v749 = vadd.f32 0.0, %v748
      %750 = vmatmul.f32.gmra.mxu0 %v544
      %v751 = vpop.f32.mrf.mxu0
      %v752 = vadd.f32 0.0, %v751
      %753 = vdwg.mxu0
      %762 = vrot.lane.b32.xlu0 %v731, 32
      %v763 = vpop.permute.xlu0 %762
      %764 = vrot.lane.b32.xlu0 %v734, 32
      %v765 = vpop.permute.xlu0 %764
      %766 = vrot.lane.b32.xlu0 %v737, 32
      %v767 = vpop.permute.xlu0 %766
      %768 = vrot.lane.b32.xlu0 %v740, 32
      %v769 = vpop.permute.xlu0 %768
      %770 = vrot.lane.b32.xlu0 %v743, 32
      %v771 = vpop.permute.xlu0 %770
      %772 = vrot.lane.b32.xlu0 %v746, 32
      %v773 = vpop.permute.xlu0 %772
      %774 = vrot.lane.b32.xlu0 %v749, 32
      %v775 = vpop.permute.xlu0 %774
      %776 = vrot.lane.b32.xlu0 %v752, 32
      %v777 = vpop.permute.xlu0 %776
      %786 = vst.msk [vmem:[#allocation2 + $0x80] sm:$0xff] %vm619, %v763
      %787 = vst.msk [vmem:[#allocation2 + $0x88] sm:$0xff] %vm619, %v765
      %788 = vst.msk [vmem:[#allocation2 + $0x90] sm:$0xff] %vm619, %v767
      %789 = vst.msk [vmem:[#allocation2 + $0x98] sm:$0xff] %vm619, %v769
      %790 = vst.msk [vmem:[#allocation2 + $0xa0] sm:$0xff] %vm619, %v771
      %791 = vst.msk [vmem:[#allocation2 + $0xa8] sm:$0xff] %vm619, %v773
      %792 = vst.msk [vmem:[#allocation2 + $0xb0] sm:$0xff] %vm619, %v775
      %793 = vst.msk [vmem:[#allocation2 + $0xb8] sm:$0xff] %vm619, %v777
      %v794 = vld [vmem:[%s459] sm:$0xff]
      %v795 = vld [vmem:[%s459 + $0x8] sm:$0xff]
      %796 = vmatpush.msra.mxu0 0.0
      %797 = vmatpush.msra.mxu0 0.0
      %798 = vmatpush.msra.mxu0 0.0
      %799 = vmatpush.msra.mxu0 0.0
      %800 = vmatpush.msra.mxu0 0.0
      %801 = vmatpush.msra.mxu0 0.0
      %802 = vmatpush.msra.mxu0 0.0
      %803 = vmatpush.msra.mxu0 0.0
      %804 = vmatpush.msra.mxu0 0.0
      %805 = vmatpush.msra.mxu0 0.0
      %806 = vmatpush.msra.mxu0 0.0
      %807 = vmatpush.msra.mxu0 0.0
      %808 = vmatpush.msra.mxu0 0.0
      %809 = vmatpush.msra.mxu0 0.0
      %810 = vmatpush.msra.mxu0 %v795
      %811 = vmatpush.msra.mxu0 %v794
      %812 = vmatmul.f32.gmra.mxu0 %v523
      %v813 = vpop.f32.mrf.mxu0
      %v814 = vadd.f32 0.0, %v813
      %815 = vmatmul.f32.gmra.mxu0 %v526
      %v816 = vpop.f32.mrf.mxu0
      %v817 = vadd.f32 0.0, %v816
      %818 = vmatmul.f32.gmra.mxu0 %v529
      %v819 = vpop.f32.mrf.mxu0
      %v820 = vadd.f32 0.0, %v819
      %821 = vmatmul.f32.gmra.mxu0 %v532
      %v822 = vpop.f32.mrf.mxu0
      %v823 = vadd.f32 0.0, %v822
      %824 = vmatmul.f32.gmra.mxu0 %v535
      %v825 = vpop.f32.mrf.mxu0
      %v826 = vadd.f32 0.0, %v825
      %827 = vmatmul.f32.gmra.mxu0 %v538
      %v828 = vpop.f32.mrf.mxu0
      %v829 = vadd.f32 0.0, %v828
      %830 = vmatmul.f32.gmra.mxu0 %v541
      %v831 = vpop.f32.mrf.mxu0
      %v832 = vadd.f32 0.0, %v831
      %833 = vmatmul.f32.gmra.mxu0 %v544
      %v834 = vpop.f32.mrf.mxu0
      %v835 = vadd.f32 0.0, %v834
      %836 = vdwg.mxu0
      %845 = vrot.lane.b32.xlu0 %v814, 32
      %v846 = vpop.permute.xlu0 %845
      %847 = vrot.lane.b32.xlu0 %v817, 32
      %v848 = vpop.permute.xlu0 %847
      %849 = vrot.lane.b32.xlu0 %v820, 32
      %v850 = vpop.permute.xlu0 %849
      %851 = vrot.lane.b32.xlu0 %v823, 32
      %v852 = vpop.permute.xlu0 %851
      %853 = vrot.lane.b32.xlu0 %v826, 32
      %v854 = vpop.permute.xlu0 %853
      %855 = vrot.lane.b32.xlu0 %v829, 32
      %v856 = vpop.permute.xlu0 %855
      %857 = vrot.lane.b32.xlu0 %v832, 32
      %v858 = vpop.permute.xlu0 %857
      %859 = vrot.lane.b32.xlu0 %v835, 32
      %v860 = vpop.permute.xlu0 %859
      %869 = vst.msk [vmem:[#allocation2 + $0xc0] sm:$0xff] %vm619, %v846
      %870 = vst.msk [vmem:[#allocation2 + $0xc8] sm:$0xff] %vm619, %v848
      %871 = vst.msk [vmem:[#allocation2 + $0xd0] sm:$0xff] %vm619, %v850
      %872 = vst.msk [vmem:[#allocation2 + $0xd8] sm:$0xff] %vm619, %v852
      %873 = vst.msk [vmem:[#allocation2 + $0xe0] sm:$0xff] %vm619, %v854
      %874 = vst.msk [vmem:[#allocation2 + $0xe8] sm:$0xff] %vm619, %v856
      %875 = vst.msk [vmem:[#allocation2 + $0xf0] sm:$0xff] %vm619, %v858
      %876 = vst.msk [vmem:[#allocation2 + $0xf8] sm:$0xff] %vm619, %v860
      %s877 = scalar_lea.vmem %s244, 128
      %v878 = vld [vmem:[%s877] sm:$0xff]
      %v879 = vld [vmem:[%s877 + $0x8] sm:$0xff]
      %v880 = vld [vmem:[%s877 + $0x10] sm:$0xff]
      %v881 = vld [vmem:[%s877 + $0x18] sm:$0xff]
      %v882 = vld [vmem:[%s877 + $0x20] sm:$0xff]
      %v883 = vld [vmem:[%s877 + $0x28] sm:$0xff]
      %v884 = vld [vmem:[%s877 + $0x30] sm:$0xff]
      %v885 = vld [vmem:[%s877 + $0x38] sm:$0xff]
      %v886 = vld [vmem:[%s1] sm:$0xff]
      %v887 = vld [vmem:[%s1 + $0x8] sm:$0xff]
      %v889 = vsel %vm280, %v878, 0
      %v892 = vsel %vm280, %v879, 0
      %v895 = vsel %vm280, %v880, 0
      %v898 = vsel %vm280, %v881, 0
      %v901 = vsel %vm280, %v882, 0
      %v904 = vsel %vm280, %v883, 0
      %v907 = vsel %vm280, %v884, 0
      %v910 = vsel %vm280, %v885, 0
      %912 = vmatpush.msra.mxu0 0.0
      %913 = vmatpush.msra.mxu0 0.0
      %914 = vmatpush.msra.mxu0 0.0
      %915 = vmatpush.msra.mxu0 0.0
      %916 = vmatpush.msra.mxu0 0.0
      %917 = vmatpush.msra.mxu0 0.0
      %918 = vmatpush.msra.mxu0 0.0
      %919 = vmatpush.msra.mxu0 0.0
      %920 = vmatpush.msra.mxu0 0.0
      %921 = vmatpush.msra.mxu0 0.0
      %922 = vmatpush.msra.mxu0 0.0
      %923 = vmatpush.msra.mxu0 0.0
      %924 = vmatpush.msra.mxu0 0.0
      %925 = vmatpush.msra.mxu0 0.0
      %926 = vmatpush.msra.mxu0 %v887
      %927 = vmatpush.msra.mxu0 %v886
      %928 = vmatmul.f32.gmra.mxu0 %v889
      %v929 = vpop.f32.mrf.mxu0
      %v930 = vadd.f32 0.0, %v929
      %931 = vmatmul.f32.gmra.mxu0 %v892
      %v932 = vpop.f32.mrf.mxu0
      %v933 = vadd.f32 0.0, %v932
      %934 = vmatmul.f32.gmra.mxu0 %v895
      %v935 = vpop.f32.mrf.mxu0
      %v936 = vadd.f32 0.0, %v935
      %937 = vmatmul.f32.gmra.mxu0 %v898
      %v938 = vpop.f32.mrf.mxu0
      %v939 = vadd.f32 0.0, %v938
      %940 = vmatmul.f32.gmra.mxu0 %v901
      %v941 = vpop.f32.mrf.mxu0
      %v942 = vadd.f32 0.0, %v941
      %943 = vmatmul.f32.gmra.mxu0 %v904
      %v944 = vpop.f32.mrf.mxu0
      %v945 = vadd.f32 0.0, %v944
      %946 = vmatmul.f32.gmra.mxu0 %v907
      %v947 = vpop.f32.mrf.mxu0
      %v948 = vadd.f32 0.0, %v947
      %949 = vmatmul.f32.gmra.mxu0 %v910
      %v950 = vpop.f32.mrf.mxu0
      %v951 = vadd.f32 0.0, %v950
      %952 = vdwg.mxu0
      %961 = vrot.lane.b32.xlu0 %v930, 64
      %v962 = vpop.permute.xlu0 %961
      %963 = vrot.lane.b32.xlu0 %v933, 64
      %v964 = vpop.permute.xlu0 %963
      %965 = vrot.lane.b32.xlu0 %v936, 64
      %v966 = vpop.permute.xlu0 %965
      %967 = vrot.lane.b32.xlu0 %v939, 64
      %v968 = vpop.permute.xlu0 %967
      %969 = vrot.lane.b32.xlu0 %v942, 64
      %v970 = vpop.permute.xlu0 %969
      %971 = vrot.lane.b32.xlu0 %v945, 64
      %v972 = vpop.permute.xlu0 %971
      %973 = vrot.lane.b32.xlu0 %v948, 64
      %v974 = vpop.permute.xlu0 %973
      %975 = vrot.lane.b32.xlu0 %v951, 64
      %v976 = vpop.permute.xlu0 %975
      %vm985 = vcmask 785920
      %986 = vst.msk [vmem:[#allocation2] sm:$0xff] %vm985, %v962
      %987 = vst.msk [vmem:[#allocation2 + $0x8] sm:$0xff] %vm985, %v964
      %988 = vst.msk [vmem:[#allocation2 + $0x10] sm:$0xff] %vm985, %v966
      %989 = vst.msk [vmem:[#allocation2 + $0x18] sm:$0xff] %vm985, %v968
      %990 = vst.msk [vmem:[#allocation2 + $0x20] sm:$0xff] %vm985, %v970
      %991 = vst.msk [vmem:[#allocation2 + $0x28] sm:$0xff] %vm985, %v972
      %992 = vst.msk [vmem:[#allocation2 + $0x30] sm:$0xff] %vm985, %v974
      %993 = vst.msk [vmem:[#allocation2 + $0x38] sm:$0xff] %vm985, %v976
      %v994 = vld [vmem:[%s355] sm:$0xff]
      %v995 = vld [vmem:[%s355 + $0x8] sm:$0xff]
      %996 = vmatpush.msra.mxu0 0.0
      %997 = vmatpush.msra.mxu0 0.0
      %998 = vmatpush.msra.mxu0 0.0
      %999 = vmatpush.msra.mxu0 0.0
      %1000 = vmatpush.msra.mxu0 0.0
      %1001 = vmatpush.msra.mxu0 0.0
      %1002 = vmatpush.msra.mxu0 0.0
      %1003 = vmatpush.msra.mxu0 0.0
      %1004 = vmatpush.msra.mxu0 0.0
      %1005 = vmatpush.msra.mxu0 0.0
      %1006 = vmatpush.msra.mxu0 0.0
      %1007 = vmatpush.msra.mxu0 0.0
      %1008 = vmatpush.msra.mxu0 0.0
      %1009 = vmatpush.msra.mxu0 0.0
      %1010 = vmatpush.msra.mxu0 %v995
      %1011 = vmatpush.msra.mxu0 %v994
      %1012 = vmatmul.f32.gmra.mxu0 %v889
      %v1013 = vpop.f32.mrf.mxu0
      %v1014 = vadd.f32 0.0, %v1013
      %1015 = vmatmul.f32.gmra.mxu0 %v892
      %v1016 = vpop.f32.mrf.mxu0
      %v1017 = vadd.f32 0.0, %v1016
      %1018 = vmatmul.f32.gmra.mxu0 %v895
      %v1019 = vpop.f32.mrf.mxu0
      %v1020 = vadd.f32 0.0, %v1019
      %1021 = vmatmul.f32.gmra.mxu0 %v898
      %v1022 = vpop.f32.mrf.mxu0
      %v1023 = vadd.f32 0.0, %v1022
      %1024 = vmatmul.f32.gmra.mxu0 %v901
      %v1025 = vpop.f32.mrf.mxu0
      %v1026 = vadd.f32 0.0, %v1025
      %1027 = vmatmul.f32.gmra.mxu0 %v904
      %v1028 = vpop.f32.mrf.mxu0
      %v1029 = vadd.f32 0.0, %v1028
      %1030 = vmatmul.f32.gmra.mxu0 %v907
      %v1031 = vpop.f32.mrf.mxu0
      %v1032 = vadd.f32 0.0, %v1031
      %1033 = vmatmul.f32.gmra.mxu0 %v910
      %v1034 = vpop.f32.mrf.mxu0
      %v1035 = vadd.f32 0.0, %v1034
      %1036 = vdwg.mxu0
      %1045 = vrot.lane.b32.xlu0 %v1014, 64
      %v1046 = vpop.permute.xlu0 %1045
      %1047 = vrot.lane.b32.xlu0 %v1017, 64
      %v1048 = vpop.permute.xlu0 %1047
      %1049 = vrot.lane.b32.xlu0 %v1020, 64
      %v1050 = vpop.permute.xlu0 %1049
      %1051 = vrot.lane.b32.xlu0 %v1023, 64
      %v1052 = vpop.permute.xlu0 %1051
      %1053 = vrot.lane.b32.xlu0 %v1026, 64
      %v1054 = vpop.permute.xlu0 %1053
      %1055 = vrot.lane.b32.xlu0 %v1029, 64
      %v1056 = vpop.permute.xlu0 %1055
      %1057 = vrot.lane.b32.xlu0 %v1032, 64
      %v1058 = vpop.permute.xlu0 %1057
      %1059 = vrot.lane.b32.xlu0 %v1035, 64
      %v1060 = vpop.permute.xlu0 %1059
      %1069 = vst.msk [vmem:[#allocation2 + $0x40] sm:$0xff] %vm985, %v1046
      %1070 = vst.msk [vmem:[#allocation2 + $0x48] sm:$0xff] %vm985, %v1048
      %1071 = vst.msk [vmem:[#allocation2 + $0x50] sm:$0xff] %vm985, %v1050
      %1072 = vst.msk [vmem:[#allocation2 + $0x58] sm:$0xff] %vm985, %v1052
      %1073 = vst.msk [vmem:[#allocation2 + $0x60] sm:$0xff] %vm985, %v1054
      %1074 = vst.msk [vmem:[#allocation2 + $0x68] sm:$0xff] %vm985, %v1056
      %1075 = vst.msk [vmem:[#allocation2 + $0x70] sm:$0xff] %vm985, %v1058
      %1076 = vst.msk [vmem:[#allocation2 + $0x78] sm:$0xff] %vm985, %v1060
      %v1077 = vld [vmem:[%s407] sm:$0xff]
      %v1078 = vld [vmem:[%s407 + $0x8] sm:$0xff]
      %1079 = vmatpush.msra.mxu0 0.0
      %1080 = vmatpush.msra.mxu0 0.0
      %1081 = vmatpush.msra.mxu0 0.0
      %1082 = vmatpush.msra.mxu0 0.0
      %1083 = vmatpush.msra.mxu0 0.0
      %1084 = vmatpush.msra.mxu0 0.0
      %1085 = vmatpush.msra.mxu0 0.0
      %1086 = vmatpush.msra.mxu0 0.0
      %1087 = vmatpush.msra.mxu0 0.0
      %1088 = vmatpush.msra.mxu0 0.0
      %1089 = vmatpush.msra.mxu0 0.0
      %1090 = vmatpush.msra.mxu0 0.0
      %1091 = vmatpush.msra.mxu0 0.0
      %1092 = vmatpush.msra.mxu0 0.0
      %1093 = vmatpush.msra.mxu0 %v1078
      %1094 = vmatpush.msra.mxu0 %v1077
      %1095 = vmatmul.f32.gmra.mxu0 %v889
      %v1096 = vpop.f32.mrf.mxu0
      %v1097 = vadd.f32 0.0, %v1096
      %1098 = vmatmul.f32.gmra.mxu0 %v892
      %v1099 = vpop.f32.mrf.mxu0
      %v1100 = vadd.f32 0.0, %v1099
      %1101 = vmatmul.f32.gmra.mxu0 %v895
      %v1102 = vpop.f32.mrf.mxu0
      %v1103 = vadd.f32 0.0, %v1102
      %1104 = vmatmul.f32.gmra.mxu0 %v898
      %v1105 = vpop.f32.mrf.mxu0
      %v1106 = vadd.f32 0.0, %v1105
      %1107 = vmatmul.f32.gmra.mxu0 %v901
      %v1108 = vpop.f32.mrf.mxu0
      %v1109 = vadd.f32 0.0, %v1108
      %1110 = vmatmul.f32.gmra.mxu0 %v904
      %v1111 = vpop.f32.mrf.mxu0
      %v1112 = vadd.f32 0.0, %v1111
      %1113 = vmatmul.f32.gmra.mxu0 %v907
      %v1114 = vpop.f32.mrf.mxu0
      %v1115 = vadd.f32 0.0, %v1114
      %1116 = vmatmul.f32.gmra.mxu0 %v910
      %v1117 = vpop.f32.mrf.mxu0
      %v1118 = vadd.f32 0.0, %v1117
      %1119 = vdwg.mxu0
      %1128 = vrot.lane.b32.xlu0 %v1097, 64
      %v1129 = vpop.permute.xlu0 %1128
      %1130 = vrot.lane.b32.xlu0 %v1100, 64
      %v1131 = vpop.permute.xlu0 %1130
      %1132 = vrot.lane.b32.xlu0 %v1103, 64
      %v1133 = vpop.permute.xlu0 %1132
      %1134 = vrot.lane.b32.xlu0 %v1106, 64
      %v1135 = vpop.permute.xlu0 %1134
      %1136 = vrot.lane.b32.xlu0 %v1109, 64
      %v1137 = vpop.permute.xlu0 %1136
      %1138 = vrot.lane.b32.xlu0 %v1112, 64
      %v1139 = vpop.permute.xlu0 %1138
      %1140 = vrot.lane.b32.xlu0 %v1115, 64
      %v1141 = vpop.permute.xlu0 %1140
      %1142 = vrot.lane.b32.xlu0 %v1118, 64
      %v1143 = vpop.permute.xlu0 %1142
      %1152 = vst.msk [vmem:[#allocation2 + $0x80] sm:$0xff] %vm985, %v1129
      %1153 = vst.msk [vmem:[#allocation2 + $0x88] sm:$0xff] %vm985, %v1131
      %1154 = vst.msk [vmem:[#allocation2 + $0x90] sm:$0xff] %vm985, %v1133
      %1155 = vst.msk [vmem:[#allocation2 + $0x98] sm:$0xff] %vm985, %v1135
      %1156 = vst.msk [vmem:[#allocation2 + $0xa0] sm:$0xff] %vm985, %v1137
      %1157 = vst.msk [vmem:[#allocation2 + $0xa8] sm:$0xff] %vm985, %v1139
      %1158 = vst.msk [vmem:[#allocation2 + $0xb0] sm:$0xff] %vm985, %v1141
      %1159 = vst.msk [vmem:[#allocation2 + $0xb8] sm:$0xff] %vm985, %v1143
      %v1160 = vld [vmem:[%s459] sm:$0xff]
      %v1161 = vld [vmem:[%s459 + $0x8] sm:$0xff]
      %1162 = vmatpush.msra.mxu0 0.0
      %1163 = vmatpush.msra.mxu0 0.0
      %1164 = vmatpush.msra.mxu0 0.0
      %1165 = vmatpush.msra.mxu0 0.0
      %1166 = vmatpush.msra.mxu0 0.0
      %1167 = vmatpush.msra.mxu0 0.0
      %1168 = vmatpush.msra.mxu0 0.0
      %1169 = vmatpush.msra.mxu0 0.0
      %1170 = vmatpush.msra.mxu0 0.0
      %1171 = vmatpush.msra.mxu0 0.0
      %1172 = vmatpush.msra.mxu0 0.0
      %1173 = vmatpush.msra.mxu0 0.0
      %1174 = vmatpush.msra.mxu0 0.0
      %1175 = vmatpush.msra.mxu0 0.0
      %1176 = vmatpush.msra.mxu0 %v1161
      %1177 = vmatpush.msra.mxu0 %v1160
      %1178 = vmatmul.f32.gmra.mxu0 %v889
      %v1179 = vpop.f32.mrf.mxu0
      %v1180 = vadd.f32 0.0, %v1179
      %1181 = vmatmul.f32.gmra.mxu0 %v892
      %v1182 = vpop.f32.mrf.mxu0
      %v1183 = vadd.f32 0.0, %v1182
      %1184 = vmatmul.f32.gmra.mxu0 %v895
      %v1185 = vpop.f32.mrf.mxu0
      %v1186 = vadd.f32 0.0, %v1185
      %1187 = vmatmul.f32.gmra.mxu0 %v898
      %v1188 = vpop.f32.mrf.mxu0
      %v1189 = vadd.f32 0.0, %v1188
      %1190 = vmatmul.f32.gmra.mxu0 %v901
      %v1191 = vpop.f32.mrf.mxu0
      %v1192 = vadd.f32 0.0, %v1191
      %1193 = vmatmul.f32.gmra.mxu0 %v904
      %v1194 = vpop.f32.mrf.mxu0
      %v1195 = vadd.f32 0.0, %v1194
      %1196 = vmatmul.f32.gmra.mxu0 %v907
      %v1197 = vpop.f32.mrf.mxu0
      %v1198 = vadd.f32 0.0, %v1197
      %1199 = vmatmul.f32.gmra.mxu0 %v910
      %v1200 = vpop.f32.mrf.mxu0
      %v1201 = vadd.f32 0.0, %v1200
      %1202 = vdwg.mxu0
      %1211 = vrot.lane.b32.xlu0 %v1180, 64
      %v1212 = vpop.permute.xlu0 %1211
      %1213 = vrot.lane.b32.xlu0 %v1183, 64
      %v1214 = vpop.permute.xlu0 %1213
      %1215 = vrot.lane.b32.xlu0 %v1186, 64
      %v1216 = vpop.permute.xlu0 %1215
      %1217 = vrot.lane.b32.xlu0 %v1189, 64
      %v1218 = vpop.permute.xlu0 %1217
      %1219 = vrot.lane.b32.xlu0 %v1192, 64
      %v1220 = vpop.permute.xlu0 %1219
      %1221 = vrot.lane.b32.xlu0 %v1195, 64
      %v1222 = vpop.permute.xlu0 %1221
      %1223 = vrot.lane.b32.xlu0 %v1198, 64
      %v1224 = vpop.permute.xlu0 %1223
      %1225 = vrot.lane.b32.xlu0 %v1201, 64
      %v1226 = vpop.permute.xlu0 %1225
      %1235 = vst.msk [vmem:[#allocation2 + $0xc0] sm:$0xff] %vm985, %v1212
      %1236 = vst.msk [vmem:[#allocation2 + $0xc8] sm:$0xff] %vm985, %v1214
      %1237 = vst.msk [vmem:[#allocation2 + $0xd0] sm:$0xff] %vm985, %v1216
      %1238 = vst.msk [vmem:[#allocation2 + $0xd8] sm:$0xff] %vm985, %v1218
      %1239 = vst.msk [vmem:[#allocation2 + $0xe0] sm:$0xff] %vm985, %v1220
      %1240 = vst.msk [vmem:[#allocation2 + $0xe8] sm:$0xff] %vm985, %v1222
      %1241 = vst.msk [vmem:[#allocation2 + $0xf0] sm:$0xff] %vm985, %v1224
      %1242 = vst.msk [vmem:[#allocation2 + $0xf8] sm:$0xff] %vm985, %v1226
      %s1243 = scalar_lea.vmem %s244, 192
      %v1244 = vld [vmem:[%s1243] sm:$0xff]
      %v1245 = vld [vmem:[%s1243 + $0x8] sm:$0xff]
      %v1246 = vld [vmem:[%s1243 + $0x10] sm:$0xff]
      %v1247 = vld [vmem:[%s1243 + $0x18] sm:$0xff]
      %v1248 = vld [vmem:[%s1243 + $0x20] sm:$0xff]
      %v1249 = vld [vmem:[%s1243 + $0x28] sm:$0xff]
      %v1250 = vld [vmem:[%s1243 + $0x30] sm:$0xff]
      %v1251 = vld [vmem:[%s1243 + $0x38] sm:$0xff]
      %v1252 = vld [vmem:[%s1] sm:$0xff]
      %v1253 = vld [vmem:[%s1 + $0x8] sm:$0xff]
      %v1255 = vsel %vm280, %v1244, 0
      %v1258 = vsel %vm280, %v1245, 0
      %v1261 = vsel %vm280, %v1246, 0
      %v1264 = vsel %vm280, %v1247, 0
      %v1267 = vsel %vm280, %v1248, 0
      %v1270 = vsel %vm280, %v1249, 0
      %v1273 = vsel %vm280, %v1250, 0
      %v1276 = vsel %vm280, %v1251, 0
      %1278 = vmatpush.msra.mxu0 0.0
      %1279 = vmatpush.msra.mxu0 0.0
      %1280 = vmatpush.msra.mxu0 0.0
      %1281 = vmatpush.msra.mxu0 0.0
      %1282 = vmatpush.msra.mxu0 0.0
      %1283 = vmatpush.msra.mxu0 0.0
      %1284 = vmatpush.msra.mxu0 0.0
      %1285 = vmatpush.msra.mxu0 0.0
      %1286 = vmatpush.msra.mxu0 0.0
      %1287 = vmatpush.msra.mxu0 0.0
      %1288 = vmatpush.msra.mxu0 0.0
      %1289 = vmatpush.msra.mxu0 0.0
      %1290 = vmatpush.msra.mxu0 0.0
      %1291 = vmatpush.msra.mxu0 0.0
      %1292 = vmatpush.msra.mxu0 %v1253
      %1293 = vmatpush.msra.mxu0 %v1252
      %1294 = vmatmul.f32.gmra.mxu0 %v1255
      %v1295 = vpop.f32.mrf.mxu0
      %v1296 = vadd.f32 0.0, %v1295
      %1297 = vmatmul.f32.gmra.mxu0 %v1258
      %v1298 = vpop.f32.mrf.mxu0
      %v1299 = vadd.f32 0.0, %v1298
      %1300 = vmatmul.f32.gmra.mxu0 %v1261
      %v1301 = vpop.f32.mrf.mxu0
      %v1302 = vadd.f32 0.0, %v1301
      %1303 = vmatmul.f32.gmra.mxu0 %v1264
      %v1304 = vpop.f32.mrf.mxu0
      %v1305 = vadd.f32 0.0, %v1304
      %1306 = vmatmul.f32.gmra.mxu0 %v1267
      %v1307 = vpop.f32.mrf.mxu0
      %v1308 = vadd.f32 0.0, %v1307
      %1309 = vmatmul.f32.gmra.mxu0 %v1270
      %v1310 = vpop.f32.mrf.mxu0
      %v1311 = vadd.f32 0.0, %v1310
      %1312 = vmatmul.f32.gmra.mxu0 %v1273
      %v1313 = vpop.f32.mrf.mxu0
      %v1314 = vadd.f32 0.0, %v1313
      %1315 = vmatmul.f32.gmra.mxu0 %v1276
      %v1316 = vpop.f32.mrf.mxu0
      %v1317 = vadd.f32 0.0, %v1316
      %1318 = vdwg.mxu0
      %1327 = vrot.lane.b32.xlu0 %v1296, 96
      %v1328 = vpop.permute.xlu0 %1327
      %1329 = vrot.lane.b32.xlu0 %v1299, 96
      %v1330 = vpop.permute.xlu0 %1329
      %1331 = vrot.lane.b32.xlu0 %v1302, 96
      %v1332 = vpop.permute.xlu0 %1331
      %1333 = vrot.lane.b32.xlu0 %v1305, 96
      %v1334 = vpop.permute.xlu0 %1333
      %1335 = vrot.lane.b32.xlu0 %v1308, 96
      %v1336 = vpop.permute.xlu0 %1335
      %1337 = vrot.lane.b32.xlu0 %v1311, 96
      %v1338 = vpop.permute.xlu0 %1337
      %1339 = vrot.lane.b32.xlu0 %v1314, 96
      %v1340 = vpop.permute.xlu0 %1339
      %1341 = vrot.lane.b32.xlu0 %v1317, 96
      %v1342 = vpop.permute.xlu0 %1341
      %vm1351 = vcmask 1048320
      %1352 = vst.msk [vmem:[#allocation2] sm:$0xff] %vm1351, %v1328
      %1353 = vst.msk [vmem:[#allocation2 + $0x8] sm:$0xff] %vm1351, %v1330
      %1354 = vst.msk [vmem:[#allocation2 + $0x10] sm:$0xff] %vm1351, %v1332
      %1355 = vst.msk [vmem:[#allocation2 + $0x18] sm:$0xff] %vm1351, %v1334
      %1356 = vst.msk [vmem:[#allocation2 + $0x20] sm:$0xff] %vm1351, %v1336
      %1357 = vst.msk [vmem:[#allocation2 + $0x28] sm:$0xff] %vm1351, %v1338
      %1358 = vst.msk [vmem:[#allocation2 + $0x30] sm:$0xff] %vm1351, %v1340
      %1359 = vst.msk [vmem:[#allocation2 + $0x38] sm:$0xff] %vm1351, %v1342
      %v1360 = vld [vmem:[%s355] sm:$0xff]
      %v1361 = vld [vmem:[%s355 + $0x8] sm:$0xff]
      %1362 = vmatpush.msra.mxu0 0.0
      %1363 = vmatpush.msra.mxu0 0.0
      %1364 = vmatpush.msra.mxu0 0.0
      %1365 = vmatpush.msra.mxu0 0.0
      %1366 = vmatpush.msra.mxu0 0.0
      %1367 = vmatpush.msra.mxu0 0.0
      %1368 = vmatpush.msra.mxu0 0.0
      %1369 = vmatpush.msra.mxu0 0.0
      %1370 = vmatpush.msra.mxu0 0.0
      %1371 = vmatpush.msra.mxu0 0.0
      %1372 = vmatpush.msra.mxu0 0.0
      %1373 = vmatpush.msra.mxu0 0.0
      %1374 = vmatpush.msra.mxu0 0.0
      %1375 = vmatpush.msra.mxu0 0.0
      %1376 = vmatpush.msra.mxu0 %v1361
      %1377 = vmatpush.msra.mxu0 %v1360
      %1378 = vmatmul.f32.gmra.mxu0 %v1255
      %v1379 = vpop.f32.mrf.mxu0
      %v1380 = vadd.f32 0.0, %v1379
      %1381 = vmatmul.f32.gmra.mxu0 %v1258
      %v1382 = vpop.f32.mrf.mxu0
      %v1383 = vadd.f32 0.0, %v1382
      %1384 = vmatmul.f32.gmra.mxu0 %v1261
      %v1385 = vpop.f32.mrf.mxu0
      %v1386 = vadd.f32 0.0, %v1385
      %1387 = vmatmul.f32.gmra.mxu0 %v1264
      %v1388 = vpop.f32.mrf.mxu0
      %v1389 = vadd.f32 0.0, %v1388
      %1390 = vmatmul.f32.gmra.mxu0 %v1267
      %v1391 = vpop.f32.mrf.mxu0
      %v1392 = vadd.f32 0.0, %v1391
      %1393 = vmatmul.f32.gmra.mxu0 %v1270
      %v1394 = vpop.f32.mrf.mxu0
      %v1395 = vadd.f32 0.0, %v1394
      %1396 = vmatmul.f32.gmra.mxu0 %v1273
      %v1397 = vpop.f32.mrf.mxu0
      %v1398 = vadd.f32 0.0, %v1397
      %1399 = vmatmul.f32.gmra.mxu0 %v1276
      %v1400 = vpop.f32.mrf.mxu0
      %v1401 = vadd.f32 0.0, %v1400
      %1402 = vdwg.mxu0
      %1411 = vrot.lane.b32.xlu0 %v1380, 96
      %v1412 = vpop.permute.xlu0 %1411
      %1413 = vrot.lane.b32.xlu0 %v1383, 96
      %v1414 = vpop.permute.xlu0 %1413
      %1415 = vrot.lane.b32.xlu0 %v1386, 96
      %v1416 = vpop.permute.xlu0 %1415
      %1417 = vrot.lane.b32.xlu0 %v1389, 96
      %v1418 = vpop.permute.xlu0 %1417
      %1419 = vrot.lane.b32.xlu0 %v1392, 96
      %v1420 = vpop.permute.xlu0 %1419
      %1421 = vrot.lane.b32.xlu0 %v1395, 96
      %v1422 = vpop.permute.xlu0 %1421
      %1423 = vrot.lane.b32.xlu0 %v1398, 96
      %v1424 = vpop.permute.xlu0 %1423
      %1425 = vrot.lane.b32.xlu0 %v1401, 96
      %v1426 = vpop.permute.xlu0 %1425
      %1435 = vst.msk [vmem:[#allocation2 + $0x40] sm:$0xff] %vm1351, %v1412
      %1436 = vst.msk [vmem:[#allocation2 + $0x48] sm:$0xff] %vm1351, %v1414
      %1437 = vst.msk [vmem:[#allocation2 + $0x50] sm:$0xff] %vm1351, %v1416
      %1438 = vst.msk [vmem:[#allocation2 + $0x58] sm:$0xff] %vm1351, %v1418
      %1439 = vst.msk [vmem:[#allocation2 + $0x60] sm:$0xff] %vm1351, %v1420
      %1440 = vst.msk [vmem:[#allocation2 + $0x68] sm:$0xff] %vm1351, %v1422
      %1441 = vst.msk [vmem:[#allocation2 + $0x70] sm:$0xff] %vm1351, %v1424
      %1442 = vst.msk [vmem:[#allocation2 + $0x78] sm:$0xff] %vm1351, %v1426
      %v1443 = vld [vmem:[%s407] sm:$0xff]
      %v1444 = vld [vmem:[%s407 + $0x8] sm:$0xff]
      %1445 = vmatpush.msra.mxu0 0.0
      %1446 = vmatpush.msra.mxu0 0.0
      %1447 = vmatpush.msra.mxu0 0.0
      %1448 = vmatpush.msra.mxu0 0.0
      %1449 = vmatpush.msra.mxu0 0.0
      %1450 = vmatpush.msra.mxu0 0.0
      %1451 = vmatpush.msra.mxu0 0.0
      %1452 = vmatpush.msra.mxu0 0.0
      %1453 = vmatpush.msra.mxu0 0.0
      %1454 = vmatpush.msra.mxu0 0.0
      %1455 = vmatpush.msra.mxu0 0.0
      %1456 = vmatpush.msra.mxu0 0.0
      %1457 = vmatpush.msra.mxu0 0.0
      %1458 = vmatpush.msra.mxu0 0.0
      %1459 = vmatpush.msra.mxu0 %v1444
      %1460 = vmatpush.msra.mxu0 %v1443
      %1461 = vmatmul.f32.gmra.mxu0 %v1255
      %v1462 = vpop.f32.mrf.mxu0
      %v1463 = vadd.f32 0.0, %v1462
      %1464 = vmatmul.f32.gmra.mxu0 %v1258
      %v1465 = vpop.f32.mrf.mxu0
      %v1466 = vadd.f32 0.0, %v1465
      %1467 = vmatmul.f32.gmra.mxu0 %v1261
      %v1468 = vpop.f32.mrf.mxu0
      %v1469 = vadd.f32 0.0, %v1468
      %1470 = vmatmul.f32.gmra.mxu0 %v1264
      %v1471 = vpop.f32.mrf.mxu0
      %v1472 = vadd.f32 0.0, %v1471
      %1473 = vmatmul.f32.gmra.mxu0 %v1267
      %v1474 = vpop.f32.mrf.mxu0
      %v1475 = vadd.f32 0.0, %v1474
      %1476 = vmatmul.f32.gmra.mxu0 %v1270
      %v1477 = vpop.f32.mrf.mxu0
      %v1478 = vadd.f32 0.0, %v1477
      %1479 = vmatmul.f32.gmra.mxu0 %v1273
      %v1480 = vpop.f32.mrf.mxu0
      %v1481 = vadd.f32 0.0, %v1480
      %1482 = vmatmul.f32.gmra.mxu0 %v1276
      %v1483 = vpop.f32.mrf.mxu0
      %v1484 = vadd.f32 0.0, %v1483
      %1485 = vdwg.mxu0
      %1494 = vrot.lane.b32.xlu0 %v1463, 96
      %v1495 = vpop.permute.xlu0 %1494
      %1496 = vrot.lane.b32.xlu0 %v1466, 96
      %v1497 = vpop.permute.xlu0 %1496
      %1498 = vrot.lane.b32.xlu0 %v1469, 96
      %v1499 = vpop.permute.xlu0 %1498
      %1500 = vrot.lane.b32.xlu0 %v1472, 96
      %v1501 = vpop.permute.xlu0 %1500
      %1502 = vrot.lane.b32.xlu0 %v1475, 96
      %v1503 = vpop.permute.xlu0 %1502
      %1504 = vrot.lane.b32.xlu0 %v1478, 96
      %v1505 = vpop.permute.xlu0 %1504
      %1506 = vrot.lane.b32.xlu0 %v1481, 96
      %v1507 = vpop.permute.xlu0 %1506
      %1508 = vrot.lane.b32.xlu0 %v1484, 96
      %v1509 = vpop.permute.xlu0 %1508
      %1518 = vst.msk [vmem:[#allocation2 + $0x80] sm:$0xff] %vm1351, %v1495
      %1519 = vst.msk [vmem:[#allocation2 + $0x88] sm:$0xff] %vm1351, %v1497
      %1520 = vst.msk [vmem:[#allocation2 + $0x90] sm:$0xff] %vm1351, %v1499
      %1521 = vst.msk [vmem:[#allocation2 + $0x98] sm:$0xff] %vm1351, %v1501
      %1522 = vst.msk [vmem:[#allocation2 + $0xa0] sm:$0xff] %vm1351, %v1503
      %1523 = vst.msk [vmem:[#allocation2 + $0xa8] sm:$0xff] %vm1351, %v1505
      %1524 = vst.msk [vmem:[#allocation2 + $0xb0] sm:$0xff] %vm1351, %v1507
      %1525 = vst.msk [vmem:[#allocation2 + $0xb8] sm:$0xff] %vm1351, %v1509
      %v1526 = vld [vmem:[%s459] sm:$0xff]
      %v1527 = vld [vmem:[%s459 + $0x8] sm:$0xff]
      %1528 = vmatpush.msra.mxu0 0.0
      %1529 = vmatpush.msra.mxu0 0.0
      %1530 = vmatpush.msra.mxu0 0.0
      %1531 = vmatpush.msra.mxu0 0.0
      %1532 = vmatpush.msra.mxu0 0.0
      %1533 = vmatpush.msra.mxu0 0.0
      %1534 = vmatpush.msra.mxu0 0.0
      %1535 = vmatpush.msra.mxu0 0.0
      %1536 = vmatpush.msra.mxu0 0.0
      %1537 = vmatpush.msra.mxu0 0.0
      %1538 = vmatpush.msra.mxu0 0.0
      %1539 = vmatpush.msra.mxu0 0.0
      %1540 = vmatpush.msra.mxu0 0.0
      %1541 = vmatpush.msra.mxu0 0.0
      %1542 = vmatpush.msra.mxu0 %v1527
      %1543 = vmatpush.msra.mxu0 %v1526
      %1544 = vmatmul.f32.gmra.mxu0 %v1255
      %v1545 = vpop.f32.mrf.mxu0
      %v1546 = vadd.f32 0.0, %v1545
      %1547 = vmatmul.f32.gmra.mxu0 %v1258
      %v1548 = vpop.f32.mrf.mxu0
      %v1549 = vadd.f32 0.0, %v1548
      %1550 = vmatmul.f32.gmra.mxu0 %v1261
      %v1551 = vpop.f32.mrf.mxu0
      %v1552 = vadd.f32 0.0, %v1551
      %1553 = vmatmul.f32.gmra.mxu0 %v1264
      %v1554 = vpop.f32.mrf.mxu0
      %v1555 = vadd.f32 0.0, %v1554
      %1556 = vmatmul.f32.gmra.mxu0 %v1267
      %v1557 = vpop.f32.mrf.mxu0
      %v1558 = vadd.f32 0.0, %v1557
      %1559 = vmatmul.f32.gmra.mxu0 %v1270
      %v1560 = vpop.f32.mrf.mxu0
      %v1561 = vadd.f32 0.0, %v1560
      %1562 = vmatmul.f32.gmra.mxu0 %v1273
      %v1563 = vpop.f32.mrf.mxu0
      %v1564 = vadd.f32 0.0, %v1563
      %1565 = vmatmul.f32.gmra.mxu0 %v1276
      %v1566 = vpop.f32.mrf.mxu0
      %v1567 = vadd.f32 0.0, %v1566
      %1568 = vdwg.mxu0
      %1577 = vrot.lane.b32.xlu0 %v1546, 96
      %v1578 = vpop.permute.xlu0 %1577
      %1579 = vrot.lane.b32.xlu0 %v1549, 96
      %v1580 = vpop.permute.xlu0 %1579
      %1581 = vrot.lane.b32.xlu0 %v1552, 96
      %v1582 = vpop.permute.xlu0 %1581
      %1583 = vrot.lane.b32.xlu0 %v1555, 96
      %v1584 = vpop.permute.xlu0 %1583
      %1585 = vrot.lane.b32.xlu0 %v1558, 96
      %v1586 = vpop.permute.xlu0 %1585
      %1587 = vrot.lane.b32.xlu0 %v1561, 96
      %v1588 = vpop.permute.xlu0 %1587
      %1589 = vrot.lane.b32.xlu0 %v1564, 96
      %v1590 = vpop.permute.xlu0 %1589
      %1591 = vrot.lane.b32.xlu0 %v1567, 96
      %v1592 = vpop.permute.xlu0 %1591
      %1601 = vst.msk [vmem:[#allocation2 + $0xc0] sm:$0xff] %vm1351, %v1578
      %1602 = vst.msk [vmem:[#allocation2 + $0xc8] sm:$0xff] %vm1351, %v1580
      %1603 = vst.msk [vmem:[#allocation2 + $0xd0] sm:$0xff] %vm1351, %v1582
      %1604 = vst.msk [vmem:[#allocation2 + $0xd8] sm:$0xff] %vm1351, %v1584
      %1605 = vst.msk [vmem:[#allocation2 + $0xe0] sm:$0xff] %vm1351, %v1586
      %1606 = vst.msk [vmem:[#allocation2 + $0xe8] sm:$0xff] %vm1351, %v1588
      %1607 = vst.msk [vmem:[#allocation2 + $0xf0] sm:$0xff] %vm1351, %v1590
      %1608 = vst.msk [vmem:[#allocation2 + $0xf8] sm:$0xff] %vm1351, %v1592
      %v1609 = vld [vmem:[%s251] sm:$0xff]
      %v1610 = vld [vmem:[%s251 + $0x8] sm:$0xff]
      %v1611 = vld [vmem:[%s251 + $0x10] sm:$0xff]
      %v1612 = vld [vmem:[%s251 + $0x18] sm:$0xff]
      %v1613 = vld [vmem:[%s251 + $0x20] sm:$0xff]
      %v1614 = vld [vmem:[%s251 + $0x28] sm:$0xff]
      %v1615 = vld [vmem:[%s251 + $0x30] sm:$0xff]
      %v1616 = vld [vmem:[%s251 + $0x38] sm:$0xff]
      %v1617 = vld [vmem:[%s251 + $0x40] sm:$0xff]
      %v1618 = vld [vmem:[%s251 + $0x48] sm:$0xff]
      %v1619 = vld [vmem:[%s251 + $0x50] sm:$0xff]
      %v1620 = vld [vmem:[%s251 + $0x58] sm:$0xff]
      %v1621 = vld [vmem:[%s251 + $0x60] sm:$0xff]
      %v1622 = vld [vmem:[%s251 + $0x68] sm:$0xff]
      %v1623 = vld [vmem:[%s251 + $0x70] sm:$0xff]
      %v1624 = vld [vmem:[%s251 + $0x78] sm:$0xff]
      %v1625 = vld [vmem:[%s251 + $0x80] sm:$0xff]
      %v1626 = vld [vmem:[%s251 + $0x88] sm:$0xff]
      %v1627 = vld [vmem:[%s251 + $0x90] sm:$0xff]
      %v1628 = vld [vmem:[%s251 + $0x98] sm:$0xff]
      %v1629 = vld [vmem:[%s251 + $0xa0] sm:$0xff]
      %v1630 = vld [vmem:[%s251 + $0xa8] sm:$0xff]
      %v1631 = vld [vmem:[%s251 + $0xb0] sm:$0xff]
      %v1632 = vld [vmem:[%s251 + $0xb8] sm:$0xff]
      %v1633 = vld [vmem:[%s251 + $0xc0] sm:$0xff]
      %v1634 = vld [vmem:[%s251 + $0xc8] sm:$0xff]
      %v1635 = vld [vmem:[%s251 + $0xd0] sm:$0xff]
      %v1636 = vld [vmem:[%s251 + $0xd8] sm:$0xff]
      %v1637 = vld [vmem:[%s251 + $0xe0] sm:$0xff]
      %v1638 = vld [vmem:[%s251 + $0xe8] sm:$0xff]
      %v1639 = vld [vmem:[%s251 + $0xf0] sm:$0xff]
      %v1640 = vld [vmem:[%s251 + $0xf8] sm:$0xff]
      %v1641 = vld [vmem:[#allocation2] sm:$0xff]
      %v1642 = vld [vmem:[#allocation2 + $0x8] sm:$0xff]
      %v1643 = vld [vmem:[#allocation2 + $0x10] sm:$0xff]
      %v1644 = vld [vmem:[#allocation2 + $0x18] sm:$0xff]
      %v1645 = vld [vmem:[#allocation2 + $0x20] sm:$0xff]
      %v1646 = vld [vmem:[#allocation2 + $0x28] sm:$0xff]
      %v1647 = vld [vmem:[#allocation2 + $0x30] sm:$0xff]
      %v1648 = vld [vmem:[#allocation2 + $0x38] sm:$0xff]
      %v1649 = vld [vmem:[#allocation2 + $0x40] sm:$0xff]
      %v1650 = vld [vmem:[#allocation2 + $0x48] sm:$0xff]
      %v1651 = vld [vmem:[#allocation2 + $0x50] sm:$0xff]
      %v1652 = vld [vmem:[#allocation2 + $0x58] sm:$0xff]
      %v1653 = vld [vmem:[#allocation2 + $0x60] sm:$0xff]
      %v1654 = vld [vmem:[#allocation2 + $0x68] sm:$0xff]
      %v1655 = vld [vmem:[#allocation2 + $0x70] sm:$0xff]
      %v1656 = vld [vmem:[#allocation2 + $0x78] sm:$0xff]
      %v1657 = vld [vmem:[#allocation2 + $0x80] sm:$0xff]
      %v1658 = vld [vmem:[#allocation2 + $0x88] sm:$0xff]
      %v1659 = vld [vmem:[#allocation2 + $0x90] sm:$0xff]
      %v1660 = vld [vmem:[#allocation2 + $0x98] sm:$0xff]
      %v1661 = vld [vmem:[#allocation2 + $0xa0] sm:$0xff]
      %v1662 = vld [vmem:[#allocation2 + $0xa8] sm:$0xff]
      %v1663 = vld [vmem:[#allocation2 + $0xb0] sm:$0xff]
      %v1664 = vld [vmem:[#allocation2 + $0xb8] sm:$0xff]
      %v1665 = vld [vmem:[#allocation2 + $0xc0] sm:$0xff]
      %v1666 = vld [vmem:[#allocation2 + $0xc8] sm:$0xff]
      %v1667 = vld [vmem:[#allocation2 + $0xd0] sm:$0xff]
      %v1668 = vld [vmem:[#allocation2 + $0xd8] sm:$0xff]
      %v1669 = vld [vmem:[#allocation2 + $0xe0] sm:$0xff]
      %v1670 = vld [vmem:[#allocation2 + $0xe8] sm:$0xff]
      %v1671 = vld [vmem:[#allocation2 + $0xf0] sm:$0xff]
      %v1672 = vld [vmem:[#allocation2 + $0xf8] sm:$0xff]
      %1673 = vmatpush.msra.mxu0 %v1656
      %1674 = vmatpush.msra.mxu0 %v1655
      %1675 = vmatpush.msra.mxu0 %v1654
      %1676 = vmatpush.msra.mxu0 %v1653
      %1677 = vmatpush.msra.mxu0 %v1652
      %1678 = vmatpush.msra.mxu0 %v1651
      %1679 = vmatpush.msra.mxu0 %v1650
      %1680 = vmatpush.msra.mxu0 %v1649
      %1681 = vmatpush.msra.mxu0 %v1648
      %1682 = vmatpush.msra.mxu0 %v1647
      %1683 = vmatpush.msra.mxu0 %v1646
      %1684 = vmatpush.msra.mxu0 %v1645
      %1685 = vmatpush.msra.mxu0 %v1644
      %1686 = vmatpush.msra.mxu0 %v1643
      %1687 = vmatpush.msra.mxu0 %v1642
      %1688 = vmatpush.msra.mxu0 %v1641
      %1689 = vmatmul.f32.gmra.mxu0 %v1609
      %v1690 = vpop.f32.mrf.mxu0
      %v1691 = vadd.f32 0.0, %v1690
      %1692 = vmatmul.f32.gmra.mxu0 %v1611
      %v1693 = vpop.f32.mrf.mxu0
      %v1694 = vadd.f32 0.0, %v1693
      %1695 = vmatmul.f32.gmra.mxu0 %v1613
      %v1696 = vpop.f32.mrf.mxu0
      %v1697 = vadd.f32 0.0, %v1696
      %1698 = vmatmul.f32.gmra.mxu0 %v1615
      %v1699 = vpop.f32.mrf.mxu0
      %v1700 = vadd.f32 0.0, %v1699
      %1701 = vmatmul.f32.gmra.mxu0 %v1617
      %v1702 = vpop.f32.mrf.mxu0
      %v1703 = vadd.f32 0.0, %v1702
      %1704 = vmatmul.f32.gmra.mxu0 %v1619
      %v1705 = vpop.f32.mrf.mxu0
      %v1706 = vadd.f32 0.0, %v1705
      %1707 = vmatmul.f32.gmra.mxu0 %v1621
      %v1708 = vpop.f32.mrf.mxu0
      %v1709 = vadd.f32 0.0, %v1708
      %1710 = vmatmul.f32.gmra.mxu0 %v1623
      %v1711 = vpop.f32.mrf.mxu0
      %v1712 = vadd.f32 0.0, %v1711
      %1713 = vmatmul.f32.gmra.mxu0 %v1625
      %v1714 = vpop.f32.mrf.mxu0
      %v1715 = vadd.f32 0.0, %v1714
      %1716 = vmatmul.f32.gmra.mxu0 %v1627
      %v1717 = vpop.f32.mrf.mxu0
      %v1718 = vadd.f32 0.0, %v1717
      %1719 = vmatmul.f32.gmra.mxu0 %v1629
      %v1720 = vpop.f32.mrf.mxu0
      %v1721 = vadd.f32 0.0, %v1720
      %1722 = vmatmul.f32.gmra.mxu0 %v1631
      %v1723 = vpop.f32.mrf.mxu0
      %v1724 = vadd.f32 0.0, %v1723
      %1725 = vmatmul.f32.gmra.mxu0 %v1633
      %v1726 = vpop.f32.mrf.mxu0
      %v1727 = vadd.f32 0.0, %v1726
      %1728 = vmatmul.f32.gmra.mxu0 %v1635
      %v1729 = vpop.f32.mrf.mxu0
      %v1730 = vadd.f32 0.0, %v1729
      %1731 = vmatmul.f32.gmra.mxu0 %v1637
      %v1732 = vpop.f32.mrf.mxu0
      %v1733 = vadd.f32 0.0, %v1732
      %1734 = vmatmul.f32.gmra.mxu0 %v1639
      %v1735 = vpop.f32.mrf.mxu0
      %v1736 = vadd.f32 0.0, %v1735
      %1737 = vdwg.mxu0
      %1738 = vmatpush.msra.mxu0 %v1672
      %1739 = vmatpush.msra.mxu0 %v1671
      %1740 = vmatpush.msra.mxu0 %v1670
      %1741 = vmatpush.msra.mxu0 %v1669
      %1742 = vmatpush.msra.mxu0 %v1668
      %1743 = vmatpush.msra.mxu0 %v1667
      %1744 = vmatpush.msra.mxu0 %v1666
      %1745 = vmatpush.msra.mxu0 %v1665
      %1746 = vmatpush.msra.mxu0 %v1664
      %1747 = vmatpush.msra.mxu0 %v1663
      %1748 = vmatpush.msra.mxu0 %v1662
      %1749 = vmatpush.msra.mxu0 %v1661
      %1750 = vmatpush.msra.mxu0 %v1660
      %1751 = vmatpush.msra.mxu0 %v1659
      %1752 = vmatpush.msra.mxu0 %v1658
      %1753 = vmatpush.msra.mxu0 %v1657
      %1754 = vmatmul.f32.gmra.mxu0 %v1610
      %v1755 = vpop.f32.mrf.mxu0
      %v1756 = vadd.f32 %v1691, %v1755
      %1757 = vmatmul.f32.gmra.mxu0 %v1612
      %v1758 = vpop.f32.mrf.mxu0
      %v1759 = vadd.f32 %v1694, %v1758
      %1760 = vmatmul.f32.gmra.mxu0 %v1614
      %v1761 = vpop.f32.mrf.mxu0
      %v1762 = vadd.f32 %v1697, %v1761
      %1763 = vmatmul.f32.gmra.mxu0 %v1616
      %v1764 = vpop.f32.mrf.mxu0
      %v1765 = vadd.f32 %v1700, %v1764
      %1766 = vmatmul.f32.gmra.mxu0 %v1618
      %v1767 = vpop.f32.mrf.mxu0
      %v1768 = vadd.f32 %v1703, %v1767
      %1769 = vmatmul.f32.gmra.mxu0 %v1620
      %v1770 = vpop.f32.mrf.mxu0
      %v1771 = vadd.f32 %v1706, %v1770
      %1772 = vmatmul.f32.gmra.mxu0 %v1622
      %v1773 = vpop.f32.mrf.mxu0
      %v1774 = vadd.f32 %v1709, %v1773
      %1775 = vmatmul.f32.gmra.mxu0 %v1624
      %v1776 = vpop.f32.mrf.mxu0
      %v1777 = vadd.f32 %v1712, %v1776
      %1778 = vmatmul.f32.gmra.mxu0 %v1626
      %v1779 = vpop.f32.mrf.mxu0
      %v1780 = vadd.f32 %v1715, %v1779
      %1781 = vmatmul.f32.gmra.mxu0 %v1628
      %v1782 = vpop.f32.mrf.mxu0
      %v1783 = vadd.f32 %v1718, %v1782
      %1784 = vmatmul.f32.gmra.mxu0 %v1630
      %v1785 = vpop.f32.mrf.mxu0
      %v1786 = vadd.f32 %v1721, %v1785
      %1787 = vmatmul.f32.gmra.mxu0 %v1632
      %v1788 = vpop.f32.mrf.mxu0
      %v1789 = vadd.f32 %v1724, %v1788
      %1790 = vmatmul.f32.gmra.mxu0 %v1634
      %v1791 = vpop.f32.mrf.mxu0
      %v1792 = vadd.f32 %v1727, %v1791
      %1793 = vmatmul.f32.gmra.mxu0 %v1636
      %v1794 = vpop.f32.mrf.mxu0
      %v1795 = vadd.f32 %v1730, %v1794
      %1796 = vmatmul.f32.gmra.mxu0 %v1638
      %v1797 = vpop.f32.mrf.mxu0
      %v1798 = vadd.f32 %v1733, %v1797
      %1799 = vmatmul.f32.gmra.mxu0 %v1640
      %v1800 = vpop.f32.mrf.mxu0
      %v1801 = vadd.f32 %v1736, %v1800
      %1802 = vdwg.mxu0
      %v1803 = vmul.f32 %v1756, 0.5
      %v1804 = vmul.f32 %v1759, 0.5
      %v1805 = vmul.f32 %v1762, 0.5
      %v1806 = vmul.f32 %v1765, 0.5
      %v1807 = vmul.f32 %v1768, 0.5
      %v1808 = vmul.f32 %v1771, 0.5
      %v1809 = vmul.f32 %v1774, 0.5
      %v1810 = vmul.f32 %v1777, 0.5
      %v1811 = vmul.f32 %v1780, 0.5
      %v1812 = vmul.f32 %v1783, 0.5
      %v1813 = vmul.f32 %v1786, 0.5
      %v1814 = vmul.f32 %v1789, 0.5
      %v1815 = vmul.f32 %v1792, 0.5
      %v1816 = vmul.f32 %v1795, 0.5
      %v1817 = vmul.f32 %v1798, 0.5
      %v1818 = vmul.f32 %v1801, 0.5
      %v1819 = vmul.f32 %v1756, 0.70710677
      %v1820 = vmul.f32 %v1759, 0.70710677
      %v1821 = vmul.f32 %v1762, 0.70710677
      %v1822 = vmul.f32 %v1765, 0.70710677
      %v1823 = vmul.f32 %v1768, 0.70710677
      %v1824 = vmul.f32 %v1771, 0.70710677
      %v1825 = vmul.f32 %v1774, 0.70710677
      %v1826 = vmul.f32 %v1777, 0.70710677
      %v1827 = vmul.f32 %v1780, 0.70710677
      %v1828 = vmul.f32 %v1783, 0.70710677
      %v1829 = vmul.f32 %v1786, 0.70710677
      %v1830 = vmul.f32 %v1789, 0.70710677
      %v1831 = vmul.f32 %v1792, 0.70710677
      %v1832 = vmul.f32 %v1795, 0.70710677
      %v1833 = vmul.f32 %v1798, 0.70710677
      %v1834 = vmul.f32 %v1801, 0.70710677
      %v1835 = vmul.f32 %v1819, %v1819
      %v1836 = vmin.f32 16.0, %v1835
      %v1837 = vmul.f32 %v1836, 2.1237322e-06
      %v1838 = vadd.f32 %v1837, 0.00028619796
      %v1839 = vmul.f32 %v1836, %v1838
      %v1840 = vadd.f32 %v1839, 0.0036580483
      %v1841 = vmul.f32 %v1836, %v1840
      %v1842 = vadd.f32 %v1841, 0.05243302
      %v1843 = vmul.f32 %v1836, %v1842
      %v1844 = vadd.f32 %v1843, 0.18741608
      %v1845 = vmul.f32 %v1836, %v1844
      %v1846 = vadd.f32 %v1845, 1.1283791
      %v1847 = vmul.f32 %v1819, %v1846
      %v1848 = vmul.f32 %v1836, 3.8918573e-05
      %v1849 = vadd.f32 %v1848, 0.001143296
      %v1850 = vmul.f32 %v1836, %v1849
      %v1851 = vadd.f32 %v1850, 0.014752088
      %v1852 = vmul.f32 %v1836, %v1851
      %v1853 = vadd.f32 %v1852, 0.112945676
      %v1854 = vmul.f32 %v1836, %v1853
      %v1855 = vadd.f32 %v1854, 0.4994258
      %v1856 = vmul.f32 %v1836, %v1855
      %v1857 = vadd.f32 %v1856, 1.0
      %v1858 = vrcp.pop %v1857
      %v1859 = vmul.f32 %v1857, %v1858
      %v1860 = vsub.f32 1.0, %v1859
      %v1861 = vmul.f32 %v1858, %v1860
      %v1862 = vadd.f32 %v1858, %v1861
      %vm1863 = vweird.f32 %v1857
      %vm1864 = vweird.f32 %v1858
      %vm1865 = vmor %vm1863, %vm1864
      %v1866 = vsel %vm1865, %v1858, %v1862
      %v1867 = vand.u32 2147483647, %v1857
      %vm1868 = vcmp.eq.f32.partialorder %v1867, 8.507059e+37
      %v1869 = vand.u32 %v1857, 2147483648
      %v1870 = vor.u32 1.1754944e-38, %v1869
      %v1871 = vsel %vm1868, %v1870, %v1866
      %v1872 = vmul.f32 %v1847, %v1871
      %v1873 = vmin.f32 %v1872, 1.0
      %v1874 = vmax.f32 %v1873, -1.0
      %v1875 = vmul.f32 %v1820, %v1820
      %v1876 = vmin.f32 16.0, %v1875
      %v1877 = vmul.f32 %v1876, 2.1237322e-06
      %v1878 = vadd.f32 %v1877, 0.00028619796
      %v1879 = vmul.f32 %v1876, %v1878
      %v1880 = vadd.f32 %v1879, 0.0036580483
      %v1881 = vmul.f32 %v1876, %v1880
      %v1882 = vadd.f32 %v1881, 0.05243302
      %v1883 = vmul.f32 %v1876, %v1882
      %v1884 = vadd.f32 %v1883, 0.18741608
      %v1885 = vmul.f32 %v1876, %v1884
      %v1886 = vadd.f32 %v1885, 1.1283791
      %v1887 = vmul.f32 %v1820, %v1886
      %v1888 = vmul.f32 %v1876, 3.8918573e-05
      %v1889 = vadd.f32 %v1888, 0.001143296
      %v1890 = vmul.f32 %v1876, %v1889
      %v1891 = vadd.f32 %v1890, 0.014752088
      %v1892 = vmul.f32 %v1876, %v1891
      %v1893 = vadd.f32 %v1892, 0.112945676
      %v1894 = vmul.f32 %v1876, %v1893
      %v1895 = vadd.f32 %v1894, 0.4994258
      %v1896 = vmul.f32 %v1876, %v1895
      %v1897 = vadd.f32 %v1896, 1.0
      %v1898 = vrcp.pop %v1897
      %v1899 = vmul.f32 %v1897, %v1898
      %v1900 = vsub.f32 1.0, %v1899
      %v1901 = vmul.f32 %v1898, %v1900
      %v1902 = vadd.f32 %v1898, %v1901
      %vm1903 = vweird.f32 %v1897
      %vm1904 = vweird.f32 %v1898
      %vm1905 = vmor %vm1903, %vm1904
      %v1906 = vsel %vm1905, %v1898, %v1902
      %v1907 = vand.u32 2147483647, %v1897
      %vm1908 = vcmp.eq.f32.partialorder %v1907, 8.507059e+37
      %v1909 = vand.u32 %v1897, 2147483648
      %v1910 = vor.u32 1.1754944e-38, %v1909
      %v1911 = vsel %vm1908, %v1910, %v1906
      %v1912 = vmul.f32 %v1887, %v1911
      %v1913 = vmin.f32 %v1912, 1.0
      %v1914 = vmax.f32 %v1913, -1.0
      %v1915 = vmul.f32 %v1821, %v1821
      %v1916 = vmin.f32 16.0, %v1915
      %v1917 = vmul.f32 %v1916, 2.1237322e-06
      %v1918 = vadd.f32 %v1917, 0.00028619796
      %v1919 = vmul.f32 %v1916, %v1918
      %v1920 = vadd.f32 %v1919, 0.0036580483
      %v1921 = vmul.f32 %v1916, %v1920
      %v1922 = vadd.f32 %v1921, 0.05243302
      %v1923 = vmul.f32 %v1916, %v1922
      %v1924 = vadd.f32 %v1923, 0.18741608
      %v1925 = vmul.f32 %v1916, %v1924
      %v1926 = vadd.f32 %v1925, 1.1283791
      %v1927 = vmul.f32 %v1821, %v1926
      %v1928 = vmul.f32 %v1916, 3.8918573e-05
      %v1929 = vadd.f32 %v1928, 0.001143296
      %v1930 = vmul.f32 %v1916, %v1929
      %v1931 = vadd.f32 %v1930, 0.014752088
      %v1932 = vmul.f32 %v1916, %v1931
      %v1933 = vadd.f32 %v1932, 0.112945676
      %v1934 = vmul.f32 %v1916, %v1933
      %v1935 = vadd.f32 %v1934, 0.4994258
      %v1936 = vmul.f32 %v1916, %v1935
      %v1937 = vadd.f32 %v1936, 1.0
      %v1938 = vrcp.pop %v1937
      %v1939 = vmul.f32 %v1937, %v1938
      %v1940 = vsub.f32 1.0, %v1939
      %v1941 = vmul.f32 %v1938, %v1940
      %v1942 = vadd.f32 %v1938, %v1941
      %vm1943 = vweird.f32 %v1937
      %vm1944 = vweird.f32 %v1938
      %vm1945 = vmor %vm1943, %vm1944
      %v1946 = vsel %vm1945, %v1938, %v1942
      %v1947 = vand.u32 2147483647, %v1937
      %vm1948 = vcmp.eq.f32.partialorder %v1947, 8.507059e+37
      %v1949 = vand.u32 %v1937, 2147483648
      %v1950 = vor.u32 1.1754944e-38, %v1949
      %v1951 = vsel %vm1948, %v1950, %v1946
      %v1952 = vmul.f32 %v1927, %v1951
      %v1953 = vmin.f32 %v1952, 1.0
      %v1954 = vmax.f32 %v1953, -1.0
      %v1955 = vmul.f32 %v1822, %v1822
      %v1956 = vmin.f32 16.0, %v1955
      %v1957 = vmul.f32 %v1956, 2.1237322e-06
      %v1958 = vadd.f32 %v1957, 0.00028619796
      %v1959 = vmul.f32 %v1956, %v1958
      %v1960 = vadd.f32 %v1959, 0.0036580483
      %v1961 = vmul.f32 %v1956, %v1960
      %v1962 = vadd.f32 %v1961, 0.05243302
      %v1963 = vmul.f32 %v1956, %v1962
      %v1964 = vadd.f32 %v1963, 0.18741608
      %v1965 = vmul.f32 %v1956, %v1964
      %v1966 = vadd.f32 %v1965, 1.1283791
      %v1967 = vmul.f32 %v1822, %v1966
      %v1968 = vmul.f32 %v1956, 3.8918573e-05
      %v1969 = vadd.f32 %v1968, 0.001143296
      %v1970 = vmul.f32 %v1956, %v1969
      %v1971 = vadd.f32 %v1970, 0.014752088
      %v1972 = vmul.f32 %v1956, %v1971
      %v1973 = vadd.f32 %v1972, 0.112945676
      %v1974 = vmul.f32 %v1956, %v1973
      %v1975 = vadd.f32 %v1974, 0.4994258
      %v1976 = vmul.f32 %v1956, %v1975
      %v1977 = vadd.f32 %v1976, 1.0
      %v1978 = vrcp.pop %v1977
      %v1979 = vmul.f32 %v1977, %v1978
      %v1980 = vsub.f32 1.0, %v1979
      %v1981 = vmul.f32 %v1978, %v1980
      %v1982 = vadd.f32 %v1978, %v1981
      %vm1983 = vweird.f32 %v1977
      %vm1984 = vweird.f32 %v1978
      %vm1985 = vmor %vm1983, %vm1984
      %v1986 = vsel %vm1985, %v1978, %v1982
      %v1987 = vand.u32 2147483647, %v1977
      %vm1988 = vcmp.eq.f32.partialorder %v1987, 8.507059e+37
      %v1989 = vand.u32 %v1977, 2147483648
      %v1990 = vor.u32 1.1754944e-38, %v1989
      %v1991 = vsel %vm1988, %v1990, %v1986
      %v1992 = vmul.f32 %v1967, %v1991
      %v1993 = vmin.f32 %v1992, 1.0
      %v1994 = vmax.f32 %v1993, -1.0
      %v1995 = vmul.f32 %v1823, %v1823
      %v1996 = vmin.f32 16.0, %v1995
      %v1997 = vmul.f32 %v1996, 2.1237322e-06
      %v1998 = vadd.f32 %v1997, 0.00028619796
      %v1999 = vmul.f32 %v1996, %v1998
      %v2000 = vadd.f32 %v1999, 0.0036580483
      %v2001 = vmul.f32 %v1996, %v2000
      %v2002 = vadd.f32 %v2001, 0.05243302
      %v2003 = vmul.f32 %v1996, %v2002
      %v2004 = vadd.f32 %v2003, 0.18741608
      %v2005 = vmul.f32 %v1996, %v2004
      %v2006 = vadd.f32 %v2005, 1.1283791
      %v2007 = vmul.f32 %v1823, %v2006
      %v2008 = vmul.f32 %v1996, 3.8918573e-05
      %v2009 = vadd.f32 %v2008, 0.001143296
      %v2010 = vmul.f32 %v1996, %v2009
      %v2011 = vadd.f32 %v2010, 0.014752088
      %v2012 = vmul.f32 %v1996, %v2011
      %v2013 = vadd.f32 %v2012, 0.112945676
      %v2014 = vmul.f32 %v1996, %v2013
      %v2015 = vadd.f32 %v2014, 0.4994258
      %v2016 = vmul.f32 %v1996, %v2015
      %v2017 = vadd.f32 %v2016, 1.0
      %v2018 = vrcp.pop %v2017
      %v2019 = vmul.f32 %v2017, %v2018
      %v2020 = vsub.f32 1.0, %v2019
      %v2021 = vmul.f32 %v2018, %v2020
      %v2022 = vadd.f32 %v2018, %v2021
      %vm2023 = vweird.f32 %v2017
      %vm2024 = vweird.f32 %v2018
      %vm2025 = vmor %vm2023, %vm2024
      %v2026 = vsel %vm2025, %v2018, %v2022
      %v2027 = vand.u32 2147483647, %v2017
      %vm2028 = vcmp.eq.f32.partialorder %v2027, 8.507059e+37
      %v2029 = vand.u32 %v2017, 2147483648
      %v2030 = vor.u32 1.1754944e-38, %v2029
      %v2031 = vsel %vm2028, %v2030, %v2026
      %v2032 = vmul.f32 %v2007, %v2031
      %v2033 = vmin.f32 %v2032, 1.0
      %v2034 = vmax.f32 %v2033, -1.0
      %v2035 = vmul.f32 %v1824, %v1824
      %v2036 = vmin.f32 16.0, %v2035
      %v2037 = vmul.f32 %v2036, 2.1237322e-06
      %v2038 = vadd.f32 %v2037, 0.00028619796
      %v2039 = vmul.f32 %v2036, %v2038
      %v2040 = vadd.f32 %v2039, 0.0036580483
      %v2041 = vmul.f32 %v2036, %v2040
      %v2042 = vadd.f32 %v2041, 0.05243302
      %v2043 = vmul.f32 %v2036, %v2042
      %v2044 = vadd.f32 %v2043, 0.18741608
      %v2045 = vmul.f32 %v2036, %v2044
      %v2046 = vadd.f32 %v2045, 1.1283791
      %v2047 = vmul.f32 %v1824, %v2046
      %v2048 = vmul.f32 %v2036, 3.8918573e-05
      %v2049 = vadd.f32 %v2048, 0.001143296
      %v2050 = vmul.f32 %v2036, %v2049
      %v2051 = vadd.f32 %v2050, 0.014752088
      %v2052 = vmul.f32 %v2036, %v2051
      %v2053 = vadd.f32 %v2052, 0.112945676
      %v2054 = vmul.f32 %v2036, %v2053
      %v2055 = vadd.f32 %v2054, 0.4994258
      %v2056 = vmul.f32 %v2036, %v2055
      %v2057 = vadd.f32 %v2056, 1.0
      %v2058 = vrcp.pop %v2057
      %v2059 = vmul.f32 %v2057, %v2058
      %v2060 = vsub.f32 1.0, %v2059
      %v2061 = vmul.f32 %v2058, %v2060
      %v2062 = vadd.f32 %v2058, %v2061
      %vm2063 = vweird.f32 %v2057
      %vm2064 = vweird.f32 %v2058
      %vm2065 = vmor %vm2063, %vm2064
      %v2066 = vsel %vm2065, %v2058, %v2062
      %v2067 = vand.u32 2147483647, %v2057
      %vm2068 = vcmp.eq.f32.partialorder %v2067, 8.507059e+37
      %v2069 = vand.u32 %v2057, 2147483648
      %v2070 = vor.u32 1.1754944e-38, %v2069
      %v2071 = vsel %vm2068, %v2070, %v2066
      %v2072 = vmul.f32 %v2047, %v2071
      %v2073 = vmin.f32 %v2072, 1.0
      %v2074 = vmax.f32 %v2073, -1.0
      %v2075 = vmul.f32 %v1825, %v1825
      %v2076 = vmin.f32 16.0, %v2075
      %v2077 = vmul.f32 %v2076, 2.1237322e-06
      %v2078 = vadd.f32 %v2077, 0.00028619796
      %v2079 = vmul.f32 %v2076, %v2078
      %v2080 = vadd.f32 %v2079, 0.0036580483
      %v2081 = vmul.f32 %v2076, %v2080
      %v2082 = vadd.f32 %v2081, 0.05243302
      %v2083 = vmul.f32 %v2076, %v2082
      %v2084 = vadd.f32 %v2083, 0.18741608
      %v2085 = vmul.f32 %v2076, %v2084
      %v2086 = vadd.f32 %v2085, 1.1283791
      %v2087 = vmul.f32 %v1825, %v2086
      %v2088 = vmul.f32 %v2076, 3.8918573e-05
      %v2089 = vadd.f32 %v2088, 0.001143296
      %v2090 = vmul.f32 %v2076, %v2089
      %v2091 = vadd.f32 %v2090, 0.014752088
      %v2092 = vmul.f32 %v2076, %v2091
      %v2093 = vadd.f32 %v2092, 0.112945676
      %v2094 = vmul.f32 %v2076, %v2093
      %v2095 = vadd.f32 %v2094, 0.4994258
      %v2096 = vmul.f32 %v2076, %v2095
      %v2097 = vadd.f32 %v2096, 1.0
      %v2098 = vrcp.pop %v2097
      %v2099 = vmul.f32 %v2097, %v2098
      %v2100 = vsub.f32 1.0, %v2099
      %v2101 = vmul.f32 %v2098, %v2100
      %v2102 = vadd.f32 %v2098, %v2101
      %vm2103 = vweird.f32 %v2097
      %vm2104 = vweird.f32 %v2098
      %vm2105 = vmor %vm2103, %vm2104
      %v2106 = vsel %vm2105, %v2098, %v2102
      %v2107 = vand.u32 2147483647, %v2097
      %vm2108 = vcmp.eq.f32.partialorder %v2107, 8.507059e+37
      %v2109 = vand.u32 %v2097, 2147483648
      %v2110 = vor.u32 1.1754944e-38, %v2109
      %v2111 = vsel %vm2108, %v2110, %v2106
      %v2112 = vmul.f32 %v2087, %v2111
      %v2113 = vmin.f32 %v2112, 1.0
      %v2114 = vmax.f32 %v2113, -1.0
      %v2115 = vmul.f32 %v1826, %v1826
      %v2116 = vmin.f32 16.0, %v2115
      %v2117 = vmul.f32 %v2116, 2.1237322e-06
      %v2118 = vadd.f32 %v2117, 0.00028619796
      %v2119 = vmul.f32 %v2116, %v2118
      %v2120 = vadd.f32 %v2119, 0.0036580483
      %v2121 = vmul.f32 %v2116, %v2120
      %v2122 = vadd.f32 %v2121, 0.05243302
      %v2123 = vmul.f32 %v2116, %v2122
      %v2124 = vadd.f32 %v2123, 0.18741608
      %v2125 = vmul.f32 %v2116, %v2124
      %v2126 = vadd.f32 %v2125, 1.1283791
      %v2127 = vmul.f32 %v1826, %v2126
      %v2128 = vmul.f32 %v2116, 3.8918573e-05
      %v2129 = vadd.f32 %v2128, 0.001143296
      %v2130 = vmul.f32 %v2116, %v2129
      %v2131 = vadd.f32 %v2130, 0.014752088
      %v2132 = vmul.f32 %v2116, %v2131
      %v2133 = vadd.f32 %v2132, 0.112945676
      %v2134 = vmul.f32 %v2116, %v2133
      %v2135 = vadd.f32 %v2134, 0.4994258
      %v2136 = vmul.f32 %v2116, %v2135
      %v2137 = vadd.f32 %v2136, 1.0
      %v2138 = vrcp.pop %v2137
      %v2139 = vmul.f32 %v2137, %v2138
      %v2140 = vsub.f32 1.0, %v2139
      %v2141 = vmul.f32 %v2138, %v2140
      %v2142 = vadd.f32 %v2138, %v2141
      %vm2143 = vweird.f32 %v2137
      %vm2144 = vweird.f32 %v2138
      %vm2145 = vmor %vm2143, %vm2144
      %v2146 = vsel %vm2145, %v2138, %v2142
      %v2147 = vand.u32 2147483647, %v2137
      %vm2148 = vcmp.eq.f32.partialorder %v2147, 8.507059e+37
      %v2149 = vand.u32 %v2137, 2147483648
      %v2150 = vor.u32 1.1754944e-38, %v2149
      %v2151 = vsel %vm2148, %v2150, %v2146
      %v2152 = vmul.f32 %v2127, %v2151
      %v2153 = vmin.f32 %v2152, 1.0
      %v2154 = vmax.f32 %v2153, -1.0
      %v2155 = vmul.f32 %v1827, %v1827
      %v2156 = vmin.f32 16.0, %v2155
      %v2157 = vmul.f32 %v2156, 2.1237322e-06
      %v2158 = vadd.f32 %v2157, 0.00028619796
      %v2159 = vmul.f32 %v2156, %v2158
      %v2160 = vadd.f32 %v2159, 0.0036580483
      %v2161 = vmul.f32 %v2156, %v2160
      %v2162 = vadd.f32 %v2161, 0.05243302
      %v2163 = vmul.f32 %v2156, %v2162
      %v2164 = vadd.f32 %v2163, 0.18741608
      %v2165 = vmul.f32 %v2156, %v2164
      %v2166 = vadd.f32 %v2165, 1.1283791
      %v2167 = vmul.f32 %v1827, %v2166
      %v2168 = vmul.f32 %v2156, 3.8918573e-05
      %v2169 = vadd.f32 %v2168, 0.001143296
      %v2170 = vmul.f32 %v2156, %v2169
      %v2171 = vadd.f32 %v2170, 0.014752088
      %v2172 = vmul.f32 %v2156, %v2171
      %v2173 = vadd.f32 %v2172, 0.112945676
      %v2174 = vmul.f32 %v2156, %v2173
      %v2175 = vadd.f32 %v2174, 0.4994258
      %v2176 = vmul.f32 %v2156, %v2175
      %v2177 = vadd.f32 %v2176, 1.0
      %v2178 = vrcp.pop %v2177
      %v2179 = vmul.f32 %v2177, %v2178
      %v2180 = vsub.f32 1.0, %v2179
      %v2181 = vmul.f32 %v2178, %v2180
      %v2182 = vadd.f32 %v2178, %v2181
      %vm2183 = vweird.f32 %v2177
      %vm2184 = vweird.f32 %v2178
      %vm2185 = vmor %vm2183, %vm2184
      %v2186 = vsel %vm2185, %v2178, %v2182
      %v2187 = vand.u32 2147483647, %v2177
      %vm2188 = vcmp.eq.f32.partialorder %v2187, 8.507059e+37
      %v2189 = vand.u32 %v2177, 2147483648
      %v2190 = vor.u32 1.1754944e-38, %v2189
      %v2191 = vsel %vm2188, %v2190, %v2186
      %v2192 = vmul.f32 %v2167, %v2191
      %v2193 = vmin.f32 %v2192, 1.0
      %v2194 = vmax.f32 %v2193, -1.0
      %v2195 = vmul.f32 %v1828, %v1828
      %v2196 = vmin.f32 16.0, %v2195
      %v2197 = vmul.f32 %v2196, 2.1237322e-06
      %v2198 = vadd.f32 %v2197, 0.00028619796
      %v2199 = vmul.f32 %v2196, %v2198
      %v2200 = vadd.f32 %v2199, 0.0036580483
      %v2201 = vmul.f32 %v2196, %v2200
      %v2202 = vadd.f32 %v2201, 0.05243302
      %v2203 = vmul.f32 %v2196, %v2202
      %v2204 = vadd.f32 %v2203, 0.18741608
      %v2205 = vmul.f32 %v2196, %v2204
      %v2206 = vadd.f32 %v2205, 1.1283791
      %v2207 = vmul.f32 %v1828, %v2206
      %v2208 = vmul.f32 %v2196, 3.8918573e-05
      %v2209 = vadd.f32 %v2208, 0.001143296
      %v2210 = vmul.f32 %v2196, %v2209
      %v2211 = vadd.f32 %v2210, 0.014752088
      %v2212 = vmul.f32 %v2196, %v2211
      %v2213 = vadd.f32 %v2212, 0.112945676
      %v2214 = vmul.f32 %v2196, %v2213
      %v2215 = vadd.f32 %v2214, 0.4994258
      %v2216 = vmul.f32 %v2196, %v2215
      %v2217 = vadd.f32 %v2216, 1.0
      %v2218 = vrcp.pop %v2217
      %v2219 = vmul.f32 %v2217, %v2218
      %v2220 = vsub.f32 1.0, %v2219
      %v2221 = vmul.f32 %v2218, %v2220
      %v2222 = vadd.f32 %v2218, %v2221
      %vm2223 = vweird.f32 %v2217
      %vm2224 = vweird.f32 %v2218
      %vm2225 = vmor %vm2223, %vm2224
      %v2226 = vsel %vm2225, %v2218, %v2222
      %v2227 = vand.u32 2147483647, %v2217
      %vm2228 = vcmp.eq.f32.partialorder %v2227, 8.507059e+37
      %v2229 = vand.u32 %v2217, 2147483648
      %v2230 = vor.u32 1.1754944e-38, %v2229
      %v2231 = vsel %vm2228, %v2230, %v2226
      %v2232 = vmul.f32 %v2207, %v2231
      %v2233 = vmin.f32 %v2232, 1.0
      %v2234 = vmax.f32 %v2233, -1.0
      %v2235 = vmul.f32 %v1829, %v1829
      %v2236 = vmin.f32 16.0, %v2235
      %v2237 = vmul.f32 %v2236, 2.1237322e-06
      %v2238 = vadd.f32 %v2237, 0.00028619796
      %v2239 = vmul.f32 %v2236, %v2238
      %v2240 = vadd.f32 %v2239, 0.0036580483
      %v2241 = vmul.f32 %v2236, %v2240
      %v2242 = vadd.f32 %v2241, 0.05243302
      %v2243 = vmul.f32 %v2236, %v2242
      %v2244 = vadd.f32 %v2243, 0.18741608
      %v2245 = vmul.f32 %v2236, %v2244
      %v2246 = vadd.f32 %v2245, 1.1283791
      %v2247 = vmul.f32 %v1829, %v2246
      %v2248 = vmul.f32 %v2236, 3.8918573e-05
      %v2249 = vadd.f32 %v2248, 0.001143296
      %v2250 = vmul.f32 %v2236, %v2249
      %v2251 = vadd.f32 %v2250, 0.014752088
      %v2252 = vmul.f32 %v2236, %v2251
      %v2253 = vadd.f32 %v2252, 0.112945676
      %v2254 = vmul.f32 %v2236, %v2253
      %v2255 = vadd.f32 %v2254, 0.4994258
      %v2256 = vmul.f32 %v2236, %v2255
      %v2257 = vadd.f32 %v2256, 1.0
      %v2258 = vrcp.pop %v2257
      %v2259 = vmul.f32 %v2257, %v2258
      %v2260 = vsub.f32 1.0, %v2259
      %v2261 = vmul.f32 %v2258, %v2260
      %v2262 = vadd.f32 %v2258, %v2261
      %vm2263 = vweird.f32 %v2257
      %vm2264 = vweird.f32 %v2258
      %vm2265 = vmor %vm2263, %vm2264
      %v2266 = vsel %vm2265, %v2258, %v2262
      %v2267 = vand.u32 2147483647, %v2257
      %vm2268 = vcmp.eq.f32.partialorder %v2267, 8.507059e+37
      %v2269 = vand.u32 %v2257, 2147483648
      %v2270 = vor.u32 1.1754944e-38, %v2269
      %v2271 = vsel %vm2268, %v2270, %v2266
      %v2272 = vmul.f32 %v2247, %v2271
      %v2273 = vmin.f32 %v2272, 1.0
      %v2274 = vmax.f32 %v2273, -1.0
      %v2275 = vmul.f32 %v1830, %v1830
      %v2276 = vmin.f32 16.0, %v2275
      %v2277 = vmul.f32 %v2276, 2.1237322e-06
      %v2278 = vadd.f32 %v2277, 0.00028619796
      %v2279 = vmul.f32 %v2276, %v2278
      %v2280 = vadd.f32 %v2279, 0.0036580483
      %v2281 = vmul.f32 %v2276, %v2280
      %v2282 = vadd.f32 %v2281, 0.05243302
      %v2283 = vmul.f32 %v2276, %v2282
      %v2284 = vadd.f32 %v2283, 0.18741608
      %v2285 = vmul.f32 %v2276, %v2284
      %v2286 = vadd.f32 %v2285, 1.1283791
      %v2287 = vmul.f32 %v1830, %v2286
      %v2288 = vmul.f32 %v2276, 3.8918573e-05
      %v2289 = vadd.f32 %v2288, 0.001143296
      %v2290 = vmul.f32 %v2276, %v2289
      %v2291 = vadd.f32 %v2290, 0.014752088
      %v2292 = vmul.f32 %v2276, %v2291
      %v2293 = vadd.f32 %v2292, 0.112945676
      %v2294 = vmul.f32 %v2276, %v2293
      %v2295 = vadd.f32 %v2294, 0.4994258
      %v2296 = vmul.f32 %v2276, %v2295
      %v2297 = vadd.f32 %v2296, 1.0
      %v2298 = vrcp.pop %v2297
      %v2299 = vmul.f32 %v2297, %v2298
      %v2300 = vsub.f32 1.0, %v2299
      %v2301 = vmul.f32 %v2298, %v2300
      %v2302 = vadd.f32 %v2298, %v2301
      %vm2303 = vweird.f32 %v2297
      %vm2304 = vweird.f32 %v2298
      %vm2305 = vmor %vm2303, %vm2304
      %v2306 = vsel %vm2305, %v2298, %v2302
      %v2307 = vand.u32 2147483647, %v2297
      %vm2308 = vcmp.eq.f32.partialorder %v2307, 8.507059e+37
      %v2309 = vand.u32 %v2297, 2147483648
      %v2310 = vor.u32 1.1754944e-38, %v2309
      %v2311 = vsel %vm2308, %v2310, %v2306
      %v2312 = vmul.f32 %v2287, %v2311
      %v2313 = vmin.f32 %v2312, 1.0
      %v2314 = vmax.f32 %v2313, -1.0
      %v2315 = vmul.f32 %v1831, %v1831
      %v2316 = vmin.f32 16.0, %v2315
      %v2317 = vmul.f32 %v2316, 2.1237322e-06
      %v2318 = vadd.f32 %v2317, 0.00028619796
      %v2319 = vmul.f32 %v2316, %v2318
      %v2320 = vadd.f32 %v2319, 0.0036580483
      %v2321 = vmul.f32 %v2316, %v2320
      %v2322 = vadd.f32 %v2321, 0.05243302
      %v2323 = vmul.f32 %v2316, %v2322
      %v2324 = vadd.f32 %v2323, 0.18741608
      %v2325 = vmul.f32 %v2316, %v2324
      %v2326 = vadd.f32 %v2325, 1.1283791
      %v2327 = vmul.f32 %v1831, %v2326
      %v2328 = vmul.f32 %v2316, 3.8918573e-05
      %v2329 = vadd.f32 %v2328, 0.001143296
      %v2330 = vmul.f32 %v2316, %v2329
      %v2331 = vadd.f32 %v2330, 0.014752088
      %v2332 = vmul.f32 %v2316, %v2331
      %v2333 = vadd.f32 %v2332, 0.112945676
      %v2334 = vmul.f32 %v2316, %v2333
      %v2335 = vadd.f32 %v2334, 0.4994258
      %v2336 = vmul.f32 %v2316, %v2335
      %v2337 = vadd.f32 %v2336, 1.0
      %v2338 = vrcp.pop %v2337
      %v2339 = vmul.f32 %v2337, %v2338
      %v2340 = vsub.f32 1.0, %v2339
      %v2341 = vmul.f32 %v2338, %v2340
      %v2342 = vadd.f32 %v2338, %v2341
      %vm2343 = vweird.f32 %v2337
      %vm2344 = vweird.f32 %v2338
      %vm2345 = vmor %vm2343, %vm2344
      %v2346 = vsel %vm2345, %v2338, %v2342
      %v2347 = vand.u32 2147483647, %v2337
      %vm2348 = vcmp.eq.f32.partialorder %v2347, 8.507059e+37
      %v2349 = vand.u32 %v2337, 2147483648
      %v2350 = vor.u32 1.1754944e-38, %v2349
      %v2351 = vsel %vm2348, %v2350, %v2346
      %v2352 = vmul.f32 %v2327, %v2351
      %v2353 = vmin.f32 %v2352, 1.0
      %v2354 = vmax.f32 %v2353, -1.0
      %v2355 = vmul.f32 %v1832, %v1832
      %v2356 = vmin.f32 16.0, %v2355
      %v2357 = vmul.f32 %v2356, 2.1237322e-06
      %v2358 = vadd.f32 %v2357, 0.00028619796
      %v2359 = vmul.f32 %v2356, %v2358
      %v2360 = vadd.f32 %v2359, 0.0036580483
      %v2361 = vmul.f32 %v2356, %v2360
      %v2362 = vadd.f32 %v2361, 0.05243302
      %v2363 = vmul.f32 %v2356, %v2362
      %v2364 = vadd.f32 %v2363, 0.18741608
      %v2365 = vmul.f32 %v2356, %v2364
      %v2366 = vadd.f32 %v2365, 1.1283791
      %v2367 = vmul.f32 %v1832, %v2366
      %v2368 = vmul.f32 %v2356, 3.8918573e-05
      %v2369 = vadd.f32 %v2368, 0.001143296
      %v2370 = vmul.f32 %v2356, %v2369
      %v2371 = vadd.f32 %v2370, 0.014752088
      %v2372 = vmul.f32 %v2356, %v2371
      %v2373 = vadd.f32 %v2372, 0.112945676
      %v2374 = vmul.f32 %v2356, %v2373
      %v2375 = vadd.f32 %v2374, 0.4994258
      %v2376 = vmul.f32 %v2356, %v2375
      %v2377 = vadd.f32 %v2376, 1.0
      %v2378 = vrcp.pop %v2377
      %v2379 = vmul.f32 %v2377, %v2378
      %v2380 = vsub.f32 1.0, %v2379
      %v2381 = vmul.f32 %v2378, %v2380
      %v2382 = vadd.f32 %v2378, %v2381
      %vm2383 = vweird.f32 %v2377
      %vm2384 = vweird.f32 %v2378
      %vm2385 = vmor %vm2383, %vm2384
      %v2386 = vsel %vm2385, %v2378, %v2382
      %v2387 = vand.u32 2147483647, %v2377
      %vm2388 = vcmp.eq.f32.partialorder %v2387, 8.507059e+37
      %v2389 = vand.u32 %v2377, 2147483648
      %v2390 = vor.u32 1.1754944e-38, %v2389
      %v2391 = vsel %vm2388, %v2390, %v2386
      %v2392 = vmul.f32 %v2367, %v2391
      %v2393 = vmin.f32 %v2392, 1.0
      %v2394 = vmax.f32 %v2393, -1.0
      %v2395 = vmul.f32 %v1833, %v1833
      %v2396 = vmin.f32 16.0, %v2395
      %v2397 = vmul.f32 %v2396, 2.1237322e-06
      %v2398 = vadd.f32 %v2397, 0.00028619796
      %v2399 = vmul.f32 %v2396, %v2398
      %v2400 = vadd.f32 %v2399, 0.0036580483
      %v2401 = vmul.f32 %v2396, %v2400
      %v2402 = vadd.f32 %v2401, 0.05243302
      %v2403 = vmul.f32 %v2396, %v2402
      %v2404 = vadd.f32 %v2403, 0.18741608
      %v2405 = vmul.f32 %v2396, %v2404
      %v2406 = vadd.f32 %v2405, 1.1283791
      %v2407 = vmul.f32 %v1833, %v2406
      %v2408 = vmul.f32 %v2396, 3.8918573e-05
      %v2409 = vadd.f32 %v2408, 0.001143296
      %v2410 = vmul.f32 %v2396, %v2409
      %v2411 = vadd.f32 %v2410, 0.014752088
      %v2412 = vmul.f32 %v2396, %v2411
      %v2413 = vadd.f32 %v2412, 0.112945676
      %v2414 = vmul.f32 %v2396, %v2413
      %v2415 = vadd.f32 %v2414, 0.4994258
      %v2416 = vmul.f32 %v2396, %v2415
      %v2417 = vadd.f32 %v2416, 1.0
      %v2418 = vrcp.pop %v2417
      %v2419 = vmul.f32 %v2417, %v2418
      %v2420 = vsub.f32 1.0, %v2419
      %v2421 = vmul.f32 %v2418, %v2420
      %v2422 = vadd.f32 %v2418, %v2421
      %vm2423 = vweird.f32 %v2417
      %vm2424 = vweird.f32 %v2418
      %vm2425 = vmor %vm2423, %vm2424
      %v2426 = vsel %vm2425, %v2418, %v2422
      %v2427 = vand.u32 2147483647, %v2417
      %vm2428 = vcmp.eq.f32.partialorder %v2427, 8.507059e+37
      %v2429 = vand.u32 %v2417, 2147483648
      %v2430 = vor.u32 1.1754944e-38, %v2429
      %v2431 = vsel %vm2428, %v2430, %v2426
      %v2432 = vmul.f32 %v2407, %v2431
      %v2433 = vmin.f32 %v2432, 1.0
      %v2434 = vmax.f32 %v2433, -1.0
      %v2435 = vmul.f32 %v1834, %v1834
      %v2436 = vmin.f32 16.0, %v2435
      %v2437 = vmul.f32 %v2436, 2.1237322e-06
      %v2438 = vadd.f32 %v2437, 0.00028619796
      %v2439 = vmul.f32 %v2436, %v2438
      %v2440 = vadd.f32 %v2439, 0.0036580483
      %v2441 = vmul.f32 %v2436, %v2440
      %v2442 = vadd.f32 %v2441, 0.05243302
      %v2443 = vmul.f32 %v2436, %v2442
      %v2444 = vadd.f32 %v2443, 0.18741608
      %v2445 = vmul.f32 %v2436, %v2444
      %v2446 = vadd.f32 %v2445, 1.1283791
      %v2447 = vmul.f32 %v1834, %v2446
      %v2448 = vmul.f32 %v2436, 3.8918573e-05
      %v2449 = vadd.f32 %v2448, 0.001143296
      %v2450 = vmul.f32 %v2436, %v2449
      %v2451 = vadd.f32 %v2450, 0.014752088
      %v2452 = vmul.f32 %v2436, %v2451
      %v2453 = vadd.f32 %v2452, 0.112945676
      %v2454 = vmul.f32 %v2436, %v2453
      %v2455 = vadd.f32 %v2454, 0.4994258
      %v2456 = vmul.f32 %v2436, %v2455
      %v2457 = vadd.f32 %v2456, 1.0
      %v2458 = vrcp.pop %v2457
      %v2459 = vmul.f32 %v2457, %v2458
      %v2460 = vsub.f32 1.0, %v2459
      %v2461 = vmul.f32 %v2458, %v2460
      %v2462 = vadd.f32 %v2458, %v2461
      %vm2463 = vweird.f32 %v2457
      %vm2464 = vweird.f32 %v2458
      %vm2465 = vmor %vm2463, %vm2464
      %v2466 = vsel %vm2465, %v2458, %v2462
      %v2467 = vand.u32 2147483647, %v2457
      %vm2468 = vcmp.eq.f32.partialorder %v2467, 8.507059e+37
      %v2469 = vand.u32 %v2457, 2147483648
      %v2470 = vor.u32 1.1754944e-38, %v2469
      %v2471 = vsel %vm2468, %v2470, %v2466
      %v2472 = vmul.f32 %v2447, %v2471
      %v2473 = vmin.f32 %v2472, 1.0
      %v2474 = vmax.f32 %v2473, -1.0
      %v2475 = vadd.f32 %v1874, 1.0
      %v2476 = vadd.f32 %v1914, 1.0
      %v2477 = vadd.f32 %v1954, 1.0
      %v2478 = vadd.f32 %v1994, 1.0
      %v2479 = vadd.f32 %v2034, 1.0
      %v2480 = vadd.f32 %v2074, 1.0
      %v2481 = vadd.f32 %v2114, 1.0
      %v2482 = vadd.f32 %v2154, 1.0
      %v2483 = vadd.f32 %v2194, 1.0
      %v2484 = vadd.f32 %v2234, 1.0
      %v2485 = vadd.f32 %v2274, 1.0
      %v2486 = vadd.f32 %v2314, 1.0
      %v2487 = vadd.f32 %v2354, 1.0
      %v2488 = vadd.f32 %v2394, 1.0
      %v2489 = vadd.f32 %v2434, 1.0
      %v2490 = vadd.f32 %v2474, 1.0
      %v2491 = vmul.f32 %v1803, %v2475
      %v2492 = vmul.f32 %v1804, %v2476
      %v2493 = vmul.f32 %v1805, %v2477
      %v2494 = vmul.f32 %v1806, %v2478
      %v2495 = vmul.f32 %v1807, %v2479
      %v2496 = vmul.f32 %v1808, %v2480
      %v2497 = vmul.f32 %v1809, %v2481
      %v2498 = vmul.f32 %v1810, %v2482
      %v2499 = vmul.f32 %v1811, %v2483
      %v2500 = vmul.f32 %v1812, %v2484
      %v2501 = vmul.f32 %v1813, %v2485
      %v2502 = vmul.f32 %v1814, %v2486
      %v2503 = vmul.f32 %v1815, %v2487
      %v2504 = vmul.f32 %v1816, %v2488
      %v2505 = vmul.f32 %v1817, %v2489
      %v2506 = vmul.f32 %v1818, %v2490
      %2507 = vst [vmem:[%s260] sm:$0xff] %v2491
      %2508 = vst [vmem:[%s260 + $0x8] sm:$0xff] %v2492
      %2509 = vst [vmem:[%s260 + $0x10] sm:$0xff] %v2493
      %2510 = vst [vmem:[%s260 + $0x18] sm:$0xff] %v2494
      %2511 = vst [vmem:[%s260 + $0x20] sm:$0xff] %v2495
      %2512 = vst [vmem:[%s260 + $0x28] sm:$0xff] %v2496
      %2513 = vst [vmem:[%s260 + $0x30] sm:$0xff] %v2497
      %2514 = vst [vmem:[%s260 + $0x38] sm:$0xff] %v2498
      %2515 = vst [vmem:[%s260 + $0x40] sm:$0xff] %v2499
      %2516 = vst [vmem:[%s260 + $0x48] sm:$0xff] %v2500
      %2517 = vst [vmem:[%s260 + $0x50] sm:$0xff] %v2501
      %2518 = vst [vmem:[%s260 + $0x58] sm:$0xff] %v2502
      %2519 = vst [vmem:[%s260 + $0x60] sm:$0xff] %v2503
      %2520 = vst [vmem:[%s260 + $0x68] sm:$0xff] %v2504
      %2521 = vst [vmem:[%s260 + $0x70] sm:$0xff] %v2505
      %2522 = vst [vmem:[%s260 + $0x78] sm:$0xff] %v2506
      %2523 = vadd.xlane.f32.xlu0 %v2491
      %v2524 = vpop.xlane.xlu0 %2523
      %2525 = vadd.xlane.f32.xlu0 %v2492
      %v2526 = vpop.xlane.xlu0 %2525
      %2527 = vadd.xlane.f32.xlu0 %v2493
      %v2528 = vpop.xlane.xlu0 %2527
      %2529 = vadd.xlane.f32.xlu0 %v2494
      %v2530 = vpop.xlane.xlu0 %2529
      %2531 = vadd.xlane.f32.xlu0 %v2495
      %v2532 = vpop.xlane.xlu0 %2531
      %2533 = vadd.xlane.f32.xlu0 %v2496
      %v2534 = vpop.xlane.xlu0 %2533
      %2535 = vadd.xlane.f32.xlu0 %v2497
      %v2536 = vpop.xlane.xlu0 %2535
      %2537 = vadd.xlane.f32.xlu0 %v2498
      %v2538 = vpop.xlane.xlu0 %2537
      %2539 = vadd.xlane.f32.xlu0 %v2499
      %v2540 = vpop.xlane.xlu0 %2539
      %2541 = vadd.xlane.f32.xlu0 %v2500
      %v2542 = vpop.xlane.xlu0 %2541
      %2543 = vadd.xlane.f32.xlu0 %v2501
      %v2544 = vpop.xlane.xlu0 %2543
      %2545 = vadd.xlane.f32.xlu0 %v2502
      %v2546 = vpop.xlane.xlu0 %2545
      %2547 = vadd.xlane.f32.xlu0 %v2503
      %v2548 = vpop.xlane.xlu0 %2547
      %2549 = vadd.xlane.f32.xlu0 %v2504
      %v2550 = vpop.xlane.xlu0 %2549
      %2551 = vadd.xlane.f32.xlu0 %v2505
      %v2552 = vpop.xlane.xlu0 %2551
      %2553 = vadd.xlane.f32.xlu0 %v2506
      %v2554 = vpop.xlane.xlu0 %2553
      %v2555 = vmul.f32 %v2491, %v2491
      %v2556 = vmul.f32 %v2492, %v2492
      %v2557 = vmul.f32 %v2493, %v2493
      %v2558 = vmul.f32 %v2494, %v2494
      %v2559 = vmul.f32 %v2495, %v2495
      %v2560 = vmul.f32 %v2496, %v2496
      %v2561 = vmul.f32 %v2497, %v2497
      %v2562 = vmul.f32 %v2498, %v2498
      %v2563 = vmul.f32 %v2499, %v2499
      %v2564 = vmul.f32 %v2500, %v2500
      %v2565 = vmul.f32 %v2501, %v2501
      %v2566 = vmul.f32 %v2502, %v2502
      %v2567 = vmul.f32 %v2503, %v2503
      %v2568 = vmul.f32 %v2504, %v2504
      %v2569 = vmul.f32 %v2505, %v2505
      %v2570 = vmul.f32 %v2506, %v2506
      %2571 = vadd.xlane.f32.xlu0 %v2555
      %v2572 = vpop.xlane.xlu0 %2571
      %2573 = vadd.xlane.f32.xlu0 %v2556
      %v2574 = vpop.xlane.xlu0 %2573
      %2575 = vadd.xlane.f32.xlu0 %v2557
      %v2576 = vpop.xlane.xlu0 %2575
      %2577 = vadd.xlane.f32.xlu0 %v2558
      %v2578 = vpop.xlane.xlu0 %2577
      %2579 = vadd.xlane.f32.xlu0 %v2559
      %v2580 = vpop.xlane.xlu0 %2579
      %2581 = vadd.xlane.f32.xlu0 %v2560
      %v2582 = vpop.xlane.xlu0 %2581
      %2583 = vadd.xlane.f32.xlu0 %v2561
      %v2584 = vpop.xlane.xlu0 %2583
      %2585 = vadd.xlane.f32.xlu0 %v2562
      %v2586 = vpop.xlane.xlu0 %2585
      %2587 = vadd.xlane.f32.xlu0 %v2563
      %v2588 = vpop.xlane.xlu0 %2587
      %2589 = vadd.xlane.f32.xlu0 %v2564
      %v2590 = vpop.xlane.xlu0 %2589
      %2591 = vadd.xlane.f32.xlu0 %v2565
      %v2592 = vpop.xlane.xlu0 %2591
      %2593 = vadd.xlane.f32.xlu0 %v2566
      %v2594 = vpop.xlane.xlu0 %2593
      %2595 = vadd.xlane.f32.xlu0 %v2567
      %v2596 = vpop.xlane.xlu0 %2595
      %2597 = vadd.xlane.f32.xlu0 %v2568
      %v2598 = vpop.xlane.xlu0 %2597
      %2599 = vadd.xlane.f32.xlu0 %v2569
      %v2600 = vpop.xlane.xlu0 %2599
      %2601 = vadd.xlane.f32.xlu0 %v2570
      %v2602 = vpop.xlane.xlu0 %2601
      %vm2603 = vcmask 7168
      %v2604 = vsel %vm2603, %v2524, %v2572
      %v2605 = vsel %vm2603, %v2526, %v2574
      %v2606 = vsel %vm2603, %v2528, %v2576
      %v2607 = vsel %vm2603, %v2530, %v2578
      %v2608 = vsel %vm2603, %v2532, %v2580
      %v2609 = vsel %vm2603, %v2534, %v2582
      %v2610 = vsel %vm2603, %v2536, %v2584
      %v2611 = vsel %vm2603, %v2538, %v2586
      %v2612 = vsel %vm2603, %v2540, %v2588
      %v2613 = vsel %vm2603, %v2542, %v2590
      %v2614 = vsel %vm2603, %v2544, %v2592
      %v2615 = vsel %vm2603, %v2546, %v2594
      %v2616 = vsel %vm2603, %v2548, %v2596
      %v2617 = vsel %vm2603, %v2550, %v2598
      %v2618 = vsel %vm2603, %v2552, %v2600
      %v2619 = vsel %vm2603, %v2554, %v2602
      %2620 = vxpose.xlu0.b32.start [1/16] %v2604, 128
      %2621 = vxpose.xlu0.b32.cont [2/16] %v2605, 128
      %2622 = vxpose.xlu0.b32.cont [3/16] %v2606, 128
      %2623 = vxpose.xlu0.b32.cont [4/16] %v2607, 128
      %2624 = vxpose.xlu0.b32.cont [5/16] %v2608, 128
      %2625 = vxpose.xlu0.b32.cont [6/16] %v2609, 128
      %2626 = vxpose.xlu0.b32.cont [7/16] %v2610, 128
      %2627 = vxpose.xlu0.b32.cont [8/16] %v2611, 128
      %2628 = vxpose.xlu0.b32.cont [9/16] %v2612, 128
      %2629 = vxpose.xlu0.b32.cont [10/16] %v2613, 128
      %2630 = vxpose.xlu0.b32.cont [11/16] %v2614, 128
      %2631 = vxpose.xlu0.b32.cont [12/16] %v2615, 128
      %2632 = vxpose.xlu0.b32.cont [13/16] %v2616, 128
      %2633 = vxpose.xlu0.b32.cont [14/16] %v2617, 128
      %2634 = vxpose.xlu0.b32.cont [15/16] %v2618, 128
      %2635 = vxpose.xlu0.b32.end [16/16] %v2619, 128
      %v2636 = vpop.trf.xlu0
      %v2637 = vpop.trf.xlu0
      %v2638 = vpop.trf.xlu0
      %v2639 = vpop.trf.xlu0
      %v2640 = vpop.trf.xlu0
      %v2641 = vpop.trf.xlu0
      %v2642 = vpop.trf.xlu0
      %v2643 = vpop.trf.xlu0
      %v2644 = vpop.trf.xlu0
      %v2645 = vpop.trf.xlu0
      %v2646 = vpop.trf.xlu0
      %v2647 = vpop.trf.xlu0
      %v2648 = vpop.trf.xlu0
      %v2649 = vpop.trf.xlu0
      %v2650 = vpop.trf.xlu0
      %v2651 = vpop.trf.xlu0
      %2652 = vst [vmem:[%s269] sm:$0x3] %v2636
      %s2653 = smul.u32 16, %s21
      %p2654 = scmp.lt.s32.totalorder %s2653, 31
      %s2655 = scalar_select %p2654, %s2653, 31
      %p2656 = scmp.lt.s32.totalorder %s20, 0
      %s2657 = scalar_select %p2656, %s20, 0
      %s2658 = sadd.s32 %s2657, %s2655
      %s2659 = smul.addr %s2658, 8
      %s2660 = scalar_lea.vmem %s3, %s2659
      %p2661 = scmp.lt.s32.totalorder %s20, 0
      %s2662 = scalar_select %p2661, %s20, 0
      %p2663 = scmp.lt.s32.totalorder %s21, 1
      %s2664 = scalar_select %p2663, %s21, 1
      %s2665 = smul.addr %s2662, 2
      %s2666 = sadd.s32 %s2664, %s2665
      %s2667 = smul.addr %s2666, 2
      %s2668 = scalar_lea.vmem %s4, %s2667
      // Predicated region
      $region33: #{conv_upsampling.2} parent=31 // pred_check
        %p2669 = pneg %p121
      $region34: #{conv_upsampling.2} parent=31 // pred_check_branch
        %2671 = sbr.rel (%p2669) target = $region36
      $region35: #{conv_upsampling.2} parent=31 // pred_region
        %s2672 = smul.u32 16, %s21
      $region36: #{conv_upsampling.2} parent=31 // pred_fallthru
        _
      // Predicated region
      $region37: #{conv_upsampling.2} parent=31 // pred_check
        %p2673 = pneg %p149
      $region38: #{conv_upsampling.2} parent=31 // pred_check_branch
        %2675 = sbr.rel (%p2673) target = $region40
      $region39: #{conv_upsampling.2} parent=31 // pred_region
        _
      $region40: #{conv_upsampling.2} parent=31 // pred_fallthru
        _
    $region32: #{conv_upsampling.2} parent=5 // pred_fallthru
      _
    %p2676 = scmp.le.s32.totalorder 2, %s11
    // Predicated region
    $region41: #{conv_upsampling.2} parent=5 // pred_check
      %p2677 = pneg %p2676
    $region42: #{conv_upsampling.2} parent=5 // pred_check_branch
      %2679 = sbr.rel (%p2677) target = $region44
    $region43: #{conv_upsampling.2} parent=5 // pred_region
      %s2680 = ssub.s32 %s11, 2
      // Predicated region
      $region45: #{conv_upsampling.2} parent=43 // pred_check
        %p2681 = pneg %p127
      $region46: #{conv_upsampling.2} parent=43 // pred_check_branch
        %2683 = sbr.rel (%p2681) target = $region48
      $region47: #{conv_upsampling.2} parent=43 // pred_region
        %s2684 = smul.u32 16, %s23
        %p2685 = scmp.lt.s32.totalorder %s2684, 31
        %s2686 = scalar_select %p2685, %s2684, 31
        %p2687 = scmp.lt.s32.totalorder %s22, 0
        %s2688 = scalar_select %p2687, %s22, 0
        %s2689 = sadd.s32 %s2688, %s2686
        %s2690 = smul.addr %s2689, 8
        %s2691 = scalar_lea.vmem %s3, %s2690
      $region48: #{conv_upsampling.2} parent=43 // pred_fallthru
        _
      // Predicated region
      $region49: #{conv_upsampling.2} parent=43 // pred_check
        %p2692 = pneg %p155
      $region50: #{conv_upsampling.2} parent=43 // pred_check_branch
        %2694 = sbr.rel (%p2692) target = $region52
      $region51: #{conv_upsampling.2} parent=43 // pred_region
        %p2695 = scmp.lt.s32.totalorder %s22, 0
        %s2696 = scalar_select %p2695, %s22, 0
        %p2697 = scmp.lt.s32.totalorder %s23, 1
        %s2698 = scalar_select %p2697, %s23, 1
        %s2699 = smul.addr %s2696, 2
        %s2700 = sadd.s32 %s2698, %s2699
        %s2701 = smul.addr %s2700, 2
        %s2702 = scalar_lea.vmem %s4, %s2701
      $region52: #{conv_upsampling.2} parent=43 // pred_fallthru
        _
    $region44: #{conv_upsampling.2} parent=5 // pred_fallthru
      _
  $region6: #{conv_upsampling.2} parent=0 // loop_footer
    %s15 = sadd.s32 1, %s11
  $region7: #{conv_upsampling.2} parent=0 // loop_footer_branch
    %10 = sbr.rel target = $region3
  $region8: #{conv_upsampling.2} parent=0 // loop_exit
    _

// kernel: conv_upsampling.3
$region0: #{conv_upsampling.3}
  #allocation0 [shape = 'u32[]', space=smem, size = 0x4, offset = 0x4, fixed_abs, tag = 'smem constant byte address 0x4 - core index']
  #allocation1 [shape = 'u32[72,128]{1,0:T(1,128)}', space=vmem, size = 0x9000, scoped, tag = 'internal scratch']
  %s0 = inlined_call_operand.vmem [shape: f32[256,128], index: 0, kind: input, shape index: {}, may-alias: {0,3}]
  %s1 = inlined_call_operand.vmem [shape: f32[256,1], index: 1, kind: input, shape index: {}]
  %s2 = inlined_call_operand.vmem [shape: f32[256,1], index: 2, kind: input, shape index: {}]
  %s3 = inlined_call_operand.vmem [shape: f32[256,128], index: 3, kind: output, shape index: {}, may-alias: {0,3}]
  %s4 = sld [smem:[#allocation0]]
  $region22: #{conv_upsampling.3} parent=0
    _
  %s6 = ssub.s32 1, %s4
  %s7 = scalar_select 0, %s6, %s4
  // Predicated region
  $region2: #{conv_upsampling.3} parent=0 // pred_check
    _
  $region3: #{conv_upsampling.3} parent=0 // pred_check_branch
    %9 = sbr.rel (0) target = $region5
  $region4: #{conv_upsampling.3} parent=0 // pred_region
    _
  $region5: #{conv_upsampling.3} parent=0 // pred_fallthru
    _
  // Predicated region
  $region6: #{conv_upsampling.3} parent=0 // pred_check
    _
  $region7: #{conv_upsampling.3} parent=0 // pred_check_branch
    %11 = sbr.rel (0) target = $region9
  $region8: #{conv_upsampling.3} parent=0 // pred_region
    _
  $region9: #{conv_upsampling.3} parent=0 // pred_fallthru
    _
  // Predicated region
  $region10: #{conv_upsampling.3} parent=0 // pred_check
    _
  $region11: #{conv_upsampling.3} parent=0 // pred_check_branch
    %13 = sbr.rel (0) target = $region13
  $region12: #{conv_upsampling.3} parent=0 // pred_region
    _
  $region13: #{conv_upsampling.3} parent=0 // pred_fallthru
    _
  %v14 = vld [vmem:[%s0] sm:$0xff]
  %v15 = vld [vmem:[%s0 + $0x8] sm:$0xff]
  %v16 = vld [vmem:[%s0 + $0x10] sm:$0xff]
  %v17 = vld [vmem:[%s0 + $0x18] sm:$0xff]
  %v18 = vld [vmem:[%s0 + $0x20] sm:$0xff]
  %v19 = vld [vmem:[%s0 + $0x28] sm:$0xff]
  %v20 = vld [vmem:[%s0 + $0x30] sm:$0xff]
  %v21 = vld [vmem:[%s0 + $0x38] sm:$0xff]
  %v22 = vld [vmem:[%s0 + $0x40] sm:$0xff]
  %v23 = vld [vmem:[%s0 + $0x48] sm:$0xff]
  %v24 = vld [vmem:[%s0 + $0x50] sm:$0xff]
  %v25 = vld [vmem:[%s0 + $0x58] sm:$0xff]
  %v26 = vld [vmem:[%s0 + $0x60] sm:$0xff]
  %v27 = vld [vmem:[%s0 + $0x68] sm:$0xff]
  %v28 = vld [vmem:[%s0 + $0x70] sm:$0xff]
  %v29 = vld [vmem:[%s0 + $0x78] sm:$0xff]
  %v30 = vld [vmem:[%s0 + $0x80] sm:$0xff]
  %v31 = vld [vmem:[%s0 + $0x88] sm:$0xff]
  %v32 = vld [vmem:[%s0 + $0x90] sm:$0xff]
  %v33 = vld [vmem:[%s0 + $0x98] sm:$0xff]
  %v34 = vld [vmem:[%s0 + $0xa0] sm:$0xff]
  %v35 = vld [vmem:[%s0 + $0xa8] sm:$0xff]
  %v36 = vld [vmem:[%s0 + $0xb0] sm:$0xff]
  %v37 = vld [vmem:[%s0 + $0xb8] sm:$0xff]
  %v38 = vld [vmem:[%s0 + $0xc0] sm:$0xff]
  %v39 = vld [vmem:[%s0 + $0xc8] sm:$0xff]
  %v40 = vld [vmem:[%s0 + $0xd0] sm:$0xff]
  %v41 = vld [vmem:[%s0 + $0xd8] sm:$0xff]
  %v42 = vld [vmem:[%s0 + $0xe0] sm:$0xff]
  %v43 = vld [vmem:[%s0 + $0xe8] sm:$0xff]
  %v44 = vld [vmem:[%s0 + $0xf0] sm:$0xff]
  %v45 = vld [vmem:[%s0 + $0xf8] sm:$0xff]
  %v46 = vld [vmem:[%s1] sm:$0xff]
  %v47 = vld [vmem:[%s1 + $0x8] sm:$0xff]
  %v48 = vld [vmem:[%s1 + $0x10] sm:$0xff]
  %v49 = vld [vmem:[%s1 + $0x18] sm:$0xff]
  %v50 = vld [vmem:[%s1 + $0x20] sm:$0xff]
  %v51 = vld [vmem:[%s1 + $0x28] sm:$0xff]
  %v52 = vld [vmem:[%s1 + $0x30] sm:$0xff]
  %v53 = vld [vmem:[%s1 + $0x38] sm:$0xff]
  %v54 = vld [vmem:[%s1 + $0x40] sm:$0xff]
  %v55 = vld [vmem:[%s1 + $0x48] sm:$0xff]
  %v56 = vld [vmem:[%s1 + $0x50] sm:$0xff]
  %v57 = vld [vmem:[%s1 + $0x58] sm:$0xff]
  %v58 = vld [vmem:[%s1 + $0x60] sm:$0xff]
  %v59 = vld [vmem:[%s1 + $0x68] sm:$0xff]
  %v60 = vld [vmem:[%s1 + $0x70] sm:$0xff]
  %v61 = vld [vmem:[%s1 + $0x78] sm:$0xff]
  %v62 = vld [vmem:[%s1 + $0x80] sm:$0xff]
  %v63 = vld [vmem:[%s1 + $0x88] sm:$0xff]
  %v64 = vld [vmem:[%s1 + $0x90] sm:$0xff]
  %v65 = vld [vmem:[%s1 + $0x98] sm:$0xff]
  %v66 = vld [vmem:[%s1 + $0xa0] sm:$0xff]
  %v67 = vld [vmem:[%s1 + $0xa8] sm:$0xff]
  %v68 = vld [vmem:[%s1 + $0xb0] sm:$0xff]
  %v69 = vld [vmem:[%s1 + $0xb8] sm:$0xff]
  %v70 = vld [vmem:[%s1 + $0xc0] sm:$0xff]
  %v71 = vld [vmem:[%s1 + $0xc8] sm:$0xff]
  %v72 = vld [vmem:[%s1 + $0xd0] sm:$0xff]
  %v73 = vld [vmem:[%s1 + $0xd8] sm:$0xff]
  %v74 = vld [vmem:[%s1 + $0xe0] sm:$0xff]
  %v75 = vld [vmem:[%s1 + $0xe8] sm:$0xff]
  %v76 = vld [vmem:[%s1 + $0xf0] sm:$0xff]
  %v77 = vld [vmem:[%s1 + $0xf8] sm:$0xff]
  %79 = vset.pattern.permute.xlu0 0
  %80 = vperm.xlu0 %79, %v46
  %v81 = vpop.permute.xlu0 %80
  %84 = vset.pattern.permute.xlu0 0
  %85 = vperm.xlu0 %84, %v47
  %v86 = vpop.permute.xlu0 %85
  %89 = vset.pattern.permute.xlu0 0
  %90 = vperm.xlu0 %89, %v48
  %v91 = vpop.permute.xlu0 %90
  %94 = vset.pattern.permute.xlu0 0
  %95 = vperm.xlu0 %94, %v49
  %v96 = vpop.permute.xlu0 %95
  %99 = vset.pattern.permute.xlu0 0
  %100 = vperm.xlu0 %99, %v50
  %v101 = vpop.permute.xlu0 %100
  %104 = vset.pattern.permute.xlu0 0
  %105 = vperm.xlu0 %104, %v51
  %v106 = vpop.permute.xlu0 %105
  %109 = vset.pattern.permute.xlu0 0
  %110 = vperm.xlu0 %109, %v52
  %v111 = vpop.permute.xlu0 %110
  %114 = vset.pattern.permute.xlu0 0
  %115 = vperm.xlu0 %114, %v53
  %v116 = vpop.permute.xlu0 %115
  %119 = vset.pattern.permute.xlu0 0
  %120 = vperm.xlu0 %119, %v54
  %v121 = vpop.permute.xlu0 %120
  %124 = vset.pattern.permute.xlu0 0
  %125 = vperm.xlu0 %124, %v55
  %v126 = vpop.permute.xlu0 %125
  %129 = vset.pattern.permute.xlu0 0
  %130 = vperm.xlu0 %129, %v56
  %v131 = vpop.permute.xlu0 %130
  %134 = vset.pattern.permute.xlu0 0
  %135 = vperm.xlu0 %134, %v57
  %v136 = vpop.permute.xlu0 %135
  %139 = vset.pattern.permute.xlu0 0
  %140 = vperm.xlu0 %139, %v58
  %v141 = vpop.permute.xlu0 %140
  %144 = vset.pattern.permute.xlu0 0
  %145 = vperm.xlu0 %144, %v59
  %v146 = vpop.permute.xlu0 %145
  %149 = vset.pattern.permute.xlu0 0
  %150 = vperm.xlu0 %149, %v60
  %v151 = vpop.permute.xlu0 %150
  %154 = vset.pattern.permute.xlu0 0
  %155 = vperm.xlu0 %154, %v61
  %v156 = vpop.permute.xlu0 %155
  %159 = vset.pattern.permute.xlu0 0
  %160 = vperm.xlu0 %159, %v62
  %v161 = vpop.permute.xlu0 %160
  %164 = vset.pattern.permute.xlu0 0
  %165 = vperm.xlu0 %164, %v63
  %v166 = vpop.permute.xlu0 %165
  %169 = vset.pattern.permute.xlu0 0
  %170 = vperm.xlu0 %169, %v64
  %v171 = vpop.permute.xlu0 %170
  %174 = vset.pattern.permute.xlu0 0
  %175 = vperm.xlu0 %174, %v65
  %v176 = vpop.permute.xlu0 %175
  %179 = vset.pattern.permute.xlu0 0
  %180 = vperm.xlu0 %179, %v66
  %v181 = vpop.permute.xlu0 %180
  %184 = vset.pattern.permute.xlu0 0
  %185 = vperm.xlu0 %184, %v67
  %v186 = vpop.permute.xlu0 %185
  %189 = vset.pattern.permute.xlu0 0
  %190 = vperm.xlu0 %189, %v68
  %v191 = vpop.permute.xlu0 %190
  %194 = vset.pattern.permute.xlu0 0
  %195 = vperm.xlu0 %194, %v69
  %v196 = vpop.permute.xlu0 %195
  %199 = vset.pattern.permute.xlu0 0
  %200 = vperm.xlu0 %199, %v70
  %v201 = vpop.permute.xlu0 %200
  %204 = vset.pattern.permute.xlu0 0
  %205 = vperm.xlu0 %204, %v71
  %v206 = vpop.permute.xlu0 %205
  %209 = vset.pattern.permute.xlu0 0
  %210 = vperm.xlu0 %209, %v72
  %v211 = vpop.permute.xlu0 %210
  %214 = vset.pattern.permute.xlu0 0
  %215 = vperm.xlu0 %214, %v73
  %v216 = vpop.permute.xlu0 %215
  %219 = vset.pattern.permute.xlu0 0
  %220 = vperm.xlu0 %219, %v74
  %v221 = vpop.permute.xlu0 %220
  %224 = vset.pattern.permute.xlu0 0
  %225 = vperm.xlu0 %224, %v75
  %v226 = vpop.permute.xlu0 %225
  %229 = vset.pattern.permute.xlu0 0
  %230 = vperm.xlu0 %229, %v76
  %v231 = vpop.permute.xlu0 %230
  %234 = vset.pattern.permute.xlu0 0
  %235 = vperm.xlu0 %234, %v77
  %v236 = vpop.permute.xlu0 %235
  %v238 = vmul.f32 %v14, %v81
  %v239 = vmul.f32 %v15, %v86
  %v240 = vmul.f32 %v16, %v91
  %v241 = vmul.f32 %v17, %v96
  %v242 = vmul.f32 %v18, %v101
  %v243 = vmul.f32 %v19, %v106
  %v244 = vmul.f32 %v20, %v111
  %v245 = vmul.f32 %v21, %v116
  %v246 = vmul.f32 %v22, %v121
  %v247 = vmul.f32 %v23, %v126
  %v248 = vmul.f32 %v24, %v131
  %v249 = vmul.f32 %v25, %v136
  %v250 = vmul.f32 %v26, %v141
  %v251 = vmul.f32 %v27, %v146
  %v252 = vmul.f32 %v28, %v151
  %v253 = vmul.f32 %v29, %v156
  %v254 = vmul.f32 %v30, %v161
  %v255 = vmul.f32 %v31, %v166
  %v256 = vmul.f32 %v32, %v171
  %v257 = vmul.f32 %v33, %v176
  %v258 = vmul.f32 %v34, %v181
  %v259 = vmul.f32 %v35, %v186
  %v260 = vmul.f32 %v36, %v191
  %v261 = vmul.f32 %v37, %v196
  %v262 = vmul.f32 %v38, %v201
  %v263 = vmul.f32 %v39, %v206
  %v264 = vmul.f32 %v40, %v211
  %v265 = vmul.f32 %v41, %v216
  %v266 = vmul.f32 %v42, %v221
  %v267 = vmul.f32 %v43, %v226
  %v268 = vmul.f32 %v44, %v231
  %v269 = vmul.f32 %v45, %v236
  %v270 = vld [vmem:[%s2] sm:$0xff]
  %v271 = vld [vmem:[%s2 + $0x8] sm:$0xff]
  %v272 = vld [vmem:[%s2 + $0x10] sm:$0xff]
  %v273 = vld [vmem:[%s2 + $0x18] sm:$0xff]
  %v274 = vld [vmem:[%s2 + $0x20] sm:$0xff]
  %v275 = vld [vmem:[%s2 + $0x28] sm:$0xff]
  %v276 = vld [vmem:[%s2 + $0x30] sm:$0xff]
  %v277 = vld [vmem:[%s2 + $0x38] sm:$0xff]
  %v278 = vld [vmem:[%s2 + $0x40] sm:$0xff]
  %v279 = vld [vmem:[%s2 + $0x48] sm:$0xff]
  %v280 = vld [vmem:[%s2 + $0x50] sm:$0xff]
  %v281 = vld [vmem:[%s2 + $0x58] sm:$0xff]
  %v282 = vld [vmem:[%s2 + $0x60] sm:$0xff]
  %v283 = vld [vmem:[%s2 + $0x68] sm:$0xff]
  %v284 = vld [vmem:[%s2 + $0x70] sm:$0xff]
  %v285 = vld [vmem:[%s2 + $0x78] sm:$0xff]
  %v286 = vld [vmem:[%s2 + $0x80] sm:$0xff]
  %v287 = vld [vmem:[%s2 + $0x88] sm:$0xff]
  %v288 = vld [vmem:[%s2 + $0x90] sm:$0xff]
  %v289 = vld [vmem:[%s2 + $0x98] sm:$0xff]
  %v290 = vld [vmem:[%s2 + $0xa0] sm:$0xff]
  %v291 = vld [vmem:[%s2 + $0xa8] sm:$0xff]
  %v292 = vld [vmem:[%s2 + $0xb0] sm:$0xff]
  %v293 = vld [vmem:[%s2 + $0xb8] sm:$0xff]
  %v294 = vld [vmem:[%s2 + $0xc0] sm:$0xff]
  %v295 = vld [vmem:[%s2 + $0xc8] sm:$0xff]
  %v296 = vld [vmem:[%s2 + $0xd0] sm:$0xff]
  %v297 = vld [vmem:[%s2 + $0xd8] sm:$0xff]
  %v298 = vld [vmem:[%s2 + $0xe0] sm:$0xff]
  %v299 = vld [vmem:[%s2 + $0xe8] sm:$0xff]
  %v300 = vld [vmem:[%s2 + $0xf0] sm:$0xff]
  %v301 = vld [vmem:[%s2 + $0xf8] sm:$0xff]
  %303 = vset.pattern.permute.xlu0 0
  %304 = vperm.xlu0 %303, %v270
  %v305 = vpop.permute.xlu0 %304
  %308 = vset.pattern.permute.xlu0 0
  %309 = vperm.xlu0 %308, %v271
  %v310 = vpop.permute.xlu0 %309
  %313 = vset.pattern.permute.xlu0 0
  %314 = vperm.xlu0 %313, %v272
  %v315 = vpop.permute.xlu0 %314
  %318 = vset.pattern.permute.xlu0 0
  %319 = vperm.xlu0 %318, %v273
  %v320 = vpop.permute.xlu0 %319
  %323 = vset.pattern.permute.xlu0 0
  %324 = vperm.xlu0 %323, %v274
  %v325 = vpop.permute.xlu0 %324
  %328 = vset.pattern.permute.xlu0 0
  %329 = vperm.xlu0 %328, %v275
  %v330 = vpop.permute.xlu0 %329
  %333 = vset.pattern.permute.xlu0 0
  %334 = vperm.xlu0 %333, %v276
  %v335 = vpop.permute.xlu0 %334
  %338 = vset.pattern.permute.xlu0 0
  %339 = vperm.xlu0 %338, %v277
  %v340 = vpop.permute.xlu0 %339
  %343 = vset.pattern.permute.xlu0 0
  %344 = vperm.xlu0 %343, %v278
  %v345 = vpop.permute.xlu0 %344
  %348 = vset.pattern.permute.xlu0 0
  %349 = vperm.xlu0 %348, %v279
  %v350 = vpop.permute.xlu0 %349
  %353 = vset.pattern.permute.xlu0 0
  %354 = vperm.xlu0 %353, %v280
  %v355 = vpop.permute.xlu0 %354
  %358 = vset.pattern.permute.xlu0 0
  %359 = vperm.xlu0 %358, %v281
  %v360 = vpop.permute.xlu0 %359
  %363 = vset.pattern.permute.xlu0 0
  %364 = vperm.xlu0 %363, %v282
  %v365 = vpop.permute.xlu0 %364
  %368 = vset.pattern.permute.xlu0 0
  %369 = vperm.xlu0 %368, %v283
  %v370 = vpop.permute.xlu0 %369
  %373 = vset.pattern.permute.xlu0 0
  %374 = vperm.xlu0 %373, %v284
  %v375 = vpop.permute.xlu0 %374
  %378 = vset.pattern.permute.xlu0 0
  %379 = vperm.xlu0 %378, %v285
  %v380 = vpop.permute.xlu0 %379
  %383 = vset.pattern.permute.xlu0 0
  %384 = vperm.xlu0 %383, %v286
  %v385 = vpop.permute.xlu0 %384
  %388 = vset.pattern.permute.xlu0 0
  %389 = vperm.xlu0 %388, %v287
  %v390 = vpop.permute.xlu0 %389
  %393 = vset.pattern.permute.xlu0 0
  %394 = vperm.xlu0 %393, %v288
  %v395 = vpop.permute.xlu0 %394
  %398 = vset.pattern.permute.xlu0 0
  %399 = vperm.xlu0 %398, %v289
  %v400 = vpop.permute.xlu0 %399
  %403 = vset.pattern.permute.xlu0 0
  %404 = vperm.xlu0 %403, %v290
  %v405 = vpop.permute.xlu0 %404
  %408 = vset.pattern.permute.xlu0 0
  %409 = vperm.xlu0 %408, %v291
  %v410 = vpop.permute.xlu0 %409
  %413 = vset.pattern.permute.xlu0 0
  %414 = vperm.xlu0 %413, %v292
  %v415 = vpop.permute.xlu0 %414
  %418 = vset.pattern.permute.xlu0 0
  %419 = vperm.xlu0 %418, %v293
  %v420 = vpop.permute.xlu0 %419
  %423 = vset.pattern.permute.xlu0 0
  %424 = vperm.xlu0 %423, %v294
  %v425 = vpop.permute.xlu0 %424
  %428 = vset.pattern.permute.xlu0 0
  %429 = vperm.xlu0 %428, %v295
  %v430 = vpop.permute.xlu0 %429
  %433 = vset.pattern.permute.xlu0 0
  %434 = vperm.xlu0 %433, %v296
  %v435 = vpop.permute.xlu0 %434
  %438 = vset.pattern.permute.xlu0 0
  %439 = vperm.xlu0 %438, %v297
  %v440 = vpop.permute.xlu0 %439
  %443 = vset.pattern.permute.xlu0 0
  %444 = vperm.xlu0 %443, %v298
  %v445 = vpop.permute.xlu0 %444
  %448 = vset.pattern.permute.xlu0 0
  %449 = vperm.xlu0 %448, %v299
  %v450 = vpop.permute.xlu0 %449
  %453 = vset.pattern.permute.xlu0 0
  %454 = vperm.xlu0 %453, %v300
  %v455 = vpop.permute.xlu0 %454
  %458 = vset.pattern.permute.xlu0 0
  %459 = vperm.xlu0 %458, %v301
  %v460 = vpop.permute.xlu0 %459
  %v462 = vadd.f32 %v238, %v305
  %v463 = vadd.f32 %v239, %v310
  %v464 = vadd.f32 %v240, %v315
  %v465 = vadd.f32 %v241, %v320
  %v466 = vadd.f32 %v242, %v325
  %v467 = vadd.f32 %v243, %v330
  %v468 = vadd.f32 %v244, %v335
  %v469 = vadd.f32 %v245, %v340
  %v470 = vadd.f32 %v246, %v345
  %v471 = vadd.f32 %v247, %v350
  %v472 = vadd.f32 %v248, %v355
  %v473 = vadd.f32 %v249, %v360
  %v474 = vadd.f32 %v250, %v365
  %v475 = vadd.f32 %v251, %v370
  %v476 = vadd.f32 %v252, %v375
  %v477 = vadd.f32 %v253, %v380
  %v478 = vadd.f32 %v254, %v385
  %v479 = vadd.f32 %v255, %v390
  %v480 = vadd.f32 %v256, %v395
  %v481 = vadd.f32 %v257, %v400
  %v482 = vadd.f32 %v258, %v405
  %v483 = vadd.f32 %v259, %v410
  %v484 = vadd.f32 %v260, %v415
  %v485 = vadd.f32 %v261, %v420
  %v486 = vadd.f32 %v262, %v425
  %v487 = vadd.f32 %v263, %v430
  %v488 = vadd.f32 %v264, %v435
  %v489 = vadd.f32 %v265, %v440
  %v490 = vadd.f32 %v266, %v445
  %v491 = vadd.f32 %v267, %v450
  %v492 = vadd.f32 %v268, %v455
  %v493 = vadd.f32 %v269, %v460
  %494 = vst [vmem:[%s3] sm:$0xff] %v462
  %495 = vst [vmem:[%s3 + $0x8] sm:$0xff] %v463
  %496 = vst [vmem:[%s3 + $0x10] sm:$0xff] %v464
  %497 = vst [vmem:[%s3 + $0x18] sm:$0xff] %v465
  %498 = vst [vmem:[%s3 + $0x20] sm:$0xff] %v466
  %499 = vst [vmem:[%s3 + $0x28] sm:$0xff] %v467
  %500 = vst [vmem:[%s3 + $0x30] sm:$0xff] %v468
  %501 = vst [vmem:[%s3 + $0x38] sm:$0xff] %v469
  %502 = vst [vmem:[%s3 + $0x40] sm:$0xff] %v470
  %503 = vst [vmem:[%s3 + $0x48] sm:$0xff] %v471
  %504 = vst [vmem:[%s3 + $0x50] sm:$0xff] %v472
  %505 = vst [vmem:[%s3 + $0x58] sm:$0xff] %v473
  %506 = vst [vmem:[%s3 + $0x60] sm:$0xff] %v474
  %507 = vst [vmem:[%s3 + $0x68] sm:$0xff] %v475
  %508 = vst [vmem:[%s3 + $0x70] sm:$0xff] %v476
  %509 = vst [vmem:[%s3 + $0x78] sm:$0xff] %v477
  %510 = vst [vmem:[%s3 + $0x80] sm:$0xff] %v478
  %511 = vst [vmem:[%s3 + $0x88] sm:$0xff] %v479
  %512 = vst [vmem:[%s3 + $0x90] sm:$0xff] %v480
  %513 = vst [vmem:[%s3 + $0x98] sm:$0xff] %v481
  %514 = vst [vmem:[%s3 + $0xa0] sm:$0xff] %v482
  %515 = vst [vmem:[%s3 + $0xa8] sm:$0xff] %v483
  %516 = vst [vmem:[%s3 + $0xb0] sm:$0xff] %v484
  %517 = vst [vmem:[%s3 + $0xb8] sm:$0xff] %v485
  %518 = vst [vmem:[%s3 + $0xc0] sm:$0xff] %v486
  %519 = vst [vmem:[%s3 + $0xc8] sm:$0xff] %v487
  %520 = vst [vmem:[%s3 + $0xd0] sm:$0xff] %v488
  %521 = vst [vmem:[%s3 + $0xd8] sm:$0xff] %v489
  %522 = vst [vmem:[%s3 + $0xe0] sm:$0xff] %v490
  %523 = vst [vmem:[%s3 + $0xe8] sm:$0xff] %v491
  %524 = vst [vmem:[%s3 + $0xf0] sm:$0xff] %v492
  %525 = vst [vmem:[%s3 + $0xf8] sm:$0xff] %v493
  // Predicated region
  $region14: #{conv_upsampling.3} parent=0 // pred_check
    _
  $region15: #{conv_upsampling.3} parent=0 // pred_check_branch
    %527 = sbr.rel (0) target = $region17
  $region16: #{conv_upsampling.3} parent=0 // pred_region
    _
  $region17: #{conv_upsampling.3} parent=0 // pred_fallthru
    _
  // Predicated region
  $region18: #{conv_upsampling.3} parent=0 // pred_check
    _
  $region19: #{conv_upsampling.3} parent=0 // pred_check_branch
    %529 = sbr.rel (0) target = $region21
  $region20: #{conv_upsampling.3} parent=0 // pred_region
    _
  $region21: #{conv_upsampling.3} parent=0 // pred_fallthru
    _

</llo_original>
